<compile_context>
chip_gen: v6e
topology: v6e:2x2x1
jax: 0.10.0
libtpu: 0.0.40
codegen_flags: <defaults>
</compile_context>

<pallas_src>
import functools
import math

import jax
import jax.numpy as jnp
from jax.experimental import pallas as pl
from jax.experimental.pallas import tpu as pltpu


_VMEM_LIMIT = 48 * 1024 * 1024       # raised scoped-VMEM limit (v5e default is 16 MiB)
_RESIDENT_W_BYTES = 8 * 1024 * 1024  # weights <= 8 MiB stay fully VMEM-resident


# ----------------------------------------------------------------------------
# Tile selection
# ----------------------------------------------------------------------------
def _pick_tile(dim, target, aligns):
    """Largest tile <= target that divides `dim` and is a multiple of one of
    `aligns` (tried in order); the full dim if it already fits or nothing divides."""
    if dim <= target:
        return dim
    for align in aligns:
        t = (target // align) * align
        while t >= align:
            if dim % t == 0:
                return t
            t -= align
    return dim


def _row_tile(m):   # sublane (rows) axis of activation slabs
    # 512 fits v7x's 64 MiB VMEM with headroom and halves weight re-streaming
    # on the K-tiled path vs the old 256 target.
    return _pick_tile(m, 512, (16, 8))


def _k_tile(k):     # contraction axis (K-tiled path only)
    return _pick_tile(k, 512, (256, 128))


def _ln_rows(x, g, beta, eps):
    """Row-wise LayerNorm in f32."""
    xf = x.astype(jnp.float32)
    mean = jnp.mean(xf, axis=-1, keepdims=True)
    var = jnp.mean(jnp.square(xf - mean), axis=-1, keepdims=True)
    return (xf - mean) * jax.lax.rsqrt(var + eps) * g + beta


# ----------------------------------------------------------------------------
# Pallas kernels
# ----------------------------------------------------------------------------
def _ln_mm_kernel(x_ref, g_ref, beta_ref, w_ref, b_ref, o_ref, *, act, eps):
    """Y = act(LN(X) @ W + b). Full (K, N) weight resident; LN computed once per
    row tile (1-D grid over rows)."""
    xn = _ln_rows(x_ref[...], g_ref[...], beta_ref[...], eps)
    y = jnp.dot(xn.astype(w_ref.dtype), w_ref[...],
                preferred_element_type=jnp.float32) + b_ref[...]
    if act == "silu":
        y = y * jax.nn.sigmoid(y)
    elif act == "relu":
        y = jnp.maximum(y, 0.0)
    o_ref[...] = y.astype(o_ref.dtype)


def _ln_mm_glu_kernel(x_ref, g_ref, beta_ref, w_ref, b_ref, o_ref, *, eps):
    """Y = A * sigmoid(B) where [A|B] = LN(X) @ W + b, W = [Wa|Wb] fused (D, 2D).
    Single MXU stream; split of the f32 result at column D (512-aligned at real sizes)."""
    xn = _ln_rows(x_ref[...], g_ref[...], beta_ref[...], eps).astype(w_ref.dtype)
    y = jnp.dot(xn, w_ref[...], preferred_element_type=jnp.float32) + b_ref[...]
    d = o_ref.shape[-1]
    ya = y[:, :d]
    yb = y[:, d:]
    o_ref[...] = (ya * jax.nn.sigmoid(yb)).astype(o_ref.dtype)


def _mm_resident_kernel(x_ref, w_ref, b_ref, o_ref, *, act):
    """Y = act(X @ W + b), full weight resident, no K grid / no accumulator."""
    y = jnp.dot(x_ref[...], w_ref[...],
                preferred_element_type=jnp.float32) + b_ref[...]
    if act == "relu":
        y = jnp.maximum(y, 0.0)
    elif act == "silu":
        y = y * jax.nn.sigmoid(y)
    o_ref[...] = y.astype(o_ref.dtype)


def _mm_ktiled_kernel(x_ref, w_ref, b_ref, o_ref, acc_ref, *, act):
    """Y = act(X @ W + b), K-tiled with f32 VMEM accumulator (weights too big
    for full residency, e.g. the frontend linear projection at real sizes)."""
    @pl.when(pl.program_id(1) == 0)
    def _():
        acc_ref[...] = jnp.zeros_like(acc_ref)

    acc_ref[...] += jnp.dot(x_ref[...], w_ref[...],
                            preferred_element_type=jnp.float32)

    @pl.when(pl.program_id(1) == pl.num_programs(1) - 1)
    def _():
        y = acc_ref[...] + b_ref[...]
        if act == "relu":
            y = jnp.maximum(y, 0.0)
        elif act == "silu":
            y = y * jax.nn.sigmoid(y)
        o_ref[...] = y.astype(o_ref.dtype)


def _mm_res_kernel(x_ref, w_ref, b_ref, res_ref, o_ref, *, scale):
    """Y = res + scale*(X @ W + b), full weight resident."""
    y = res_ref[...].astype(jnp.float32) + scale * (
        jnp.dot(x_ref[...], w_ref[...], preferred_element_type=jnp.float32)
        + b_ref[...])
    o_ref[...] = y.astype(o_ref.dtype)


def _mm_res_ln_kernel(x_ref, w_ref, b_ref, res_ref, g_ref, beta_ref, o_ref,
                      *, scale, eps):
    """Y = LN(res + scale*(X @ W + b)) -- FFN2 back + final LayerNorm fused."""
    y = res_ref[...].astype(jnp.float32) + scale * (
        jnp.dot(x_ref[...], w_ref[...], preferred_element_type=jnp.float32)
        + b_ref[...])
    o_ref[...] = _ln_rows(y, g_ref[...], beta_ref[...], eps).astype(o_ref.dtype)


def _attn_out_kernel(qkv_ref, mask_ref, wo_ref, bo_ref, res_ref, o_ref, a_scr,
                     *, num_heads, scale):
    """One batch: multi-head attention (heads looped in-kernel), each head's PV
    result written into a (T, D) VMEM scratch (no concat relayout; per-head
    score buffers die immediately), fused output projection + residual."""
    qkv = qkv_ref[0]                       # (T, 3D) bf16
    D = qkv.shape[1] // 3
    dh = D // num_heads
    mask = mask_ref[0]                     # (1, T) additive key-padding mask (f32)
    for h in range(num_heads):             # static unrolled head loop
        q = qkv[:, h * dh:(h + 1) * dh]
        k = qkv[:, D + h * dh:D + (h + 1) * dh]
        v = qkv[:, 2 * D + h * dh:2 * D + (h + 1) * dh]
        s = jax.lax.dot_general(q, k, (((1,), (1,)), ((), ())),
                                preferred_element_type=jnp.float32) * scale
        s = s + mask
        s = s - jnp.max(s, axis=-1, keepdims=True)
        p = jnp.exp(s)
        p = p * pl.reciprocal(jnp.sum(p, axis=-1, keepdims=True), approx=True)
        pv = jnp.dot(p.astype(v.dtype), v, preferred_element_type=jnp.float32)
        a_scr[:, h * dh:(h + 1) * dh] = pv.astype(a_scr.dtype)
    a = a_scr[...].astype(wo_ref.dtype)                           # (T, D)
    y = jnp.dot(a, wo_ref[...], preferred_element_type=jnp.float32) + bo_ref[...]
    o_ref[0] = (res_ref[0].astype(jnp.float32) + y).astype(o_ref.dtype)


def _conv_tail_kernel(xp_ref, dww_ref, dwb_ref, bns_ref, bnsh_ref, w2_ref,
                      b2_ref, res_ref, o_ref, *, ksize, t_out):
    """One batch: depthwise Conv1d(31) + bias + BatchNorm(eval) + SiLU +
    pointwise conv2 + residual, all fused."""
    D = o_ref.shape[-1]
    xp = xp_ref[0].astype(jnp.float32)          # (t_out + ksize - 1, D)
    dww = dww_ref[...]                          # (ksize, D) f32
    acc = jnp.broadcast_to(dwb_ref[...], (t_out, D))
    # TODO(synk): replace these sublane-misaligned slices with pltpu.roll taps
    #             (XLU slot) or halo-tiled time axis for long T.
    for tap in range(ksize):                    # static unrolled taps
        acc = acc + xp[tap:tap + t_out, :] * dww[tap:tap + 1, :]
    y = acc * bns_ref[...] + bnsh_ref[...]      # folded BatchNorm (eval)
    y = y * jax.nn.sigmoid(y)                   # SiLU
    z = jnp.dot(y.astype(w2_ref.dtype), w2_ref[...],
                preferred_element_type=jnp.float32) + b2_ref[...]
    o_ref[0] = (res_ref[0].astype(jnp.float32) + z).astype(o_ref.dtype)


# ----------------------------------------------------------------------------
# pallas_call wrappers
# ----------------------------------------------------------------------------
def _params_1d():
    return pltpu.CompilerParams(dimension_semantics=("parallel",),
                                vmem_limit_bytes=_VMEM_LIMIT)


def ln_matmul(x2d, g, beta, w, b, act="none", eps=1e-5, out_dtype=jnp.bfloat16):
    M, K = x2d.shape
    N = w.shape[1]
    tm = _row_tile(M)
    return pl.pallas_call(
        functools.partial(_ln_mm_kernel, act=act, eps=eps),
        out_shape=jax.ShapeDtypeStruct((M, N), out_dtype),
        grid=(M // tm,),
        in_specs=[
            pl.BlockSpec((tm, K), lambda i: (i, 0)),
            pl.BlockSpec((1, K), lambda i: (0, 0)),
            pl.BlockSpec((1, K), lambda i: (0, 0)),
            pl.BlockSpec((K, N), lambda i: (0, 0)),   # full weight, DMA'd once
            pl.BlockSpec((1, N), lambda i: (0, 0)),
        ],
        out_specs=pl.BlockSpec((tm, N), lambda i: (i, 0)),
        compiler_params=_params_1d(),
    )(x2d, g.reshape(1, K), beta.reshape(1, K), w, b.reshape(1, N))


def ln_matmul_glu(x2d, g, beta, w, b, eps=1e-5, out_dtype=jnp.bfloat16):
    M, K = x2d.shape
    N2 = w.shape[1]
    N = N2 // 2
    tm = _row_tile(M)
    return pl.pallas_call(
        functools.partial(_ln_mm_glu_kernel, eps=eps),
        out_shape=jax.ShapeDtypeStruct((M, N), out_dtype),
        grid=(M // tm,),
        in_specs=[
            pl.BlockSpec((tm, K), lambda i: (i, 0)),
            pl.BlockSpec((1, K), lambda i: (0, 0)),
            pl.BlockSpec((1, K), lambda i: (0, 0)),
            pl.BlockSpec((K, N2), lambda i: (0, 0)),  # fused [Wa|Wb], one stream
            pl.BlockSpec((1, N2), lambda i: (0, 0)),
        ],
        out_specs=pl.BlockSpec((tm, N), lambda i: (i, 0)),
        compiler_params=_params_1d(),
    )(x2d, g.reshape(1, K), beta.reshape(1, K), w, b.reshape(1, N2))


def matmul_bias(x2d, w, b, act="none", out_dtype=jnp.bfloat16):
    M, K = x2d.shape
    N = w.shape[1]
    tm = _row_tile(M)
    w_bytes = K * N * jnp.dtype(w.dtype).itemsize
    if w_bytes <= _RESIDENT_W_BYTES:
        # Full-weight-resident path: no K grid, no accumulator scratch.
        return pl.pallas_call(
            functools.partial(_mm_resident_kernel, act=act),
            out_shape=jax.ShapeDtypeStruct((M, N), out_dtype),
            grid=(M // tm,),
            in_specs=[
                pl.BlockSpec((tm, K), lambda i: (i, 0)),
                pl.BlockSpec((K, N), lambda i: (0, 0)),
                pl.BlockSpec((1, N), lambda i: (0, 0)),
            ],
            out_specs=pl.BlockSpec((tm, N), lambda i: (i, 0)),
            compiler_params=_params_1d(),
        )(x2d, w, b.reshape(1, N))
    # K-tiled accumulator path for big weights (e.g. lin_w at real model sizes).
    tk = _k_tile(K)
    return pl.pallas_call(
        functools.partial(_mm_ktiled_kernel, act=act),
        out_shape=jax.ShapeDtypeStruct((M, N), out_dtype),
        grid=(M // tm, K // tk),
        in_specs=[
            pl.BlockSpec((tm, tk), lambda i, k: (i, k)),
            pl.BlockSpec((tk, N), lambda i, k: (k, 0)),
            pl.BlockSpec((1, N), lambda i, k: (0, 0)),
        ],
        out_specs=pl.BlockSpec((tm, N), lambda i, k: (i, 0)),
        scratch_shapes=[pltpu.VMEM((tm, N), jnp.float32)],
        compiler_params=pltpu.CompilerParams(
            dimension_semantics=("parallel", "arbitrary"),
            vmem_limit_bytes=_VMEM_LIMIT),
    )(x2d, w, b.reshape(1, N))


def matmul_bias_residual(x2d, w, b, res2d, *, scale=1.0, ln_g=None, ln_b=None,
                         eps=1e-5):
    M, K = x2d.shape
    N = w.shape[1]
    tm = _row_tile(M)
    in_specs = [
        pl.BlockSpec((tm, K), lambda i: (i, 0)),
        pl.BlockSpec((K, N), lambda i: (0, 0)),       # full weight resident
        pl.BlockSpec((1, N), lambda i: (0, 0)),
        pl.BlockSpec((tm, N), lambda i: (i, 0)),
    ]
    args = [x2d, w, b.reshape(1, N), res2d]
    if ln_g is None:
        kernel = functools.partial(_mm_res_kernel, scale=scale)
    else:
        kernel = functools.partial(_mm_res_ln_kernel, scale=scale, eps=eps)
        in_specs += [pl.BlockSpec((1, N), lambda i: (0, 0)),
                     pl.BlockSpec((1, N), lambda i: (0, 0))]
        args += [ln_g.reshape(1, N), ln_b.reshape(1, N)]
    return pl.pallas_call(
        kernel,
        out_shape=jax.ShapeDtypeStruct((M, N), res2d.dtype),
        grid=(M // tm,),
        in_specs=in_specs,
        out_specs=pl.BlockSpec((tm, N), lambda i: (i, 0)),
        compiler_params=_params_1d(),
    )(*args)


def attention_block(qkv, mask_add, wo, bo, res, num_heads):
    B, T, D3 = qkv.shape
    D = D3 // 3
    scale = 1.0 / math.sqrt(D // num_heads)
    # TODO(synk): flash-style q/KV tiling + q-block 'parallel' grid axis for very
    #             long sequences (per-step score buffer is O(T^2) f32).
    return pl.pallas_call(
        functools.partial(_attn_out_kernel, num_heads=num_heads, scale=scale),
        out_shape=jax.ShapeDtypeStruct((B, T, D), res.dtype),
        grid=(B,),
        in_specs=[
            pl.BlockSpec((1, T, D3), lambda b: (b, 0, 0)),
            pl.BlockSpec((1, 1, T), lambda b: (b, 0, 0)),
            pl.BlockSpec((D, D), lambda b: (0, 0)),
            pl.BlockSpec((1, D), lambda b: (0, 0)),
            pl.BlockSpec((1, T, D), lambda b: (b, 0, 0)),
        ],
        out_specs=pl.BlockSpec((1, T, D), lambda b: (b, 0, 0)),
        scratch_shapes=[pltpu.VMEM((T, D), jnp.bfloat16)],
        compiler_params=pltpu.CompilerParams(
            dimension_semantics=("parallel",), vmem_limit_bytes=_VMEM_LIMIT),
    )(qkv, mask_add, wo, bo.reshape(1, D), res)


def conv_module_tail(g3d, dw_w, dw_b, bn_scale, bn_shift, pw2_w, pw2_b, res3d):
    B, T, D = g3d.shape
    K = dw_w.shape[0]
    P = (K - 1) // 2
    xp = jnp.pad(g3d, ((0, 0), (P, P), (0, 0)))
    return pl.pallas_call(
        functools.partial(_conv_tail_kernel, ksize=K, t_out=T),
        out_shape=jax.ShapeDtypeStruct((B, T, D), res3d.dtype),
        grid=(B,),
        in_specs=[
            pl.BlockSpec((1, T + 2 * P, D), lambda b: (b, 0, 0)),
            pl.BlockSpec((K, D), lambda b: (0, 0)),
            pl.BlockSpec((1, D), lambda b: (0, 0)),
            pl.BlockSpec((1, D), lambda b: (0, 0)),
            pl.BlockSpec((1, D), lambda b: (0, 0)),
            pl.BlockSpec((D, D), lambda b: (0, 0)),
            pl.BlockSpec((1, D), lambda b: (0, 0)),
            pl.BlockSpec((1, T, D), lambda b: (b, 0, 0)),
        ],
        out_specs=pl.BlockSpec((1, T, D), lambda b: (b, 0, 0)),
        compiler_params=pltpu.CompilerParams(
            dimension_semantics=("parallel",), vmem_limit_bytes=_VMEM_LIMIT),
    )(xp, dw_w, dw_b.reshape(1, D), bn_scale.reshape(1, D),
      bn_shift.reshape(1, D), pw2_w, pw2_b.reshape(1, D), res3d)


# ----------------------------------------------------------------------------
# Model glue
# ----------------------------------------------------------------------------
def conformer_layer(lp, x, mask_add, num_heads, eps=1e-5):
    B, T, D = x.shape
    x2d = x.reshape(B * T, D)

    # --- FFN module 1: x <- x + 0.5 * W2(SiLU(W1(LN(x)))) ---
    h = ln_matmul(x2d, lp["ffn1_ln_g"], lp["ffn1_ln_b"],
                  lp["ffn1_w1"], lp["ffn1_b1"], act="silu")
    x2d = matmul_bias_residual(h, lp["ffn1_w2"], lp["ffn1_b2"], x2d, scale=0.5)

    # --- Multi-head self-attention: x <- x + Wo(Attn(LN(x))) ---
    qkv = ln_matmul(x2d, lp["attn_ln_g"], lp["attn_ln_b"],
                    lp["wqkv"], lp["bqkv"]).reshape(B, T, 3 * D)
    x = attention_block(qkv, mask_add, lp["wo"], lp["bo"],
                        x2d.reshape(B, T, D), num_heads)
    x2d = x.reshape(B * T, D)

    # --- Convolution module: x <- x + PW2(SiLU(BN(DW(GLU(PW1(LN(x))))))) ---
    glu = ln_matmul_glu(x2d, lp["conv_ln_g"], lp["conv_ln_b"],
                        lp["pw1_w"], lp["pw1_b"])
    bn_scale = lp["bn_g"] * jax.lax.rsqrt(lp["bn_var"] + eps)
    bn_shift = lp["bn_b"] - lp["bn_mean"] * bn_scale
    x = conv_module_tail(glu.reshape(B, T, D), lp["dw_w"], lp["dw_b"],
                         bn_scale, bn_shift, lp["pw2_w"], lp["pw2_b"], x)
    x2d = x.reshape(B * T, D)

    # --- FFN module 2 + final LayerNorm ---
    h = ln_matmul(x2d, lp["ffn2_ln_g"], lp["ffn2_ln_b"],
                  lp["ffn2_w1"], lp["ffn2_b1"], act="silu")
    x2d = matmul_bias_residual(h, lp["ffn2_w2"], lp["ffn2_b2"], x2d, scale=0.5,
                               ln_g=lp["final_ln_g"], ln_b=lp["final_ln_b"])
    return x2d.reshape(B, T, D)


def acoustic_encoder_forward(params, features, feature_lengths, *,
                             num_heads=8, stride=2, ksize=5, pad=2):
    B, T, F = features.shape
    d_model = params["conv_b"].shape[0]
    Tp = (T - 1) // stride + 1
    Fp = (F - 1) // stride + 1
    kpad = params["conv_w"].shape[0]

    # Conv2d(1, d_model, 5, stride=2, padding=2) + ReLU as im2col + matmul.
    # TODO(synk): build the im2col patches inside a Pallas kernel to avoid the
    #             25x-expanded patch tensor in HBM (frontend-only cost).
    xp = jnp.pad(features, ((0, 0), (pad, pad), (pad, pad)))
    patches = []
    for dt in range(ksize):
        for df in range(ksize):
            patches.append(xp[:, dt:dt + stride * (Tp - 1) + 1:stride,
                               df:df + stride * (Fp - 1) + 1:stride])
    patches = jnp.stack(patches, axis=-1)                                 # (B,Tp,Fp,25)
    patches = jnp.pad(patches, ((0, 0), (0, 0), (0, 0), (0, kpad - ksize * ksize)))
    patches = patches.reshape(B * Tp * Fp, kpad).astype(jnp.bfloat16)
    conv = matmul_bias(patches, params["conv_w"], params["conv_b"], act="relu")
    # No transpose: flatten (Fp, d_model) f-major; `lin_w` rows are generated in
    # the matching (f, c) order (real torch checkpoints would need a one-time row
    # permutation of linear.weight from (c, f) to (f, c) order at load time).
    conv = conv.reshape(B * Tp, Fp * d_model)
    x = matmul_bias(conv, params["lin_w"], params["lin_b"]).reshape(B, Tp, d_model)

    lengths = ((feature_lengths - 1) // stride + 1).astype(jnp.int32)
    # additive key-padding mask: keys >= length get a large negative logit
    mask_add = jnp.where(jnp.arange(Tp)[None, :] >= lengths[:, None],
                         -1e30, 0.0).astype(jnp.float32)[:, None, :]      # (B,1,Tp)

    for lp in params["layers"]:
        x = conformer_layer(lp, x, mask_add, num_heads)
    return x.astype(jnp.float32), lengths


# ----------------------------------------------------------------------------
# Deterministic synthetic parameters (weights bf16, biases/LN/BN params f32)
# ----------------------------------------------------------------------------
def init_params(key, num_mels, d_model, num_layers, dw_kernel=31):
    keys = iter(jax.random.split(key, 1024))

    def rnd(shape, scale=0.05, dtype=jnp.bfloat16):
        return (scale * jax.random.normal(next(keys), shape, jnp.float32)).astype(dtype)

    d, ffn = d_model, 4 * d_model
    fprime = (num_mels - 1) // 2 + 1
    kpad = 32  # im2col contraction (25 taps) padded to 32
    ones = jnp.ones((d,), jnp.float32)
    zeros = jnp.zeros((d,), jnp.float32)

    params = {
        "conv_w": jnp.pad(rnd((25, d), dtype=jnp.float32),
                          ((0, kpad - 25), (0, 0))).astype(jnp.bfloat16),
        "conv_b": rnd((d,), dtype=jnp.float32),
        # rows ordered (f, c) f-major to match the transpose-free flatten above
        "lin_w": rnd((fprime * d, d)),
        "lin_b": rnd((d,), dtype=jnp.float32),
        "layers": [],
    }
    for _ in range(num_layers):
        lp = {
            "ffn1_ln_g": ones, "ffn1_ln_b": zeros,
            "ffn1_w1": rnd((d, ffn)), "ffn1_b1": rnd((ffn,), dtype=jnp.float32),
            "ffn1_w2": rnd((ffn, d)), "ffn1_b2": rnd((d,), dtype=jnp.float32),
            "attn_ln_g": ones, "attn_ln_b": zeros,
            "wqkv": rnd((d, 3 * d)), "bqkv": rnd((3 * d,), dtype=jnp.float32),
            "wo": rnd((d, d)), "bo": rnd((d,), dtype=jnp.float32),
            "conv_ln_g": ones, "conv_ln_b": zeros,
            # fused pointwise-conv1 weight [Wa | Wb] for GLU (single MXU stream)
            "pw1_w": rnd((d, 2 * d)), "pw1_b": rnd((2 * d,), dtype=jnp.float32),
            "dw_w": rnd((dw_kernel, d), dtype=jnp.float32),
            "dw_b": rnd((d,), dtype=jnp.float32),
            "bn_g": ones, "bn_b": zeros, "bn_mean": zeros,
            "bn_var": jnp.ones((d,), jnp.float32),
            "pw2_w": rnd((d, d)), "pw2_b": rnd((d,), dtype=jnp.float32),
            "ffn2_ln_g": ones, "ffn2_ln_b": zeros,
            "ffn2_w1": rnd((d, ffn)), "ffn2_b1": rnd((ffn,), dtype=jnp.float32),
            "ffn2_w2": rnd((ffn, d)), "ffn2_b2": rnd((d,), dtype=jnp.float32),
            "final_ln_g": ones, "final_ln_b": zeros,
        }
        params["layers"].append(lp)
    return params


# ----------------------------------------------------------------------------
if __name__ == "__main__":
    B, T, num_mels = 2, 16, 16
    d_model, num_layers, num_heads = 32, 2, 8

    key = jax.random.PRNGKey(0)
    k_feat, k_par = jax.random.split(key)
    features = jax.random.normal(k_feat, (B, T, num_mels), jnp.float32)
    feature_lengths = jnp.array([16, 12], jnp.int32)
    params = init_params(k_par, num_mels, d_model, num_layers)

    fwd = jax.jit(functools.partial(acoustic_encoder_forward, num_heads=num_heads))
    out, out_lengths = fwd(params, features, feature_lengths)
    jax.block_until_ready(out)
    jax.block_until_ready(out_lengths)

    Tp = (T - 1) // 2 + 1
    assert out.shape == (B, Tp, d_model), out.shape
    assert out_lengths.shape == (B,)
    assert bool(jnp.all(jnp.isfinite(out)))
    print("KERNEL_OK")
</pallas_src>

<mosaic_0001>
module attributes {stable_mosaic.version = 11 : i64} {
  func.func @_mm_resident_kernel(%arg0: i32, %arg1: memref<128x32xbf16, #tpu.memory_space<vmem>>, %arg2: memref<32x32xbf16, #tpu.memory_space<vmem>>, %arg3: memref<1x32xf32, #tpu.memory_space<vmem>>, %arg4: memref<128x32xbf16, #tpu.memory_space<vmem>>) attributes {dimension_semantics = [#tpu.dimension_semantics<parallel>], iteration_bounds = array<i64: 1>, scalar_prefetch = 0 : i64, scratch_operands = 0 : i64, tpu.core_type = #tpu.core_type<tc>, window_params = [{transform_indices = @transform_0, window_bounds = array<i64: 128, 32>}, {pipeline_mode = #tpu.pipeline_mode<synchronous>, transform_indices = @transform_1, window_bounds = array<i64: 32, 32>}, {pipeline_mode = #tpu.pipeline_mode<synchronous>, transform_indices = @transform_2, window_bounds = array<i64: 1, 32>}, {transform_indices = @transform_3, window_bounds = array<i64: 128, 32>}]} {
    %c0 = arith.constant 0 : index
    %c0_0 = arith.constant 0 : index
    %0 = vector.load %arg1[%c0, %c0_0] : memref<128x32xbf16, #tpu.memory_space<vmem>>, vector<128x32xbf16>
    %c0_1 = arith.constant 0 : index
    %c0_2 = arith.constant 0 : index
    %1 = vector.load %arg2[%c0_1, %c0_2] : memref<32x32xbf16, #tpu.memory_space<vmem>>, vector<32x32xbf16>
    %cst = arith.constant dense<0.000000e+00> : vector<128x32xf32>
    %2 = tpu.matmul %0, %1, %cst {dimension_numbers = #tpu.dot_dimension_numbers<[1], [0], [0], [1], [0, 0, 1, 1], [], []>} : vector<128x32xbf16>, vector<32x32xbf16>, vector<128x32xf32> -> vector<128x32xf32>
    %c0_3 = arith.constant 0 : index
    %c0_4 = arith.constant 0 : index
    %3 = vector.load %arg3[%c0_3, %c0_4] : memref<1x32xf32, #tpu.memory_space<vmem>>, vector<1x32xf32>
    %4 = vector.broadcast %3 : vector<1x32xf32> to vector<128x32xf32>
    %5 = arith.addf %2, %4 : vector<128x32xf32>
    %cst_5 = arith.constant 0.000000e+00 : f32
    %6 = vector.broadcast %cst_5 : f32 to vector<128x32xf32>
    %7 = arith.maximumf %5, %6 : vector<128x32xf32>
    %8 = arith.truncf %7 : vector<128x32xf32> to vector<128x32xbf16>
    %c0_6 = arith.constant 0 : index
    %c0_7 = arith.constant 0 : index
    %9 = vector.load %arg4[%c0_6, %c0_7] : memref<128x32xbf16, #tpu.memory_space<vmem>>, vector<128x32xbf16>
    tpu.vector_store %arg4[%c0_6, %c0_7], %8 {strides = array<i32>} : memref<128x32xbf16, #tpu.memory_space<vmem>>, vector<128x32xbf16>,
    return
  }
  func.func @transform_0(%arg0: i32) -> (i32, i32) {
    %c0_i32 = arith.constant 0 : i32
    %c0_i32_0 = arith.constant 0 : i32
    return %arg0, %c0_i32 : i32, i32
  }
  func.func @transform_1(%arg0: i32) -> (i32, i32) {
    %c0_i32 = arith.constant 0 : i32
    %c0_i32_0 = arith.constant 0 : i32
    %c0_i32_1 = arith.constant 0 : i32
    return %c0_i32, %c0_i32_0 : i32, i32
  }
  func.func @transform_2(%arg0: i32) -> (i32, i32) {
    %c0_i32 = arith.constant 0 : i32
    %c0_i32_0 = arith.constant 0 : i32
    %c0_i32_1 = arith.constant 0 : i32
    return %c0_i32, %c0_i32_0 : i32, i32
  }
  func.func @transform_3(%arg0: i32) -> (i32, i32) {
    %c0_i32 = arith.constant 0 : i32
    %c0_i32_0 = arith.constant 0 : i32
    return %arg0, %c0_i32 : i32, i32
  }
}

module attributes {stable_mosaic.version = 11 : i64} {
  func.func @_ln_mm_kernel(%arg0: i32, %arg1: memref<16x32xbf16, #tpu.memory_space<vmem>>, %arg2: memref<1x32xf32, #tpu.memory_space<vmem>>, %arg3: memref<1x32xf32, #tpu.memory_space<vmem>>, %arg4: memref<32x128xbf16, #tpu.memory_space<vmem>>, %arg5: memref<1x128xf32, #tpu.memory_space<vmem>>, %arg6: memref<16x128xbf16, #tpu.memory_space<vmem>>) attributes {dimension_semantics = [#tpu.dimension_semantics<parallel>], iteration_bounds = array<i64: 1>, scalar_prefetch = 0 : i64, scratch_operands = 0 : i64, tpu.core_type = #tpu.core_type<tc>, window_params = [{transform_indices = @transform_0, window_bounds = array<i64: 16, 32>}, {pipeline_mode = #tpu.pipeline_mode<synchronous>, transform_indices = @transform_1, window_bounds = array<i64: 1, 32>}, {pipeline_mode = #tpu.pipeline_mode<synchronous>, transform_indices = @transform_2, window_bounds = array<i64: 1, 32>}, {pipeline_mode = #tpu.pipeline_mode<synchronous>, transform_indices = @transform_3, window_bounds = array<i64: 32, 128>}, {pipeline_mode = #tpu.pipeline_mode<synchronous>, transform_indices = @transform_4, window_bounds = array<i64: 1, 128>}, {transform_indices = @transform_5, window_bounds = array<i64: 16, 128>}]} {
    %c0 = arith.constant 0 : index
    %c0_0 = arith.constant 0 : index
    %0 = vector.load %arg1[%c0, %c0_0] : memref<16x32xbf16, #tpu.memory_space<vmem>>, vector<16x32xbf16>
    %c0_1 = arith.constant 0 : index
    %c0_2 = arith.constant 0 : index
    %1 = vector.load %arg2[%c0_1, %c0_2] : memref<1x32xf32, #tpu.memory_space<vmem>>, vector<1x32xf32>
    %c0_3 = arith.constant 0 : index
    %c0_4 = arith.constant 0 : index
    %2 = vector.load %arg3[%c0_3, %c0_4] : memref<1x32xf32, #tpu.memory_space<vmem>>, vector<1x32xf32>
    %3 = arith.extf %0 : vector<16x32xbf16> to vector<16x32xf32>
    %cst = arith.constant dense<0.000000e+00> : vector<16xf32>
    %4 = vector.multi_reduction <add>, %3, %cst [1] : vector<16x32xf32> to vector<16xf32>
    %5 = vector.shape_cast %4 : vector<16xf32> to vector<16x1xf32>
    %cst_5 = arith.constant 3.200000e+01 : f32
    %6 = vector.broadcast %cst_5 : f32 to vector<16x1xf32>
    %7 = arith.divf %5, %6 : vector<16x1xf32>
    %8 = vector.broadcast %7 : vector<16x1xf32> to vector<16x32xf32>
    %9 = arith.subf %3, %8 : vector<16x32xf32>
    %10 = arith.mulf %9, %9 : vector<16x32xf32>
    %cst_6 = arith.constant dense<0.000000e+00> : vector<16xf32>
    %11 = vector.multi_reduction <add>, %10, %cst_6 [1] : vector<16x32xf32> to vector<16xf32>
    %12 = vector.shape_cast %11 : vector<16xf32> to vector<16x1xf32>
    %cst_7 = arith.constant 3.200000e+01 : f32
    %13 = vector.broadcast %cst_7 : f32 to vector<16x1xf32>
    %14 = arith.divf %12, %13 : vector<16x1xf32>
    %15 = vector.broadcast %7 : vector<16x1xf32> to vector<16x32xf32>
    %16 = arith.subf %3, %15 : vector<16x32xf32>
    %cst_8 = arith.constant 9.99999974E-6 : f32
    %17 = vector.broadcast %cst_8 : f32 to vector<16x1xf32>
    %18 = arith.addf %14, %17 : vector<16x1xf32>
    %19 = math.rsqrt %18 : vector<16x1xf32>
    %20 = vector.broadcast %19 : vector<16x1xf32> to vector<16x32xf32>
    %21 = arith.mulf %16, %20 : vector<16x32xf32>
    %22 = vector.broadcast %1 : vector<1x32xf32> to vector<16x32xf32>
    %23 = arith.mulf %21, %22 : vector<16x32xf32>
    %24 = vector.broadcast %2 : vector<1x32xf32> to vector<16x32xf32>
    %25 = arith.addf %23, %24 : vector<16x32xf32>
    %26 = arith.truncf %25 : vector<16x32xf32> to vector<16x32xbf16>
    %c0_9 = arith.constant 0 : index
    %c0_10 = arith.constant 0 : index
    %27 = vector.load %arg4[%c0_9, %c0_10] : memref<32x128xbf16, #tpu.memory_space<vmem>>, vector<32x128xbf16>
    %cst_11 = arith.constant dense<0.000000e+00> : vector<16x128xf32>
    %28 = tpu.matmul %26, %27, %cst_11 {dimension_numbers = #tpu.dot_dimension_numbers<[1], [0], [0], [1], [0, 0, 1, 1], [], []>} : vector<16x32xbf16>, vector<32x128xbf16>, vector<16x128xf32> -> vector<16x128xf32>
    %c0_12 = arith.constant 0 : index
    %c0_13 = arith.constant 0 : index
    %29 = vector.load %arg5[%c0_12, %c0_13] : memref<1x128xf32, #tpu.memory_space<vmem>>, vector<1x128xf32>
    %30 = vector.broadcast %29 : vector<1x128xf32> to vector<16x128xf32>
    %31 = arith.addf %28, %30 : vector<16x128xf32>
    %32 = arith.negf %31 : vector<16x128xf32>
    %33 = math.exp %32 : vector<16x128xf32>
    %cst_14 = arith.constant 1.000000e+00 : f32
    %34 = vector.broadcast %cst_14 : f32 to vector<16x128xf32>
    %35 = arith.addf %34, %33 : vector<16x128xf32>
    %36 = arith.divf %34, %35 : vector<16x128xf32>
    %37 = arith.mulf %31, %36 : vector<16x128xf32>
    %38 = arith.truncf %37 : vector<16x128xf32> to vector<16x128xbf16>
    %c0_15 = arith.constant 0 : index
    %c0_16 = arith.constant 0 : index
    %39 = vector.load %arg6[%c0_15, %c0_16] : memref<16x128xbf16, #tpu.memory_space<vmem>>, vector<16x128xbf16>
    tpu.vector_store %arg6[%c0_15, %c0_16], %38 {strides = array<i32>} : memref<16x128xbf16, #tpu.memory_space<vmem>>, vector<16x128xbf16>,
    return
  }
  func.func @transform_0(%arg0: i32) -> (i32, i32) {
    %c0_i32 = arith.constant 0 : i32
    %c0_i32_0 = arith.constant 0 : i32
    return %arg0, %c0_i32 : i32, i32
  }
  func.func @transform_1(%arg0: i32) -> (i32, i32) {
    %c0_i32 = arith.constant 0 : i32
    %c0_i32_0 = arith.constant 0 : i32
    %c0_i32_1 = arith.constant 0 : i32
    return %c0_i32, %c0_i32_0 : i32, i32
  }
  func.func @transform_2(%arg0: i32) -> (i32, i32) {
    %c0_i32 = arith.constant 0 : i32
    %c0_i32_0 = arith.constant 0 : i32
    %c0_i32_1 = arith.constant 0 : i32
    return %c0_i32, %c0_i32_0 : i32, i32
  }
  func.func @transform_3(%arg0: i32) -> (i32, i32) {
    %c0_i32 = arith.constant 0 : i32
    %c0_i32_0 = arith.constant 0 : i32
    %c0_i32_1 = arith.constant 0 : i32
    return %c0_i32, %c0_i32_0 : i32, i32
  }
  func.func @transform_4(%arg0: i32) -> (i32, i32) {
    %c0_i32 = arith.constant 0 : i32
    %c0_i32_0 = arith.constant 0 : i32
    %c0_i32_1 = arith.constant 0 : i32
    return %c0_i32, %c0_i32_0 : i32, i32
  }
  func.func @transform_5(%arg0: i32) -> (i32, i32) {
    %c0_i32 = arith.constant 0 : i32
    %c0_i32_0 = arith.constant 0 : i32
    return %arg0, %c0_i32 : i32, i32
  }
}

module attributes {stable_mosaic.version = 11 : i64} {
  func.func @_mm_resident_kernel(%arg0: i32, %arg1: memref<16x256xbf16, #tpu.memory_space<vmem>>, %arg2: memref<256x32xbf16, #tpu.memory_space<vmem>>, %arg3: memref<1x32xf32, #tpu.memory_space<vmem>>, %arg4: memref<16x32xbf16, #tpu.memory_space<vmem>>) attributes {dimension_semantics = [#tpu.dimension_semantics<parallel>], iteration_bounds = array<i64: 1>, scalar_prefetch = 0 : i64, scratch_operands = 0 : i64, tpu.core_type = #tpu.core_type<tc>, window_params = [{transform_indices = @transform_0, window_bounds = array<i64: 16, 256>}, {pipeline_mode = #tpu.pipeline_mode<synchronous>, transform_indices = @transform_1, window_bounds = array<i64: 256, 32>}, {pipeline_mode = #tpu.pipeline_mode<synchronous>, transform_indices = @transform_2, window_bounds = array<i64: 1, 32>}, {transform_indices = @transform_3, window_bounds = array<i64: 16, 32>}]} {
    %c0 = arith.constant 0 : index
    %c0_0 = arith.constant 0 : index
    %0 = vector.load %arg1[%c0, %c0_0] : memref<16x256xbf16, #tpu.memory_space<vmem>>, vector<16x256xbf16>
    %c0_1 = arith.constant 0 : index
    %c0_2 = arith.constant 0 : index
    %1 = vector.load %arg2[%c0_1, %c0_2] : memref<256x32xbf16, #tpu.memory_space<vmem>>, vector<256x32xbf16>
    %cst = arith.constant dense<0.000000e+00> : vector<16x32xf32>
    %2 = tpu.matmul %0, %1, %cst {dimension_numbers = #tpu.dot_dimension_numbers<[1], [0], [0], [1], [0, 0, 1, 1], [], []>} : vector<16x256xbf16>, vector<256x32xbf16>, vector<16x32xf32> -> vector<16x32xf32>
    %c0_3 = arith.constant 0 : index
    %c0_4 = arith.constant 0 : index
    %3 = vector.load %arg3[%c0_3, %c0_4] : memref<1x32xf32, #tpu.memory_space<vmem>>, vector<1x32xf32>
    %4 = vector.broadcast %3 : vector<1x32xf32> to vector<16x32xf32>
    %5 = arith.addf %2, %4 : vector<16x32xf32>
    %6 = arith.truncf %5 : vector<16x32xf32> to vector<16x32xbf16>
    %c0_5 = arith.constant 0 : index
    %c0_6 = arith.constant 0 : index
    %7 = vector.load %arg4[%c0_5, %c0_6] : memref<16x32xbf16, #tpu.memory_space<vmem>>, vector<16x32xbf16>
    tpu.vector_store %arg4[%c0_5, %c0_6], %6 {strides = array<i32>} : memref<16x32xbf16, #tpu.memory_space<vmem>>, vector<16x32xbf16>,
    return
  }
  func.func @transform_0(%arg0: i32) -> (i32, i32) {
    %c0_i32 = arith.constant 0 : i32
    %c0_i32_0 = arith.constant 0 : i32
    return %arg0, %c0_i32 : i32, i32
  }
  func.func @transform_1(%arg0: i32) -> (i32, i32) {
    %c0_i32 = arith.constant 0 : i32
    %c0_i32_0 = arith.constant 0 : i32
    %c0_i32_1 = arith.constant 0 : i32
    return %c0_i32, %c0_i32_0 : i32, i32
  }
  func.func @transform_2(%arg0: i32) -> (i32, i32) {
    %c0_i32 = arith.constant 0 : i32
    %c0_i32_0 = arith.constant 0 : i32
    %c0_i32_1 = arith.constant 0 : i32
    return %c0_i32, %c0_i32_0 : i32, i32
  }
  func.func @transform_3(%arg0: i32) -> (i32, i32) {
    %c0_i32 = arith.constant 0 : i32
    %c0_i32_0 = arith.constant 0 : i32
    return %arg0, %c0_i32 : i32, i32
  }
}

module attributes {stable_mosaic.version = 11 : i64} {
  func.func @_mm_res_kernel(%arg0: i32, %arg1: memref<16x128xbf16, #tpu.memory_space<vmem>>, %arg2: memref<128x32xbf16, #tpu.memory_space<vmem>>, %arg3: memref<1x32xf32, #tpu.memory_space<vmem>>, %arg4: memref<16x32xbf16, #tpu.memory_space<vmem>>, %arg5: memref<16x32xbf16, #tpu.memory_space<vmem>>) attributes {dimension_semantics = [#tpu.dimension_semantics<parallel>], iteration_bounds = array<i64: 1>, scalar_prefetch = 0 : i64, scratch_operands = 0 : i64, tpu.core_type = #tpu.core_type<tc>, window_params = [{transform_indices = @transform_0, window_bounds = array<i64: 16, 128>}, {pipeline_mode = #tpu.pipeline_mode<synchronous>, transform_indices = @transform_1, window_bounds = array<i64: 128, 32>}, {pipeline_mode = #tpu.pipeline_mode<synchronous>, transform_indices = @transform_2, window_bounds = array<i64: 1, 32>}, {transform_indices = @transform_3, window_bounds = array<i64: 16, 32>}, {transform_indices = @transform_4, window_bounds = array<i64: 16, 32>}]} {
    %c0 = arith.constant 0 : index
    %c0_0 = arith.constant 0 : index
    %0 = vector.load %arg4[%c0, %c0_0] : memref<16x32xbf16, #tpu.memory_space<vmem>>, vector<16x32xbf16>
    %1 = arith.extf %0 : vector<16x32xbf16> to vector<16x32xf32>
    %c0_1 = arith.constant 0 : index
    %c0_2 = arith.constant 0 : index
    %2 = vector.load %arg1[%c0_1, %c0_2] : memref<16x128xbf16, #tpu.memory_space<vmem>>, vector<16x128xbf16>
    %c0_3 = arith.constant 0 : index
    %c0_4 = arith.constant 0 : index
    %3 = vector.load %arg2[%c0_3, %c0_4] : memref<128x32xbf16, #tpu.memory_space<vmem>>, vector<128x32xbf16>
    %cst = arith.constant dense<0.000000e+00> : vector<16x32xf32>
    %4 = tpu.matmul %2, %3, %cst {dimension_numbers = #tpu.dot_dimension_numbers<[1], [0], [0], [1], [0, 0, 1, 1], [], []>} : vector<16x128xbf16>, vector<128x32xbf16>, vector<16x32xf32> -> vector<16x32xf32>
    %c0_5 = arith.constant 0 : index
    %c0_6 = arith.constant 0 : index
    %5 = vector.load %arg3[%c0_5, %c0_6] : memref<1x32xf32, #tpu.memory_space<vmem>>, vector<1x32xf32>
    %6 = vector.broadcast %5 : vector<1x32xf32> to vector<16x32xf32>
    %7 = arith.addf %4, %6 : vector<16x32xf32>
    %cst_7 = arith.constant 5.000000e-01 : f32
    %8 = vector.broadcast %cst_7 : f32 to vector<16x32xf32>
    %9 = arith.mulf %8, %7 : vector<16x32xf32>
    %10 = arith.addf %1, %9 : vector<16x32xf32>
    %11 = arith.truncf %10 : vector<16x32xf32> to vector<16x32xbf16>
    %c0_8 = arith.constant 0 : index
    %c0_9 = arith.constant 0 : index
    %12 = vector.load %arg5[%c0_8, %c0_9] : memref<16x32xbf16, #tpu.memory_space<vmem>>, vector<16x32xbf16>
    tpu.vector_store %arg5[%c0_8, %c0_9], %11 {strides = array<i32>} : memref<16x32xbf16, #tpu.memory_space<vmem>>, vector<16x32xbf16>,
    return
  }
  func.func @transform_0(%arg0: i32) -> (i32, i32) {
    %c0_i32 = arith.constant 0 : i32
    %c0_i32_0 = arith.constant 0 : i32
    return %arg0, %c0_i32 : i32, i32
  }
  func.func @transform_1(%arg0: i32) -> (i32, i32) {
    %c0_i32 = arith.constant 0 : i32
    %c0_i32_0 = arith.constant 0 : i32
    %c0_i32_1 = arith.constant 0 : i32
    return %c0_i32, %c0_i32_0 : i32, i32
  }
  func.func @transform_2(%arg0: i32) -> (i32, i32) {
    %c0_i32 = arith.constant 0 : i32
    %c0_i32_0 = arith.constant 0 : i32
    %c0_i32_1 = arith.constant 0 : i32
    return %c0_i32, %c0_i32_0 : i32, i32
  }
  func.func @transform_3(%arg0: i32) -> (i32, i32) {
    %c0_i32 = arith.constant 0 : i32
    %c0_i32_0 = arith.constant 0 : i32
    return %arg0, %c0_i32 : i32, i32
  }
  func.func @transform_4(%arg0: i32) -> (i32, i32) {
    %c0_i32 = arith.constant 0 : i32
    %c0_i32_0 = arith.constant 0 : i32
    return %arg0, %c0_i32 : i32, i32
  }
}

module attributes {stable_mosaic.version = 11 : i64} {
  func.func @_ln_mm_kernel(%arg0: i32, %arg1: memref<16x32xbf16, #tpu.memory_space<vmem>>, %arg2: memref<1x32xf32, #tpu.memory_space<vmem>>, %arg3: memref<1x32xf32, #tpu.memory_space<vmem>>, %arg4: memref<32x96xbf16, #tpu.memory_space<vmem>>, %arg5: memref<1x96xf32, #tpu.memory_space<vmem>>, %arg6: memref<16x96xbf16, #tpu.memory_space<vmem>>) attributes {dimension_semantics = [#tpu.dimension_semantics<parallel>], iteration_bounds = array<i64: 1>, scalar_prefetch = 0 : i64, scratch_operands = 0 : i64, tpu.core_type = #tpu.core_type<tc>, window_params = [{transform_indices = @transform_0, window_bounds = array<i64: 16, 32>}, {pipeline_mode = #tpu.pipeline_mode<synchronous>, transform_indices = @transform_1, window_bounds = array<i64: 1, 32>}, {pipeline_mode = #tpu.pipeline_mode<synchronous>, transform_indices = @transform_2, window_bounds = array<i64: 1, 32>}, {pipeline_mode = #tpu.pipeline_mode<synchronous>, transform_indices = @transform_3, window_bounds = array<i64: 32, 96>}, {pipeline_mode = #tpu.pipeline_mode<synchronous>, transform_indices = @transform_4, window_bounds = array<i64: 1, 96>}, {transform_indices = @transform_5, window_bounds = array<i64: 16, 96>}]} {
    %c0 = arith.constant 0 : index
    %c0_0 = arith.constant 0 : index
    %0 = vector.load %arg1[%c0, %c0_0] : memref<16x32xbf16, #tpu.memory_space<vmem>>, vector<16x32xbf16>
    %c0_1 = arith.constant 0 : index
    %c0_2 = arith.constant 0 : index
    %1 = vector.load %arg2[%c0_1, %c0_2] : memref<1x32xf32, #tpu.memory_space<vmem>>, vector<1x32xf32>
    %c0_3 = arith.constant 0 : index
    %c0_4 = arith.constant 0 : index
    %2 = vector.load %arg3[%c0_3, %c0_4] : memref<1x32xf32, #tpu.memory_space<vmem>>, vector<1x32xf32>
    %3 = arith.extf %0 : vector<16x32xbf16> to vector<16x32xf32>
    %cst = arith.constant dense<0.000000e+00> : vector<16xf32>
    %4 = vector.multi_reduction <add>, %3, %cst [1] : vector<16x32xf32> to vector<16xf32>
    %5 = vector.shape_cast %4 : vector<16xf32> to vector<16x1xf32>
    %cst_5 = arith.constant 3.200000e+01 : f32
    %6 = vector.broadcast %cst_5 : f32 to vector<16x1xf32>
    %7 = arith.divf %5, %6 : vector<16x1xf32>
    %8 = vector.broadcast %7 : vector<16x1xf32> to vector<16x32xf32>
    %9 = arith.subf %3, %8 : vector<16x32xf32>
    %10 = arith.mulf %9, %9 : vector<16x32xf32>
    %cst_6 = arith.constant dense<0.000000e+00> : vector<16xf32>
    %11 = vector.multi_reduction <add>, %10, %cst_6 [1] : vector<16x32xf32> to vector<16xf32>
    %12 = vector.shape_cast %11 : vector<16xf32> to vector<16x1xf32>
    %cst_7 = arith.constant 3.200000e+01 : f32
    %13 = vector.broadcast %cst_7 : f32 to vector<16x1xf32>
    %14 = arith.divf %12, %13 : vector<16x1xf32>
    %15 = vector.broadcast %7 : vector<16x1xf32> to vector<16x32xf32>
    %16 = arith.subf %3, %15 : vector<16x32xf32>
    %cst_8 = arith.constant 9.99999974E-6 : f32
    %17 = vector.broadcast %cst_8 : f32 to vector<16x1xf32>
    %18 = arith.addf %14, %17 : vector<16x1xf32>
    %19 = math.rsqrt %18 : vector<16x1xf32>
    %20 = vector.broadcast %19 : vector<16x1xf32> to vector<16x32xf32>
    %21 = arith.mulf %16, %20 : vector<16x32xf32>
    %22 = vector.broadcast %1 : vector<1x32xf32> to vector<16x32xf32>
    %23 = arith.mulf %21, %22 : vector<16x32xf32>
    %24 = vector.broadcast %2 : vector<1x32xf32> to vector<16x32xf32>
    %25 = arith.addf %23, %24 : vector<16x32xf32>
    %26 = arith.truncf %25 : vector<16x32xf32> to vector<16x32xbf16>
    %c0_9 = arith.constant 0 : index
    %c0_10 = arith.constant 0 : index
    %27 = vector.load %arg4[%c0_9, %c0_10] : memref<32x96xbf16, #tpu.memory_space<vmem>>, vector<32x96xbf16>
    %cst_11 = arith.constant dense<0.000000e+00> : vector<16x96xf32>
    %28 = tpu.matmul %26, %27, %cst_11 {dimension_numbers = #tpu.dot_dimension_numbers<[1], [0], [0], [1], [0, 0, 1, 1], [], []>} : vector<16x32xbf16>, vector<32x96xbf16>, vector<16x96xf32> -> vector<16x96xf32>
    %c0_12 = arith.constant 0 : index
    %c0_13 = arith.constant 0 : index
    %29 = vector.load %arg5[%c0_12, %c0_13] : memref<1x96xf32, #tpu.memory_space<vmem>>, vector<1x96xf32>
    %30 = vector.broadcast %29 : vector<1x96xf32> to vector<16x96xf32>
    %31 = arith.addf %28, %30 : vector<16x96xf32>
    %32 = arith.truncf %31 : vector<16x96xf32> to vector<16x96xbf16>
    %c0_14 = arith.constant 0 : index
    %c0_15 = arith.constant 0 : index
    %33 = vector.load %arg6[%c0_14, %c0_15] : memref<16x96xbf16, #tpu.memory_space<vmem>>, vector<16x96xbf16>
    tpu.vector_store %arg6[%c0_14, %c0_15], %32 {strides = array<i32>} : memref<16x96xbf16, #tpu.memory_space<vmem>>, vector<16x96xbf16>,
    return
  }
  func.func @transform_0(%arg0: i32) -> (i32, i32) {
    %c0_i32 = arith.constant 0 : i32
    %c0_i32_0 = arith.constant 0 : i32
    return %arg0, %c0_i32 : i32, i32
  }
  func.func @transform_1(%arg0: i32) -> (i32, i32) {
    %c0_i32 = arith.constant 0 : i32
    %c0_i32_0 = arith.constant 0 : i32
    %c0_i32_1 = arith.constant 0 : i32
    return %c0_i32, %c0_i32_0 : i32, i32
  }
  func.func @transform_2(%arg0: i32) -> (i32, i32) {
    %c0_i32 = arith.constant 0 : i32
    %c0_i32_0 = arith.constant 0 : i32
    %c0_i32_1 = arith.constant 0 : i32
    return %c0_i32, %c0_i32_0 : i32, i32
  }
  func.func @transform_3(%arg0: i32) -> (i32, i32) {
    %c0_i32 = arith.constant 0 : i32
    %c0_i32_0 = arith.constant 0 : i32
    %c0_i32_1 = arith.constant 0 : i32
    return %c0_i32, %c0_i32_0 : i32, i32
  }
  func.func @transform_4(%arg0: i32) -> (i32, i32) {
    %c0_i32 = arith.constant 0 : i32
    %c0_i32_0 = arith.constant 0 : i32
    %c0_i32_1 = arith.constant 0 : i32
    return %c0_i32, %c0_i32_0 : i32, i32
  }
  func.func @transform_5(%arg0: i32) -> (i32, i32) {
    %c0_i32 = arith.constant 0 : i32
    %c0_i32_0 = arith.constant 0 : i32
    return %arg0, %c0_i32 : i32, i32
  }
}

module attributes {stable_mosaic.version = 11 : i64} {
  func.func @_attn_out_kernel(%arg0: i32, %arg1: memref<1x8x96xbf16, #tpu.memory_space<vmem>>, %arg2: memref<1x1x8xf32, #tpu.memory_space<vmem>>, %arg3: memref<32x32xbf16, #tpu.memory_space<vmem>>, %arg4: memref<1x32xf32, #tpu.memory_space<vmem>>, %arg5: memref<1x8x32xbf16, #tpu.memory_space<vmem>>, %arg6: memref<1x8x32xbf16, #tpu.memory_space<vmem>>, %arg7: memref<8x32xbf16, #tpu.memory_space<vmem>>) attributes {dimension_semantics = [#tpu.dimension_semantics<parallel>], iteration_bounds = array<i64: 2>, scalar_prefetch = 0 : i64, scratch_operands = 1 : i64, tpu.core_type = #tpu.core_type<tc>, window_params = [{transform_indices = @transform_0, window_bounds = array<i64: 1, 8, 96>}, {transform_indices = @transform_1, window_bounds = array<i64: 1, 1, 8>}, {pipeline_mode = #tpu.pipeline_mode<synchronous>, transform_indices = @transform_2, window_bounds = array<i64: 32, 32>}, {pipeline_mode = #tpu.pipeline_mode<synchronous>, transform_indices = @transform_3, window_bounds = array<i64: 1, 32>}, {transform_indices = @transform_4, window_bounds = array<i64: 1, 8, 32>}, {transform_indices = @transform_5, window_bounds = array<i64: 1, 8, 32>}]} {
    %c0 = arith.constant 0 : index
    %c0_0 = arith.constant 0 : index
    %c0_1 = arith.constant 0 : index
    %0 = vector.load %arg1[%c0, %c0_0, %c0_1] : memref<1x8x96xbf16, #tpu.memory_space<vmem>>, vector<1x8x96xbf16>
    %1 = vector.shape_cast %0 : vector<1x8x96xbf16> to vector<8x96xbf16>
    %c0_2 = arith.constant 0 : index
    %c0_3 = arith.constant 0 : index
    %c0_4 = arith.constant 0 : index
    %2 = vector.load %arg2[%c0_2, %c0_3, %c0_4] : memref<1x1x8xf32, #tpu.memory_space<vmem>>, vector<1x1x8xf32>
    %3 = vector.shape_cast %2 : vector<1x1x8xf32> to vector<1x8xf32>
    %4 = vector.extract_strided_slice %1 {offsets = [0, 0], sizes = [8, 4], strides = [1, 1]} : vector<8x96xbf16> to vector<8x4xbf16>
    %5 = vector.extract_strided_slice %1 {offsets = [0, 32], sizes = [8, 4], strides = [1, 1]} : vector<8x96xbf16> to vector<8x4xbf16>
    %6 = vector.extract_strided_slice %1 {offsets = [0, 64], sizes = [8, 4], strides = [1, 1]} : vector<8x96xbf16> to vector<8x4xbf16>
    %cst = arith.constant dense<0.000000e+00> : vector<8x8xf32>
    %7 = tpu.matmul %4, %5, %cst {dimension_numbers = #tpu.dot_dimension_numbers<[1], [1], [0], [0], [0, 0, 1, 0], [], []>} : vector<8x4xbf16>, vector<8x4xbf16>, vector<8x8xf32> -> vector<8x8xf32>
    %cst_5 = arith.constant 5.000000e-01 : f32
    %8 = vector.broadcast %cst_5 : f32 to vector<8x8xf32>
    %9 = arith.mulf %7, %8 : vector<8x8xf32>
    %10 = vector.broadcast %3 : vector<1x8xf32> to vector<8x8xf32>
    %11 = arith.addf %9, %10 : vector<8x8xf32>
    %cst_6 = arith.constant dense<0xFF800000> : vector<8xf32>
    %12 = vector.multi_reduction <maximumf>, %11, %cst_6 [1] : vector<8x8xf32> to vector<8xf32>
    %13 = vector.shape_cast %12 : vector<8xf32> to vector<8x1xf32>
    %14 = vector.broadcast %13 : vector<8x1xf32> to vector<8x8xf32>
    %15 = arith.subf %11, %14 : vector<8x8xf32>
    %16 = math.exp %15 : vector<8x8xf32>
    %cst_7 = arith.constant dense<0.000000e+00> : vector<8xf32>
    %17 = vector.multi_reduction <add>, %16, %cst_7 [1] : vector<8x8xf32> to vector<8xf32>
    %18 = vector.shape_cast %17 : vector<8xf32> to vector<8x1xf32>
    %19 = tpu.reciprocal %18 {approx = true} : vector<8x1xf32> -> vector<8x1xf32>
    %20 = vector.broadcast %19 : vector<8x1xf32> to vector<8x8xf32>
    %21 = arith.mulf %16, %20 : vector<8x8xf32>
    %22 = arith.truncf %21 : vector<8x8xf32> to vector<8x8xbf16>
    %cst_8 = arith.constant dense<0.000000e+00> : vector<8x4xf32>
    %23 = tpu.matmul %22, %6, %cst_8 {dimension_numbers = #tpu.dot_dimension_numbers<[1], [0], [0], [1], [0, 0, 1, 1], [], []>} : vector<8x8xbf16>, vector<8x4xbf16>, vector<8x4xf32> -> vector<8x4xf32>
    %24 = arith.truncf %23 : vector<8x4xf32> to vector<8x4xbf16>
    %c0_9 = arith.constant 0 : index
    %c0_10 = arith.constant 0 : index
    %25 = vector.load %arg7[%c0_9, %c0_10] : memref<8x32xbf16, #tpu.memory_space<vmem>>, vector<8x4xbf16>
    tpu.vector_store %arg7[%c0_9, %c0_10], %24 {strides = array<i32>} : memref<8x32xbf16, #tpu.memory_space<vmem>>, vector<8x4xbf16>,
    %26 = vector.extract_strided_slice %1 {offsets = [0, 4], sizes = [8, 4], strides = [1, 1]} : vector<8x96xbf16> to vector<8x4xbf16>
    %27 = vector.extract_strided_slice %1 {offsets = [0, 36], sizes = [8, 4], strides = [1, 1]} : vector<8x96xbf16> to vector<8x4xbf16>
    %28 = vector.extract_strided_slice %1 {offsets = [0, 68], sizes = [8, 4], strides = [1, 1]} : vector<8x96xbf16> to vector<8x4xbf16>
    %cst_11 = arith.constant dense<0.000000e+00> : vector<8x8xf32>
    %29 = tpu.matmul %26, %27, %cst_11 {dimension_numbers = #tpu.dot_dimension_numbers<[1], [1], [0], [0], [0, 0, 1, 0], [], []>} : vector<8x4xbf16>, vector<8x4xbf16>, vector<8x8xf32> -> vector<8x8xf32>
    %cst_12 = arith.constant 5.000000e-01 : f32
    %30 = vector.broadcast %cst_12 : f32 to vector<8x8xf32>
    %31 = arith.mulf %29, %30 : vector<8x8xf32>
    %32 = vector.broadcast %3 : vector<1x8xf32> to vector<8x8xf32>
    %33 = arith.addf %31, %32 : vector<8x8xf32>
    %cst_13 = arith.constant dense<0xFF800000> : vector<8xf32>
    %34 = vector.multi_reduction <maximumf>, %33, %cst_13 [1] : vector<8x8xf32> to vector<8xf32>
    %35 = vector.shape_cast %34 : vector<8xf32> to vector<8x1xf32>
    %36 = vector.broadcast %35 : vector<8x1xf32> to vector<8x8xf32>
    %37 = arith.subf %33, %36 : vector<8x8xf32>
    %38 = math.exp %37 : vector<8x8xf32>
    %cst_14 = arith.constant dense<0.000000e+00> : vector<8xf32>
    %39 = vector.multi_reduction <add>, %38, %cst_14 [1] : vector<8x8xf32> to vector<8xf32>
    %40 = vector.shape_cast %39 : vector<8xf32> to vector<8x1xf32>
    %41 = tpu.reciprocal %40 {approx = true} : vector<8x1xf32> -> vector<8x1xf32>
    %42 = vector.broadcast %41 : vector<8x1xf32> to vector<8x8xf32>
    %43 = arith.mulf %38, %42 : vector<8x8xf32>
    %44 = arith.truncf %43 : vector<8x8xf32> to vector<8x8xbf16>
    %cst_15 = arith.constant dense<0.000000e+00> : vector<8x4xf32>
    %45 = tpu.matmul %44, %28, %cst_15 {dimension_numbers = #tpu.dot_dimension_numbers<[1], [0], [0], [1], [0, 0, 1, 1], [], []>} : vector<8x8xbf16>, vector<8x4xbf16>, vector<8x4xf32> -> vector<8x4xf32>
    %46 = arith.truncf %45 : vector<8x4xf32> to vector<8x4xbf16>
    %c0_16 = arith.constant 0 : index
    %c4 = arith.constant 4 : index
    %47 = vector.load %arg7[%c0_16, %c4] : memref<8x32xbf16, #tpu.memory_space<vmem>>, vector<8x4xbf16>
    tpu.vector_store %arg7[%c0_16, %c4], %46 {strides = array<i32>} : memref<8x32xbf16, #tpu.memory_space<vmem>>, vector<8x4xbf16>,
    %48 = vector.extract_strided_slice %1 {offsets = [0, 8], sizes = [8, 4], strides = [1, 1]} : vector<8x96xbf16> to vector<8x4xbf16>
    %49 = vector.extract_strided_slice %1 {offsets = [0, 40], sizes = [8, 4], strides = [1, 1]} : vector<8x96xbf16> to vector<8x4xbf16>
    %50 = vector.extract_strided_slice %1 {offsets = [0, 72], sizes = [8, 4], strides = [1, 1]} : vector<8x96xbf16> to vector<8x4xbf16>
    %cst_17 = arith.constant dense<0.000000e+00> : vector<8x8xf32>
    %51 = tpu.matmul %48, %49, %cst_17 {dimension_numbers = #tpu.dot_dimension_numbers<[1], [1], [0], [0], [0, 0, 1, 0], [], []>} : vector<8x4xbf16>, vector<8x4xbf16>, vector<8x8xf32> -> vector<8x8xf32>
    %cst_18 = arith.constant 5.000000e-01 : f32
    %52 = vector.broadcast %cst_18 : f32 to vector<8x8xf32>
    %53 = arith.mulf %51, %52 : vector<8x8xf32>
    %54 = vector.broadcast %3 : vector<1x8xf32> to vector<8x8xf32>
    %55 = arith.addf %53, %54 : vector<8x8xf32>
    %cst_19 = arith.constant dense<0xFF800000> : vector<8xf32>
    %56 = vector.multi_reduction <maximumf>, %55, %cst_19 [1] : vector<8x8xf32> to vector<8xf32>
    %57 = vector.shape_cast %56 : vector<8xf32> to vector<8x1xf32>
    %58 = vector.broadcast %57 : vector<8x1xf32> to vector<8x8xf32>
    %59 = arith.subf %55, %58 : vector<8x8xf32>
    %60 = math.exp %59 : vector<8x8xf32>
    %cst_20 = arith.constant dense<0.000000e+00> : vector<8xf32>
    %61 = vector.multi_reduction <add>, %60, %cst_20 [1] : vector<8x8xf32> to vector<8xf32>
    %62 = vector.shape_cast %61 : vector<8xf32> to vector<8x1xf32>
    %63 = tpu.reciprocal %62 {approx = true} : vector<8x1xf32> -> vector<8x1xf32>
    %64 = vector.broadcast %63 : vector<8x1xf32> to vector<8x8xf32>
    %65 = arith.mulf %60, %64 : vector<8x8xf32>
    %66 = arith.truncf %65 : vector<8x8xf32> to vector<8x8xbf16>
    %cst_21 = arith.constant dense<0.000000e+00> : vector<8x4xf32>
    %67 = tpu.matmul %66, %50, %cst_21 {dimension_numbers = #tpu.dot_dimension_numbers<[1], [0], [0], [1], [0, 0, 1, 1], [], []>} : vector<8x8xbf16>, vector<8x4xbf16>, vector<8x4xf32> -> vector<8x4xf32>
    %68 = arith.truncf %67 : vector<8x4xf32> to vector<8x4xbf16>
    %c0_22 = arith.constant 0 : index
    %c8 = arith.constant 8 : index
    %69 = vector.load %arg7[%c0_22, %c8] : memref<8x32xbf16, #tpu.memory_space<vmem>>, vector<8x4xbf16>
    tpu.vector_store %arg7[%c0_22, %c8], %68 {strides = array<i32>} : memref<8x32xbf16, #tpu.memory_space<vmem>>, vector<8x4xbf16>,
    %70 = vector.extract_strided_slice %1 {offsets = [0, 12], sizes = [8, 4], strides = [1, 1]} : vector<8x96xbf16> to vector<8x4xbf16>
    %71 = vector.extract_strided_slice %1 {offsets = [0, 44], sizes = [8, 4], strides = [1, 1]} : vector<8x96xbf16> to vector<8x4xbf16>
    %72 = vector.extract_strided_slice %1 {offsets = [0, 76], sizes = [8, 4], strides = [1, 1]} : vector<8x96xbf16> to vector<8x4xbf16>
    %cst_23 = arith.constant dense<0.000000e+00> : vector<8x8xf32>
    %73 = tpu.matmul %70, %71, %cst_23 {dimension_numbers = #tpu.dot_dimension_numbers<[1], [1], [0], [0], [0, 0, 1, 0], [], []>} : vector<8x4xbf16>, vector<8x4xbf16>, vector<8x8xf32> -> vector<8x8xf32>
    %cst_24 = arith.constant 5.000000e-01 : f32
    %74 = vector.broadcast %cst_24 : f32 to vector<8x8xf32>
    %75 = arith.mulf %73, %74 : vector<8x8xf32>
    %76 = vector.broadcast %3 : vector<1x8xf32> to vector<8x8xf32>
    %77 = arith.addf %75, %76 : vector<8x8xf32>
    %cst_25 = arith.constant dense<0xFF800000> : vector<8xf32>
    %78 = vector.multi_reduction <maximumf>, %77, %cst_25 [1] : vector<8x8xf32> to vector<8xf32>
    %79 = vector.shape_cast %78 : vector<8xf32> to vector<8x1xf32>
    %80 = vector.broadcast %79 : vector<8x1xf32> to vector<8x8xf32>
    %81 = arith.subf %77, %80 : vector<8x8xf32>
    %82 = math.exp %81 : vector<8x8xf32>
    %cst_26 = arith.constant dense<0.000000e+00> : vector<8xf32>
    %83 = vector.multi_reduction <add>, %82, %cst_26 [1] : vector<8x8xf32> to vector<8xf32>
    %84 = vector.shape_cast %83 : vector<8xf32> to vector<8x1xf32>
    %85 = tpu.reciprocal %84 {approx = true} : vector<8x1xf32> -> vector<8x1xf32>
    %86 = vector.broadcast %85 : vector<8x1xf32> to vector<8x8xf32>
    %87 = arith.mulf %82, %86 : vector<8x8xf32>
    %88 = arith.truncf %87 : vector<8x8xf32> to vector<8x8xbf16>
    %cst_27 = arith.constant dense<0.000000e+00> : vector<8x4xf32>
    %89 = tpu.matmul %88, %72, %cst_27 {dimension_numbers = #tpu.dot_dimension_numbers<[1], [0], [0], [1], [0, 0, 1, 1], [], []>} : vector<8x8xbf16>, vector<8x4xbf16>, vector<8x4xf32> -> vector<8x4xf32>
    %90 = arith.truncf %89 : vector<8x4xf32> to vector<8x4xbf16>
    %c0_28 = arith.constant 0 : index
    %c12 = arith.constant 12 : index
    %91 = vector.load %arg7[%c0_28, %c12] : memref<8x32xbf16, #tpu.memory_space<vmem>>, vector<8x4xbf16>
    tpu.vector_store %arg7[%c0_28, %c12], %90 {strides = array<i32>} : memref<8x32xbf16, #tpu.memory_space<vmem>>, vector<8x4xbf16>,
    %92 = vector.extract_strided_slice %1 {offsets = [0, 16], sizes = [8, 4], strides = [1, 1]} : vector<8x96xbf16> to vector<8x4xbf16>
    %93 = vector.extract_strided_slice %1 {offsets = [0, 48], sizes = [8, 4], strides = [1, 1]} : vector<8x96xbf16> to vector<8x4xbf16>
    %94 = vector.extract_strided_slice %1 {offsets = [0, 80], sizes = [8, 4], strides = [1, 1]} : vector<8x96xbf16> to vector<8x4xbf16>
    %cst_29 = arith.constant dense<0.000000e+00> : vector<8x8xf32>
    %95 = tpu.matmul %92, %93, %cst_29 {dimension_numbers = #tpu.dot_dimension_numbers<[1], [1], [0], [0], [0, 0, 1, 0], [], []>} : vector<8x4xbf16>, vector<8x4xbf16>, vector<8x8xf32> -> vector<8x8xf32>
    %cst_30 = arith.constant 5.000000e-01 : f32
    %96 = vector.broadcast %cst_30 : f32 to vector<8x8xf32>
    %97 = arith.mulf %95, %96 : vector<8x8xf32>
    %98 = vector.broadcast %3 : vector<1x8xf32> to vector<8x8xf32>
    %99 = arith.addf %97, %98 : vector<8x8xf32>
    %cst_31 = arith.constant dense<0xFF800000> : vector<8xf32>
    %100 = vector.multi_reduction <maximumf>, %99, %cst_31 [1] : vector<8x8xf32> to vector<8xf32>
    %101 = vector.shape_cast %100 : vector<8xf32> to vector<8x1xf32>
    %102 = vector.broadcast %101 : vector<8x1xf32> to vector<8x8xf32>
    %103 = arith.subf %99, %102 : vector<8x8xf32>
    %104 = math.exp %103 : vector<8x8xf32>
    %cst_32 = arith.constant dense<0.000000e+00> : vector<8xf32>
    %105 = vector.multi_reduction <add>, %104, %cst_32 [1] : vector<8x8xf32> to vector<8xf32>
    %106 = vector.shape_cast %105 : vector<8xf32> to vector<8x1xf32>
    %107 = tpu.reciprocal %106 {approx = true} : vector<8x1xf32> -> vector<8x1xf32>
    %108 = vector.broadcast %107 : vector<8x1xf32> to vector<8x8xf32>
    %109 = arith.mulf %104, %108 : vector<8x8xf32>
    %110 = arith.truncf %109 : vector<8x8xf32> to vector<8x8xbf16>
    %cst_33 = arith.constant dense<0.000000e+00> : vector<8x4xf32>
    %111 = tpu.matmul %110, %94, %cst_33 {dimension_numbers = #tpu.dot_dimension_numbers<[1], [0], [0], [1], [0, 0, 1, 1], [], []>} : vector<8x8xbf16>, vector<8x4xbf16>, vector<8x4xf32> -> vector<8x4xf32>
    %112 = arith.truncf %111 : vector<8x4xf32> to vector<8x4xbf16>
    %c0_34 = arith.constant 0 : index
    %c16 = arith.constant 16 : index
    %113 = vector.load %arg7[%c0_34, %c16] : memref<8x32xbf16, #tpu.memory_space<vmem>>, vector<8x4xbf16>
    tpu.vector_store %arg7[%c0_34, %c16], %112 {strides = array<i32>} : memref<8x32xbf16, #tpu.memory_space<vmem>>, vector<8x4xbf16>,
    %114 = vector.extract_strided_slice %1 {offsets = [0, 20], sizes = [8, 4], strides = [1, 1]} : vector<8x96xbf16> to vector<8x4xbf16>
    %115 = vector.extract_strided_slice %1 {offsets = [0, 52], sizes = [8, 4], strides = [1, 1]} : vector<8x96xbf16> to vector<8x4xbf16>
    %116 = vector.extract_strided_slice %1 {offsets = [0, 84], sizes = [8, 4], strides = [1, 1]} : vector<8x96xbf16> to vector<8x4xbf16>
    %cst_35 = arith.constant dense<0.000000e+00> : vector<8x8xf32>
    %117 = tpu.matmul %114, %115, %cst_35 {dimension_numbers = #tpu.dot_dimension_numbers<[1], [1], [0], [0], [0, 0, 1, 0], [], []>} : vector<8x4xbf16>, vector<8x4xbf16>, vector<8x8xf32> -> vector<8x8xf32>
    %cst_36 = arith.constant 5.000000e-01 : f32
    %118 = vector.broadcast %cst_36 : f32 to vector<8x8xf32>
    %119 = arith.mulf %117, %118 : vector<8x8xf32>
    %120 = vector.broadcast %3 : vector<1x8xf32> to vector<8x8xf32>
    %121 = arith.addf %119, %120 : vector<8x8xf32>
    %cst_37 = arith.constant dense<0xFF800000> : vector<8xf32>
    %122 = vector.multi_reduction <maximumf>, %121, %cst_37 [1] : vector<8x8xf32> to vector<8xf32>
    %123 = vector.shape_cast %122 : vector<8xf32> to vector<8x1xf32>
    %124 = vector.broadcast %123 : vector<8x1xf32> to vector<8x8xf32>
    %125 = arith.subf %121, %124 : vector<8x8xf32>
    %126 = math.exp %125 : vector<8x8xf32>
    %cst_38 = arith.constant dense<0.000000e+00> : vector<8xf32>
    %127 = vector.multi_reduction <add>, %126, %cst_38 [1] : vector<8x8xf32> to vector<8xf32>
    %128 = vector.shape_cast %127 : vector<8xf32> to vector<8x1xf32>
    %129 = tpu.reciprocal %128 {approx = true} : vector<8x1xf32> -> vector<8x1xf32>
    %130 = vector.broadcast %129 : vector<8x1xf32> to vector<8x8xf32>
    %131 = arith.mulf %126, %130 : vector<8x8xf32>
    %132 = arith.truncf %131 : vector<8x8xf32> to vector<8x8xbf16>
    %cst_39 = arith.constant dense<0.000000e+00> : vector<8x4xf32>
    %133 = tpu.matmul %132, %116, %cst_39 {dimension_numbers = #tpu.dot_dimension_numbers<[1], [0], [0], [1], [0, 0, 1, 1], [], []>} : vector<8x8xbf16>, vector<8x4xbf16>, vector<8x4xf32> -> vector<8x4xf32>
    %134 = arith.truncf %133 : vector<8x4xf32> to vector<8x4xbf16>
    %c0_40 = arith.constant 0 : index
    %c20 = arith.constant 20 : index
    %135 = vector.load %arg7[%c0_40, %c20] : memref<8x32xbf16, #tpu.memory_space<vmem>>, vector<8x4xbf16>
    tpu.vector_store %arg7[%c0_40, %c20], %134 {strides = array<i32>} : memref<8x32xbf16, #tpu.memory_space<vmem>>, vector<8x4xbf16>,
    %136 = vector.extract_strided_slice %1 {offsets = [0, 24], sizes = [8, 4], strides = [1, 1]} : vector<8x96xbf16> to vector<8x4xbf16>
    %137 = vector.extract_strided_slice %1 {offsets = [0, 56], sizes = [8, 4], strides = [1, 1]} : vector<8x96xbf16> to vector<8x4xbf16>
    %138 = vector.extract_strided_slice %1 {offsets = [0, 88], sizes = [8, 4], strides = [1, 1]} : vector<8x96xbf16> to vector<8x4xbf16>
    %cst_41 = arith.constant dense<0.000000e+00> : vector<8x8xf32>
    %139 = tpu.matmul %136, %137, %cst_41 {dimension_numbers = #tpu.dot_dimension_numbers<[1], [1], [0], [0], [0, 0, 1, 0], [], []>} : vector<8x4xbf16>, vector<8x4xbf16>, vector<8x8xf32> -> vector<8x8xf32>
    %cst_42 = arith.constant 5.000000e-01 : f32
    %140 = vector.broadcast %cst_42 : f32 to vector<8x8xf32>
    %141 = arith.mulf %139, %140 : vector<8x8xf32>
    %142 = vector.broadcast %3 : vector<1x8xf32> to vector<8x8xf32>
    %143 = arith.addf %141, %142 : vector<8x8xf32>
    %cst_43 = arith.constant dense<0xFF800000> : vector<8xf32>
    %144 = vector.multi_reduction <maximumf>, %143, %cst_43 [1] : vector<8x8xf32> to vector<8xf32>
    %145 = vector.shape_cast %144 : vector<8xf32> to vector<8x1xf32>
    %146 = vector.broadcast %145 : vector<8x1xf32> to vector<8x8xf32>
    %147 = arith.subf %143, %146 : vector<8x8xf32>
    %148 = math.exp %147 : vector<8x8xf32>
    %cst_44 = arith.constant dense<0.000000e+00> : vector<8xf32>
    %149 = vector.multi_reduction <add>, %148, %cst_44 [1] : vector<8x8xf32> to vector<8xf32>
    %150 = vector.shape_cast %149 : vector<8xf32> to vector<8x1xf32>
    %151 = tpu.reciprocal %150 {approx = true} : vector<8x1xf32> -> vector<8x1xf32>
    %152 = vector.broadcast %151 : vector<8x1xf32> to vector<8x8xf32>
    %153 = arith.mulf %148, %152 : vector<8x8xf32>
    %154 = arith.truncf %153 : vector<8x8xf32> to vector<8x8xbf16>
    %cst_45 = arith.constant dense<0.000000e+00> : vector<8x4xf32>
    %155 = tpu.matmul %154, %138, %cst_45 {dimension_numbers = #tpu.dot_dimension_numbers<[1], [0], [0], [1], [0, 0, 1, 1], [], []>} : vector<8x8xbf16>, vector<8x4xbf16>, vector<8x4xf32> -> vector<8x4xf32>
    %156 = arith.truncf %155 : vector<8x4xf32> to vector<8x4xbf16>
    %c0_46 = arith.constant 0 : index
    %c24 = arith.constant 24 : index
    %157 = vector.load %arg7[%c0_46, %c24] : memref<8x32xbf16, #tpu.memory_space<vmem>>, vector<8x4xbf16>
    tpu.vector_store %arg7[%c0_46, %c24], %156 {strides = array<i32>} : memref<8x32xbf16, #tpu.memory_space<vmem>>, vector<8x4xbf16>,
    %158 = vector.extract_strided_slice %1 {offsets = [0, 28], sizes = [8, 4], strides = [1, 1]} : vector<8x96xbf16> to vector<8x4xbf16>
    %159 = vector.extract_strided_slice %1 {offsets = [0, 60], sizes = [8, 4], strides = [1, 1]} : vector<8x96xbf16> to vector<8x4xbf16>
    %160 = vector.extract_strided_slice %1 {offsets = [0, 92], sizes = [8, 4], strides = [1, 1]} : vector<8x96xbf16> to vector<8x4xbf16>
    %cst_47 = arith.constant dense<0.000000e+00> : vector<8x8xf32>
    %161 = tpu.matmul %158, %159, %cst_47 {dimension_numbers = #tpu.dot_dimension_numbers<[1], [1], [0], [0], [0, 0, 1, 0], [], []>} : vector<8x4xbf16>, vector<8x4xbf16>, vector<8x8xf32> -> vector<8x8xf32>
    %cst_48 = arith.constant 5.000000e-01 : f32
    %162 = vector.broadcast %cst_48 : f32 to vector<8x8xf32>
    %163 = arith.mulf %161, %162 : vector<8x8xf32>
    %164 = vector.broadcast %3 : vector<1x8xf32> to vector<8x8xf32>
    %165 = arith.addf %163, %164 : vector<8x8xf32>
    %cst_49 = arith.constant dense<0xFF800000> : vector<8xf32>
    %166 = vector.multi_reduction <maximumf>, %165, %cst_49 [1] : vector<8x8xf32> to vector<8xf32>
    %167 = vector.shape_cast %166 : vector<8xf32> to vector<8x1xf32>
    %168 = vector.broadcast %167 : vector<8x1xf32> to vector<8x8xf32>
    %169 = arith.subf %165, %168 : vector<8x8xf32>
    %170 = math.exp %169 : vector<8x8xf32>
    %cst_50 = arith.constant dense<0.000000e+00> : vector<8xf32>
    %171 = vector.multi_reduction <add>, %170, %cst_50 [1] : vector<8x8xf32> to vector<8xf32>
    %172 = vector.shape_cast %171 : vector<8xf32> to vector<8x1xf32>
    %173 = tpu.reciprocal %172 {approx = true} : vector<8x1xf32> -> vector<8x1xf32>
    %174 = vector.broadcast %173 : vector<8x1xf32> to vector<8x8xf32>
    %175 = arith.mulf %170, %174 : vector<8x8xf32>
    %176 = arith.truncf %175 : vector<8x8xf32> to vector<8x8xbf16>
    %cst_51 = arith.constant dense<0.000000e+00> : vector<8x4xf32>
    %177 = tpu.matmul %176, %160, %cst_51 {dimension_numbers = #tpu.dot_dimension_numbers<[1], [0], [0], [1], [0, 0, 1, 1], [], []>} : vector<8x8xbf16>, vector<8x4xbf16>, vector<8x4xf32> -> vector<8x4xf32>
    %178 = arith.truncf %177 : vector<8x4xf32> to vector<8x4xbf16>
    %c0_52 = arith.constant 0 : index
    %c28 = arith.constant 28 : index
    %179 = vector.load %arg7[%c0_52, %c28] : memref<8x32xbf16, #tpu.memory_space<vmem>>, vector<8x4xbf16>
    tpu.vector_store %arg7[%c0_52, %c28], %178 {strides = array<i32>} : memref<8x32xbf16, #tpu.memory_space<vmem>>, vector<8x4xbf16>,
    %c0_53 = arith.constant 0 : index
    %c0_54 = arith.constant 0 : index
    %180 = vector.load %arg7[%c0_53, %c0_54] : memref<8x32xbf16, #tpu.memory_space<vmem>>, vector<8x32xbf16>
    %c0_55 = arith.constant 0 : index
    %c0_56 = arith.constant 0 : index
    %181 = vector.load %arg3[%c0_55, %c0_56] : memref<32x32xbf16, #tpu.memory_space<vmem>>, vector<32x32xbf16>
    %cst_57 = arith.constant dense<0.000000e+00> : vector<8x32xf32>
    %182 = tpu.matmul %180, %181, %cst_57 {dimension_numbers = #tpu.dot_dimension_numbers<[1], [0], [0], [1], [0, 0, 1, 1], [], []>} : vector<8x32xbf16>, vector<32x32xbf16>, vector<8x32xf32> -> vector<8x32xf32>
    %c0_58 = arith.constant 0 : index
    %c0_59 = arith.constant 0 : index
    %183 = vector.load %arg4[%c0_58, %c0_59] : memref<1x32xf32, #tpu.memory_space<vmem>>, vector<1x32xf32>
    %184 = vector.broadcast %183 : vector<1x32xf32> to vector<8x32xf32>
    %185 = arith.addf %182, %184 : vector<8x32xf32>
    %c0_60 = arith.constant 0 : index
    %c0_61 = arith.constant 0 : index
    %c0_62 = arith.constant 0 : index
    %186 = vector.load %arg5[%c0_60, %c0_61, %c0_62] : memref<1x8x32xbf16, #tpu.memory_space<vmem>>, vector<1x8x32xbf16>
    %187 = vector.shape_cast %186 : vector<1x8x32xbf16> to vector<8x32xbf16>
    %188 = arith.extf %187 : vector<8x32xbf16> to vector<8x32xf32>
    %189 = arith.addf %188, %185 : vector<8x32xf32>
    %190 = arith.truncf %189 : vector<8x32xf32> to vector<8x32xbf16>
    %c0_63 = arith.constant 0 : index
    %c0_64 = arith.constant 0 : index
    %c0_65 = arith.constant 0 : index
    %191 = vector.load %arg6[%c0_63, %c0_64, %c0_65] : memref<1x8x32xbf16, #tpu.memory_space<vmem>>, vector<1x8x32xbf16>
    %192 = vector.shape_cast %191 : vector<1x8x32xbf16> to vector<8x32xbf16>
    %193 = vector.shape_cast %190 : vector<8x32xbf16> to vector<1x8x32xbf16>
    tpu.vector_store %arg6[%c0_63, %c0_64, %c0_65], %193 {strides = array<i32>} : memref<1x8x32xbf16, #tpu.memory_space<vmem>>, vector<1x8x32xbf16>,
    return
  }
  func.func @transform_0(%arg0: i32) -> (i32, i32, i32) {
    %c0_i32 = arith.constant 0 : i32
    %c0_i32_0 = arith.constant 0 : i32
    %c0_i32_1 = arith.constant 0 : i32
    return %arg0, %c0_i32, %c0_i32_0 : i32, i32, i32
  }
  func.func @transform_1(%arg0: i32) -> (i32, i32, i32) {
    %c0_i32 = arith.constant 0 : i32
    %c0_i32_0 = arith.constant 0 : i32
    %c0_i32_1 = arith.constant 0 : i32
    return %arg0, %c0_i32, %c0_i32_0 : i32, i32, i32
  }
  func.func @transform_2(%arg0: i32) -> (i32, i32) {
    %c0_i32 = arith.constant 0 : i32
    %c0_i32_0 = arith.constant 0 : i32
    %c0_i32_1 = arith.constant 0 : i32
    return %c0_i32, %c0_i32_0 : i32, i32
  }
  func.func @transform_3(%arg0: i32) -> (i32, i32) {
    %c0_i32 = arith.constant 0 : i32
    %c0_i32_0 = arith.constant 0 : i32
    %c0_i32_1 = arith.constant 0 : i32
    return %c0_i32, %c0_i32_0 : i32, i32
  }
  func.func @transform_4(%arg0: i32) -> (i32, i32, i32) {
    %c0_i32 = arith.constant 0 : i32
    %c0_i32_0 = arith.constant 0 : i32
    %c0_i32_1 = arith.constant 0 : i32
    return %arg0, %c0_i32, %c0_i32_0 : i32, i32, i32
  }
  func.func @transform_5(%arg0: i32) -> (i32, i32, i32) {
    %c0_i32 = arith.constant 0 : i32
    %c0_i32_0 = arith.constant 0 : i32
    %c0_i32_1 = arith.constant 0 : i32
    return %arg0, %c0_i32, %c0_i32_0 : i32, i32, i32
  }
}

module attributes {stable_mosaic.version = 11 : i64} {
  func.func @_ln_mm_glu_kernel(%arg0: i32, %arg1: memref<16x32xbf16, #tpu.memory_space<vmem>>, %arg2: memref<1x32xf32, #tpu.memory_space<vmem>>, %arg3: memref<1x32xf32, #tpu.memory_space<vmem>>, %arg4: memref<32x64xbf16, #tpu.memory_space<vmem>>, %arg5: memref<1x64xf32, #tpu.memory_space<vmem>>, %arg6: memref<16x32xbf16, #tpu.memory_space<vmem>>) attributes {dimension_semantics = [#tpu.dimension_semantics<parallel>], iteration_bounds = array<i64: 1>, scalar_prefetch = 0 : i64, scratch_operands = 0 : i64, tpu.core_type = #tpu.core_type<tc>, window_params = [{transform_indices = @transform_0, window_bounds = array<i64: 16, 32>}, {pipeline_mode = #tpu.pipeline_mode<synchronous>, transform_indices = @transform_1, window_bounds = array<i64: 1, 32>}, {pipeline_mode = #tpu.pipeline_mode<synchronous>, transform_indices = @transform_2, window_bounds = array<i64: 1, 32>}, {pipeline_mode = #tpu.pipeline_mode<synchronous>, transform_indices = @transform_3, window_bounds = array<i64: 32, 64>}, {pipeline_mode = #tpu.pipeline_mode<synchronous>, transform_indices = @transform_4, window_bounds = array<i64: 1, 64>}, {transform_indices = @transform_5, window_bounds = array<i64: 16, 32>}]} {
    %c0 = arith.constant 0 : index
    %c0_0 = arith.constant 0 : index
    %0 = vector.load %arg1[%c0, %c0_0] : memref<16x32xbf16, #tpu.memory_space<vmem>>, vector<16x32xbf16>
    %c0_1 = arith.constant 0 : index
    %c0_2 = arith.constant 0 : index
    %1 = vector.load %arg2[%c0_1, %c0_2] : memref<1x32xf32, #tpu.memory_space<vmem>>, vector<1x32xf32>
    %c0_3 = arith.constant 0 : index
    %c0_4 = arith.constant 0 : index
    %2 = vector.load %arg3[%c0_3, %c0_4] : memref<1x32xf32, #tpu.memory_space<vmem>>, vector<1x32xf32>
    %3 = arith.extf %0 : vector<16x32xbf16> to vector<16x32xf32>
    %cst = arith.constant dense<0.000000e+00> : vector<16xf32>
    %4 = vector.multi_reduction <add>, %3, %cst [1] : vector<16x32xf32> to vector<16xf32>
    %5 = vector.shape_cast %4 : vector<16xf32> to vector<16x1xf32>
    %cst_5 = arith.constant 3.200000e+01 : f32
    %6 = vector.broadcast %cst_5 : f32 to vector<16x1xf32>
    %7 = arith.divf %5, %6 : vector<16x1xf32>
    %8 = vector.broadcast %7 : vector<16x1xf32> to vector<16x32xf32>
    %9 = arith.subf %3, %8 : vector<16x32xf32>
    %10 = arith.mulf %9, %9 : vector<16x32xf32>
    %cst_6 = arith.constant dense<0.000000e+00> : vector<16xf32>
    %11 = vector.multi_reduction <add>, %10, %cst_6 [1] : vector<16x32xf32> to vector<16xf32>
    %12 = vector.shape_cast %11 : vector<16xf32> to vector<16x1xf32>
    %cst_7 = arith.constant 3.200000e+01 : f32
    %13 = vector.broadcast %cst_7 : f32 to vector<16x1xf32>
    %14 = arith.divf %12, %13 : vector<16x1xf32>
    %15 = vector.broadcast %7 : vector<16x1xf32> to vector<16x32xf32>
    %16 = arith.subf %3, %15 : vector<16x32xf32>
    %cst_8 = arith.constant 9.99999974E-6 : f32
    %17 = vector.broadcast %cst_8 : f32 to vector<16x1xf32>
    %18 = arith.addf %14, %17 : vector<16x1xf32>
    %19 = math.rsqrt %18 : vector<16x1xf32>
    %20 = vector.broadcast %19 : vector<16x1xf32> to vector<16x32xf32>
    %21 = arith.mulf %16, %20 : vector<16x32xf32>
    %22 = vector.broadcast %1 : vector<1x32xf32> to vector<16x32xf32>
    %23 = arith.mulf %21, %22 : vector<16x32xf32>
    %24 = vector.broadcast %2 : vector<1x32xf32> to vector<16x32xf32>
    %25 = arith.addf %23, %24 : vector<16x32xf32>
    %26 = arith.truncf %25 : vector<16x32xf32> to vector<16x32xbf16>
    %c0_9 = arith.constant 0 : index
    %c0_10 = arith.constant 0 : index
    %27 = vector.load %arg4[%c0_9, %c0_10] : memref<32x64xbf16, #tpu.memory_space<vmem>>, vector<32x64xbf16>
    %cst_11 = arith.constant dense<0.000000e+00> : vector<16x64xf32>
    %28 = tpu.matmul %26, %27, %cst_11 {dimension_numbers = #tpu.dot_dimension_numbers<[1], [0], [0], [1], [0, 0, 1, 1], [], []>} : vector<16x32xbf16>, vector<32x64xbf16>, vector<16x64xf32> -> vector<16x64xf32>
    %c0_12 = arith.constant 0 : index
    %c0_13 = arith.constant 0 : index
    %29 = vector.load %arg5[%c0_12, %c0_13] : memref<1x64xf32, #tpu.memory_space<vmem>>, vector<1x64xf32>
    %30 = vector.broadcast %29 : vector<1x64xf32> to vector<16x64xf32>
    %31 = arith.addf %28, %30 : vector<16x64xf32>
    %32 = vector.extract_strided_slice %31 {offsets = [0, 0], sizes = [16, 32], strides = [1, 1]} : vector<16x64xf32> to vector<16x32xf32>
    %33 = vector.extract_strided_slice %31 {offsets = [0, 32], sizes = [16, 32], strides = [1, 1]} : vector<16x64xf32> to vector<16x32xf32>
    %34 = arith.negf %33 : vector<16x32xf32>
    %35 = math.exp %34 : vector<16x32xf32>
    %cst_14 = arith.constant 1.000000e+00 : f32
    %36 = vector.broadcast %cst_14 : f32 to vector<16x32xf32>
    %37 = arith.addf %36, %35 : vector<16x32xf32>
    %38 = arith.divf %36, %37 : vector<16x32xf32>
    %39 = arith.mulf %32, %38 : vector<16x32xf32>
    %40 = arith.truncf %39 : vector<16x32xf32> to vector<16x32xbf16>
    %c0_15 = arith.constant 0 : index
    %c0_16 = arith.constant 0 : index
    %41 = vector.load %arg6[%c0_15, %c0_16] : memref<16x32xbf16, #tpu.memory_space<vmem>>, vector<16x32xbf16>
    tpu.vector_store %arg6[%c0_15, %c0_16], %40 {strides = array<i32>} : memref<16x32xbf16, #tpu.memory_space<vmem>>, vector<16x32xbf16>,
    return
  }
  func.func @transform_0(%arg0: i32) -> (i32, i32) {
    %c0_i32 = arith.constant 0 : i32
    %c0_i32_0 = arith.constant 0 : i32
    return %arg0, %c0_i32 : i32, i32
  }
  func.func @transform_1(%arg0: i32) -> (i32, i32) {
    %c0_i32 = arith.constant 0 : i32
    %c0_i32_0 = arith.constant 0 : i32
    %c0_i32_1 = arith.constant 0 : i32
    return %c0_i32, %c0_i32_0 : i32, i32
  }
  func.func @transform_2(%arg0: i32) -> (i32, i32) {
    %c0_i32 = arith.constant 0 : i32
    %c0_i32_0 = arith.constant 0 : i32
    %c0_i32_1 = arith.constant 0 : i32
    return %c0_i32, %c0_i32_0 : i32, i32
  }
  func.func @transform_3(%arg0: i32) -> (i32, i32) {
    %c0_i32 = arith.constant 0 : i32
    %c0_i32_0 = arith.constant 0 : i32
    %c0_i32_1 = arith.constant 0 : i32
    return %c0_i32, %c0_i32_0 : i32, i32
  }
  func.func @transform_4(%arg0: i32) -> (i32, i32) {
    %c0_i32 = arith.constant 0 : i32
    %c0_i32_0 = arith.constant 0 : i32
    %c0_i32_1 = arith.constant 0 : i32
    return %c0_i32, %c0_i32_0 : i32, i32
  }
  func.func @transform_5(%arg0: i32) -> (i32, i32) {
    %c0_i32 = arith.constant 0 : i32
    %c0_i32_0 = arith.constant 0 : i32
    return %arg0, %c0_i32 : i32, i32
  }
}

module attributes {stable_mosaic.version = 11 : i64} {
  func.func @_conv_tail_kernel(%arg0: i32, %arg1: memref<1x38x32xbf16, #tpu.memory_space<vmem>>, %arg2: memref<31x32xf32, #tpu.memory_space<vmem>>, %arg3: memref<1x32xf32, #tpu.memory_space<vmem>>, %arg4: memref<1x32xf32, #tpu.memory_space<vmem>>, %arg5: memref<1x32xf32, #tpu.memory_space<vmem>>, %arg6: memref<32x32xbf16, #tpu.memory_space<vmem>>, %arg7: memref<1x32xf32, #tpu.memory_space<vmem>>, %arg8: memref<1x8x32xbf16, #tpu.memory_space<vmem>>, %arg9: memref<1x8x32xbf16, #tpu.memory_space<vmem>>) attributes {dimension_semantics = [#tpu.dimension_semantics<parallel>], iteration_bounds = array<i64: 2>, scalar_prefetch = 0 : i64, scratch_operands = 0 : i64, tpu.core_type = #tpu.core_type<tc>, window_params = [{transform_indices = @transform_0, window_bounds = array<i64: 1, 38, 32>}, {pipeline_mode = #tpu.pipeline_mode<synchronous>, transform_indices = @transform_1, window_bounds = array<i64: 31, 32>}, {pipeline_mode = #tpu.pipeline_mode<synchronous>, transform_indices = @transform_2, window_bounds = array<i64: 1, 32>}, {pipeline_mode = #tpu.pipeline_mode<synchronous>, transform_indices = @transform_3, window_bounds = array<i64: 1, 32>}, {pipeline_mode = #tpu.pipeline_mode<synchronous>, transform_indices = @transform_4, window_bounds = array<i64: 1, 32>}, {pipeline_mode = #tpu.pipeline_mode<synchronous>, transform_indices = @transform_5, window_bounds = array<i64: 32, 32>}, {pipeline_mode = #tpu.pipeline_mode<synchronous>, transform_indices = @transform_6, window_bounds = array<i64: 1, 32>}, {transform_indices = @transform_7, window_bounds = array<i64: 1, 8, 32>}, {transform_indices = @transform_8, window_bounds = array<i64: 1, 8, 32>}]} {
    %c0 = arith.constant 0 : index
    %c0_0 = arith.constant 0 : index
    %c0_1 = arith.constant 0 : index
    %0 = vector.load %arg1[%c0, %c0_0, %c0_1] : memref<1x38x32xbf16, #tpu.memory_space<vmem>>, vector<1x38x32xbf16>
    %1 = vector.shape_cast %0 : vector<1x38x32xbf16> to vector<38x32xbf16>
    %2 = arith.extf %1 : vector<38x32xbf16> to vector<38x32xf32>
    %c0_2 = arith.constant 0 : index
    %c0_3 = arith.constant 0 : index
    %3 = vector.load %arg2[%c0_2, %c0_3] : memref<31x32xf32, #tpu.memory_space<vmem>>, vector<31x32xf32>
    %c0_4 = arith.constant 0 : index
    %c0_5 = arith.constant 0 : index
    %4 = vector.load %arg3[%c0_4, %c0_5] : memref<1x32xf32, #tpu.memory_space<vmem>>, vector<1x32xf32>
    %5 = vector.shape_cast %4 : vector<1x32xf32> to vector<1x32xf32>
    %6 = vector.broadcast %5 : vector<1x32xf32> to vector<8x32xf32>
    %7 = vector.extract_strided_slice %2 {offsets = [0, 0], sizes = [8, 32], strides = [1, 1]} : vector<38x32xf32> to vector<8x32xf32>
    %8 = vector.extract_strided_slice %3 {offsets = [0, 0], sizes = [1, 32], strides = [1, 1]} : vector<31x32xf32> to vector<1x32xf32>
    %9 = vector.broadcast %8 : vector<1x32xf32> to vector<8x32xf32>
    %10 = arith.mulf %7, %9 : vector<8x32xf32>
    %11 = arith.addf %6, %10 : vector<8x32xf32>
    %12 = vector.extract_strided_slice %2 {offsets = [1, 0], sizes = [8, 32], strides = [1, 1]} : vector<38x32xf32> to vector<8x32xf32>
    %13 = vector.extract_strided_slice %3 {offsets = [1, 0], sizes = [1, 32], strides = [1, 1]} : vector<31x32xf32> to vector<1x32xf32>
    %14 = vector.broadcast %13 : vector<1x32xf32> to vector<8x32xf32>
    %15 = arith.mulf %12, %14 : vector<8x32xf32>
    %16 = arith.addf %11, %15 : vector<8x32xf32>
    %17 = vector.extract_strided_slice %2 {offsets = [2, 0], sizes = [8, 32], strides = [1, 1]} : vector<38x32xf32> to vector<8x32xf32>
    %18 = vector.extract_strided_slice %3 {offsets = [2, 0], sizes = [1, 32], strides = [1, 1]} : vector<31x32xf32> to vector<1x32xf32>
    %19 = vector.broadcast %18 : vector<1x32xf32> to vector<8x32xf32>
    %20 = arith.mulf %17, %19 : vector<8x32xf32>
    %21 = arith.addf %16, %20 : vector<8x32xf32>
    %22 = vector.extract_strided_slice %2 {offsets = [3, 0], sizes = [8, 32], strides = [1, 1]} : vector<38x32xf32> to vector<8x32xf32>
    %23 = vector.extract_strided_slice %3 {offsets = [3, 0], sizes = [1, 32], strides = [1, 1]} : vector<31x32xf32> to vector<1x32xf32>
    %24 = vector.broadcast %23 : vector<1x32xf32> to vector<8x32xf32>
    %25 = arith.mulf %22, %24 : vector<8x32xf32>
    %26 = arith.addf %21, %25 : vector<8x32xf32>
    %27 = vector.extract_strided_slice %2 {offsets = [4, 0], sizes = [8, 32], strides = [1, 1]} : vector<38x32xf32> to vector<8x32xf32>
    %28 = vector.extract_strided_slice %3 {offsets = [4, 0], sizes = [1, 32], strides = [1, 1]} : vector<31x32xf32> to vector<1x32xf32>
    %29 = vector.broadcast %28 : vector<1x32xf32> to vector<8x32xf32>
    %30 = arith.mulf %27, %29 : vector<8x32xf32>
    %31 = arith.addf %26, %30 : vector<8x32xf32>
    %32 = vector.extract_strided_slice %2 {offsets = [5, 0], sizes = [8, 32], strides = [1, 1]} : vector<38x32xf32> to vector<8x32xf32>
    %33 = vector.extract_strided_slice %3 {offsets = [5, 0], sizes = [1, 32], strides = [1, 1]} : vector<31x32xf32> to vector<1x32xf32>
    %34 = vector.broadcast %33 : vector<1x32xf32> to vector<8x32xf32>
    %35 = arith.mulf %32, %34 : vector<8x32xf32>
    %36 = arith.addf %31, %35 : vector<8x32xf32>
    %37 = vector.extract_strided_slice %2 {offsets = [6, 0], sizes = [8, 32], strides = [1, 1]} : vector<38x32xf32> to vector<8x32xf32>
    %38 = vector.extract_strided_slice %3 {offsets = [6, 0], sizes = [1, 32], strides = [1, 1]} : vector<31x32xf32> to vector<1x32xf32>
    %39 = vector.broadcast %38 : vector<1x32xf32> to vector<8x32xf32>
    %40 = arith.mulf %37, %39 : vector<8x32xf32>
    %41 = arith.addf %36, %40 : vector<8x32xf32>
    %42 = vector.extract_strided_slice %2 {offsets = [7, 0], sizes = [8, 32], strides = [1, 1]} : vector<38x32xf32> to vector<8x32xf32>
    %43 = vector.extract_strided_slice %3 {offsets = [7, 0], sizes = [1, 32], strides = [1, 1]} : vector<31x32xf32> to vector<1x32xf32>
    %44 = vector.broadcast %43 : vector<1x32xf32> to vector<8x32xf32>
    %45 = arith.mulf %42, %44 : vector<8x32xf32>
    %46 = arith.addf %41, %45 : vector<8x32xf32>
    %47 = vector.extract_strided_slice %2 {offsets = [8, 0], sizes = [8, 32], strides = [1, 1]} : vector<38x32xf32> to vector<8x32xf32>
    %48 = vector.extract_strided_slice %3 {offsets = [8, 0], sizes = [1, 32], strides = [1, 1]} : vector<31x32xf32> to vector<1x32xf32>
    %49 = vector.broadcast %48 : vector<1x32xf32> to vector<8x32xf32>
    %50 = arith.mulf %47, %49 : vector<8x32xf32>
    %51 = arith.addf %46, %50 : vector<8x32xf32>
    %52 = vector.extract_strided_slice %2 {offsets = [9, 0], sizes = [8, 32], strides = [1, 1]} : vector<38x32xf32> to vector<8x32xf32>
    %53 = vector.extract_strided_slice %3 {offsets = [9, 0], sizes = [1, 32], strides = [1, 1]} : vector<31x32xf32> to vector<1x32xf32>
    %54 = vector.broadcast %53 : vector<1x32xf32> to vector<8x32xf32>
    %55 = arith.mulf %52, %54 : vector<8x32xf32>
    %56 = arith.addf %51, %55 : vector<8x32xf32>
    %57 = vector.extract_strided_slice %2 {offsets = [10, 0], sizes = [8, 32], strides = [1, 1]} : vector<38x32xf32> to vector<8x32xf32>
    %58 = vector.extract_strided_slice %3 {offsets = [10, 0], sizes = [1, 32], strides = [1, 1]} : vector<31x32xf32> to vector<1x32xf32>
    %59 = vector.broadcast %58 : vector<1x32xf32> to vector<8x32xf32>
    %60 = arith.mulf %57, %59 : vector<8x32xf32>
    %61 = arith.addf %56, %60 : vector<8x32xf32>
    %62 = vector.extract_strided_slice %2 {offsets = [11, 0], sizes = [8, 32], strides = [1, 1]} : vector<38x32xf32> to vector<8x32xf32>
    %63 = vector.extract_strided_slice %3 {offsets = [11, 0], sizes = [1, 32], strides = [1, 1]} : vector<31x32xf32> to vector<1x32xf32>
    %64 = vector.broadcast %63 : vector<1x32xf32> to vector<8x32xf32>
    %65 = arith.mulf %62, %64 : vector<8x32xf32>
    %66 = arith.addf %61, %65 : vector<8x32xf32>
    %67 = vector.extract_strided_slice %2 {offsets = [12, 0], sizes = [8, 32], strides = [1, 1]} : vector<38x32xf32> to vector<8x32xf32>
    %68 = vector.extract_strided_slice %3 {offsets = [12, 0], sizes = [1, 32], strides = [1, 1]} : vector<31x32xf32> to vector<1x32xf32>
    %69 = vector.broadcast %68 : vector<1x32xf32> to vector<8x32xf32>
    %70 = arith.mulf %67, %69 : vector<8x32xf32>
    %71 = arith.addf %66, %70 : vector<8x32xf32>
    %72 = vector.extract_strided_slice %2 {offsets = [13, 0], sizes = [8, 32], strides = [1, 1]} : vector<38x32xf32> to vector<8x32xf32>
    %73 = vector.extract_strided_slice %3 {offsets = [13, 0], sizes = [1, 32], strides = [1, 1]} : vector<31x32xf32> to vector<1x32xf32>
    %74 = vector.broadcast %73 : vector<1x32xf32> to vector<8x32xf32>
    %75 = arith.mulf %72, %74 : vector<8x32xf32>
    %76 = arith.addf %71, %75 : vector<8x32xf32>
    %77 = vector.extract_strided_slice %2 {offsets = [14, 0], sizes = [8, 32], strides = [1, 1]} : vector<38x32xf32> to vector<8x32xf32>
    %78 = vector.extract_strided_slice %3 {offsets = [14, 0], sizes = [1, 32], strides = [1, 1]} : vector<31x32xf32> to vector<1x32xf32>
    %79 = vector.broadcast %78 : vector<1x32xf32> to vector<8x32xf32>
    %80 = arith.mulf %77, %79 : vector<8x32xf32>
    %81 = arith.addf %76, %80 : vector<8x32xf32>
    %82 = vector.extract_strided_slice %2 {offsets = [15, 0], sizes = [8, 32], strides = [1, 1]} : vector<38x32xf32> to vector<8x32xf32>
    %83 = vector.extract_strided_slice %3 {offsets = [15, 0], sizes = [1, 32], strides = [1, 1]} : vector<31x32xf32> to vector<1x32xf32>
    %84 = vector.broadcast %83 : vector<1x32xf32> to vector<8x32xf32>
    %85 = arith.mulf %82, %84 : vector<8x32xf32>
    %86 = arith.addf %81, %85 : vector<8x32xf32>
    %87 = vector.extract_strided_slice %2 {offsets = [16, 0], sizes = [8, 32], strides = [1, 1]} : vector<38x32xf32> to vector<8x32xf32>
    %88 = vector.extract_strided_slice %3 {offsets = [16, 0], sizes = [1, 32], strides = [1, 1]} : vector<31x32xf32> to vector<1x32xf32>
    %89 = vector.broadcast %88 : vector<1x32xf32> to vector<8x32xf32>
    %90 = arith.mulf %87, %89 : vector<8x32xf32>
    %91 = arith.addf %86, %90 : vector<8x32xf32>
    %92 = vector.extract_strided_slice %2 {offsets = [17, 0], sizes = [8, 32], strides = [1, 1]} : vector<38x32xf32> to vector<8x32xf32>
    %93 = vector.extract_strided_slice %3 {offsets = [17, 0], sizes = [1, 32], strides = [1, 1]} : vector<31x32xf32> to vector<1x32xf32>
    %94 = vector.broadcast %93 : vector<1x32xf32> to vector<8x32xf32>
    %95 = arith.mulf %92, %94 : vector<8x32xf32>
    %96 = arith.addf %91, %95 : vector<8x32xf32>
    %97 = vector.extract_strided_slice %2 {offsets = [18, 0], sizes = [8, 32], strides = [1, 1]} : vector<38x32xf32> to vector<8x32xf32>
    %98 = vector.extract_strided_slice %3 {offsets = [18, 0], sizes = [1, 32], strides = [1, 1]} : vector<31x32xf32> to vector<1x32xf32>
    %99 = vector.broadcast %98 : vector<1x32xf32> to vector<8x32xf32>
    %100 = arith.mulf %97, %99 : vector<8x32xf32>
    %101 = arith.addf %96, %100 : vector<8x32xf32>
    %102 = vector.extract_strided_slice %2 {offsets = [19, 0], sizes = [8, 32], strides = [1, 1]} : vector<38x32xf32> to vector<8x32xf32>
    %103 = vector.extract_strided_slice %3 {offsets = [19, 0], sizes = [1, 32], strides = [1, 1]} : vector<31x32xf32> to vector<1x32xf32>
    %104 = vector.broadcast %103 : vector<1x32xf32> to vector<8x32xf32>
    %105 = arith.mulf %102, %104 : vector<8x32xf32>
    %106 = arith.addf %101, %105 : vector<8x32xf32>
    %107 = vector.extract_strided_slice %2 {offsets = [20, 0], sizes = [8, 32], strides = [1, 1]} : vector<38x32xf32> to vector<8x32xf32>
    %108 = vector.extract_strided_slice %3 {offsets = [20, 0], sizes = [1, 32], strides = [1, 1]} : vector<31x32xf32> to vector<1x32xf32>
    %109 = vector.broadcast %108 : vector<1x32xf32> to vector<8x32xf32>
    %110 = arith.mulf %107, %109 : vector<8x32xf32>
    %111 = arith.addf %106, %110 : vector<8x32xf32>
    %112 = vector.extract_strided_slice %2 {offsets = [21, 0], sizes = [8, 32], strides = [1, 1]} : vector<38x32xf32> to vector<8x32xf32>
    %113 = vector.extract_strided_slice %3 {offsets = [21, 0], sizes = [1, 32], strides = [1, 1]} : vector<31x32xf32> to vector<1x32xf32>
    %114 = vector.broadcast %113 : vector<1x32xf32> to vector<8x32xf32>
    %115 = arith.mulf %112, %114 : vector<8x32xf32>
    %116 = arith.addf %111, %115 : vector<8x32xf32>
    %117 = vector.extract_strided_slice %2 {offsets = [22, 0], sizes = [8, 32], strides = [1, 1]} : vector<38x32xf32> to vector<8x32xf32>
    %118 = vector.extract_strided_slice %3 {offsets = [22, 0], sizes = [1, 32], strides = [1, 1]} : vector<31x32xf32> to vector<1x32xf32>
    %119 = vector.broadcast %118 : vector<1x32xf32> to vector<8x32xf32>
    %120 = arith.mulf %117, %119 : vector<8x32xf32>
    %121 = arith.addf %116, %120 : vector<8x32xf32>
    %122 = vector.extract_strided_slice %2 {offsets = [23, 0], sizes = [8, 32], strides = [1, 1]} : vector<38x32xf32> to vector<8x32xf32>
    %123 = vector.extract_strided_slice %3 {offsets = [23, 0], sizes = [1, 32], strides = [1, 1]} : vector<31x32xf32> to vector<1x32xf32>
    %124 = vector.broadcast %123 : vector<1x32xf32> to vector<8x32xf32>
    %125 = arith.mulf %122, %124 : vector<8x32xf32>
    %126 = arith.addf %121, %125 : vector<8x32xf32>
    %127 = vector.extract_strided_slice %2 {offsets = [24, 0], sizes = [8, 32], strides = [1, 1]} : vector<38x32xf32> to vector<8x32xf32>
    %128 = vector.extract_strided_slice %3 {offsets = [24, 0], sizes = [1, 32], strides = [1, 1]} : vector<31x32xf32> to vector<1x32xf32>
    %129 = vector.broadcast %128 : vector<1x32xf32> to vector<8x32xf32>
    %130 = arith.mulf %127, %129 : vector<8x32xf32>
    %131 = arith.addf %126, %130 : vector<8x32xf32>
    %132 = vector.extract_strided_slice %2 {offsets = [25, 0], sizes = [8, 32], strides = [1, 1]} : vector<38x32xf32> to vector<8x32xf32>
    %133 = vector.extract_strided_slice %3 {offsets = [25, 0], sizes = [1, 32], strides = [1, 1]} : vector<31x32xf32> to vector<1x32xf32>
    %134 = vector.broadcast %133 : vector<1x32xf32> to vector<8x32xf32>
    %135 = arith.mulf %132, %134 : vector<8x32xf32>
    %136 = arith.addf %131, %135 : vector<8x32xf32>
    %137 = vector.extract_strided_slice %2 {offsets = [26, 0], sizes = [8, 32], strides = [1, 1]} : vector<38x32xf32> to vector<8x32xf32>
    %138 = vector.extract_strided_slice %3 {offsets = [26, 0], sizes = [1, 32], strides = [1, 1]} : vector<31x32xf32> to vector<1x32xf32>
    %139 = vector.broadcast %138 : vector<1x32xf32> to vector<8x32xf32>
    %140 = arith.mulf %137, %139 : vector<8x32xf32>
    %141 = arith.addf %136, %140 : vector<8x32xf32>
    %142 = vector.extract_strided_slice %2 {offsets = [27, 0], sizes = [8, 32], strides = [1, 1]} : vector<38x32xf32> to vector<8x32xf32>
    %143 = vector.extract_strided_slice %3 {offsets = [27, 0], sizes = [1, 32], strides = [1, 1]} : vector<31x32xf32> to vector<1x32xf32>
    %144 = vector.broadcast %143 : vector<1x32xf32> to vector<8x32xf32>
    %145 = arith.mulf %142, %144 : vector<8x32xf32>
    %146 = arith.addf %141, %145 : vector<8x32xf32>
    %147 = vector.extract_strided_slice %2 {offsets = [28, 0], sizes = [8, 32], strides = [1, 1]} : vector<38x32xf32> to vector<8x32xf32>
    %148 = vector.extract_strided_slice %3 {offsets = [28, 0], sizes = [1, 32], strides = [1, 1]} : vector<31x32xf32> to vector<1x32xf32>
    %149 = vector.broadcast %148 : vector<1x32xf32> to vector<8x32xf32>
    %150 = arith.mulf %147, %149 : vector<8x32xf32>
    %151 = arith.addf %146, %150 : vector<8x32xf32>
    %152 = vector.extract_strided_slice %2 {offsets = [29, 0], sizes = [8, 32], strides = [1, 1]} : vector<38x32xf32> to vector<8x32xf32>
    %153 = vector.extract_strided_slice %3 {offsets = [29, 0], sizes = [1, 32], strides = [1, 1]} : vector<31x32xf32> to vector<1x32xf32>
    %154 = vector.broadcast %153 : vector<1x32xf32> to vector<8x32xf32>
    %155 = arith.mulf %152, %154 : vector<8x32xf32>
    %156 = arith.addf %151, %155 : vector<8x32xf32>
    %157 = vector.extract_strided_slice %2 {offsets = [30, 0], sizes = [8, 32], strides = [1, 1]} : vector<38x32xf32> to vector<8x32xf32>
    %158 = vector.extract_strided_slice %3 {offsets = [30, 0], sizes = [1, 32], strides = [1, 1]} : vector<31x32xf32> to vector<1x32xf32>
    %159 = vector.broadcast %158 : vector<1x32xf32> to vector<8x32xf32>
    %160 = arith.mulf %157, %159 : vector<8x32xf32>
    %161 = arith.addf %156, %160 : vector<8x32xf32>
    %c0_6 = arith.constant 0 : index
    %c0_7 = arith.constant 0 : index
    %162 = vector.load %arg4[%c0_6, %c0_7] : memref<1x32xf32, #tpu.memory_space<vmem>>, vector<1x32xf32>
    %163 = vector.broadcast %162 : vector<1x32xf32> to vector<8x32xf32>
    %164 = arith.mulf %161, %163 : vector<8x32xf32>
    %c0_8 = arith.constant 0 : index
    %c0_9 = arith.constant 0 : index
    %165 = vector.load %arg5[%c0_8, %c0_9] : memref<1x32xf32, #tpu.memory_space<vmem>>, vector<1x32xf32>
    %166 = vector.broadcast %165 : vector<1x32xf32> to vector<8x32xf32>
    %167 = arith.addf %164, %166 : vector<8x32xf32>
    %168 = arith.negf %167 : vector<8x32xf32>
    %169 = math.exp %168 : vector<8x32xf32>
    %cst = arith.constant 1.000000e+00 : f32
    %170 = vector.broadcast %cst : f32 to vector<8x32xf32>
    %171 = arith.addf %170, %169 : vector<8x32xf32>
    %172 = arith.divf %170, %171 : vector<8x32xf32>
    %173 = arith.mulf %167, %172 : vector<8x32xf32>
    %174 = arith.truncf %173 : vector<8x32xf32> to vector<8x32xbf16>
    %c0_10 = arith.constant 0 : index
    %c0_11 = arith.constant 0 : index
    %175 = vector.load %arg6[%c0_10, %c0_11] : memref<32x32xbf16, #tpu.memory_space<vmem>>, vector<32x32xbf16>
    %cst_12 = arith.constant dense<0.000000e+00> : vector<8x32xf32>
    %176 = tpu.matmul %174, %175, %cst_12 {dimension_numbers = #tpu.dot_dimension_numbers<[1], [0], [0], [1], [0, 0, 1, 1], [], []>} : vector<8x32xbf16>, vector<32x32xbf16>, vector<8x32xf32> -> vector<8x32xf32>
    %c0_13 = arith.constant 0 : index
    %c0_14 = arith.constant 0 : index
    %177 = vector.load %arg7[%c0_13, %c0_14] : memref<1x32xf32, #tpu.memory_space<vmem>>, vector<1x32xf32>
    %178 = vector.broadcast %177 : vector<1x32xf32> to vector<8x32xf32>
    %179 = arith.addf %176, %178 : vector<8x32xf32>
    %c0_15 = arith.constant 0 : index
    %c0_16 = arith.constant 0 : index
    %c0_17 = arith.constant 0 : index
    %180 = vector.load %arg8[%c0_15, %c0_16, %c0_17] : memref<1x8x32xbf16, #tpu.memory_space<vmem>>, vector<1x8x32xbf16>
    %181 = vector.shape_cast %180 : vector<1x8x32xbf16> to vector<8x32xbf16>
    %182 = arith.extf %181 : vector<8x32xbf16> to vector<8x32xf32>
    %183 = arith.addf %182, %179 : vector<8x32xf32>
    %184 = arith.truncf %183 : vector<8x32xf32> to vector<8x32xbf16>
    %c0_18 = arith.constant 0 : index
    %c0_19 = arith.constant 0 : index
    %c0_20 = arith.constant 0 : index
    %185 = vector.load %arg9[%c0_18, %c0_19, %c0_20] : memref<1x8x32xbf16, #tpu.memory_space<vmem>>, vector<1x8x32xbf16>
    %186 = vector.shape_cast %185 : vector<1x8x32xbf16> to vector<8x32xbf16>
    %187 = vector.shape_cast %184 : vector<8x32xbf16> to vector<1x8x32xbf16>
    tpu.vector_store %arg9[%c0_18, %c0_19, %c0_20], %187 {strides = array<i32>} : memref<1x8x32xbf16, #tpu.memory_space<vmem>>, vector<1x8x32xbf16>,
    return
  }
  func.func @transform_0(%arg0: i32) -> (i32, i32, i32) {
    %c0_i32 = arith.constant 0 : i32
    %c0_i32_0 = arith.constant 0 : i32
    %c0_i32_1 = arith.constant 0 : i32
    return %arg0, %c0_i32, %c0_i32_0 : i32, i32, i32
  }
  func.func @transform_1(%arg0: i32) -> (i32, i32) {
    %c0_i32 = arith.constant 0 : i32
    %c0_i32_0 = arith.constant 0 : i32
    %c0_i32_1 = arith.constant 0 : i32
    return %c0_i32, %c0_i32_0 : i32, i32
  }
  func.func @transform_2(%arg0: i32) -> (i32, i32) {
    %c0_i32 = arith.constant 0 : i32
    %c0_i32_0 = arith.constant 0 : i32
    %c0_i32_1 = arith.constant 0 : i32
    return %c0_i32, %c0_i32_0 : i32, i32
  }
  func.func @transform_3(%arg0: i32) -> (i32, i32) {
    %c0_i32 = arith.constant 0 : i32
    %c0_i32_0 = arith.constant 0 : i32
    %c0_i32_1 = arith.constant 0 : i32
    return %c0_i32, %c0_i32_0 : i32, i32
  }
  func.func @transform_4(%arg0: i32) -> (i32, i32) {
    %c0_i32 = arith.constant 0 : i32
    %c0_i32_0 = arith.constant 0 : i32
    %c0_i32_1 = arith.constant 0 : i32
    return %c0_i32, %c0_i32_0 : i32, i32
  }
  func.func @transform_5(%arg0: i32) -> (i32, i32) {
    %c0_i32 = arith.constant 0 : i32
    %c0_i32_0 = arith.constant 0 : i32
    %c0_i32_1 = arith.constant 0 : i32
    return %c0_i32, %c0_i32_0 : i32, i32
  }
  func.func @transform_6(%arg0: i32) -> (i32, i32) {
    %c0_i32 = arith.constant 0 : i32
    %c0_i32_0 = arith.constant 0 : i32
    %c0_i32_1 = arith.constant 0 : i32
    return %c0_i32, %c0_i32_0 : i32, i32
  }
  func.func @transform_7(%arg0: i32) -> (i32, i32, i32) {
    %c0_i32 = arith.constant 0 : i32
    %c0_i32_0 = arith.constant 0 : i32
    %c0_i32_1 = arith.constant 0 : i32
    return %arg0, %c0_i32, %c0_i32_0 : i32, i32, i32
  }
  func.func @transform_8(%arg0: i32) -> (i32, i32, i32) {
    %c0_i32 = arith.constant 0 : i32
    %c0_i32_0 = arith.constant 0 : i32
    %c0_i32_1 = arith.constant 0 : i32
    return %arg0, %c0_i32, %c0_i32_0 : i32, i32, i32
  }
}

module attributes {stable_mosaic.version = 11 : i64} {
  func.func @_mm_res_ln_kernel(%arg0: i32, %arg1: memref<16x128xbf16, #tpu.memory_space<vmem>>, %arg2: memref<128x32xbf16, #tpu.memory_space<vmem>>, %arg3: memref<1x32xf32, #tpu.memory_space<vmem>>, %arg4: memref<16x32xbf16, #tpu.memory_space<vmem>>, %arg5: memref<1x32xf32, #tpu.memory_space<vmem>>, %arg6: memref<1x32xf32, #tpu.memory_space<vmem>>, %arg7: memref<16x32xbf16, #tpu.memory_space<vmem>>) attributes {dimension_semantics = [#tpu.dimension_semantics<parallel>], iteration_bounds = array<i64: 1>, scalar_prefetch = 0 : i64, scratch_operands = 0 : i64, tpu.core_type = #tpu.core_type<tc>, window_params = [{transform_indices = @transform_0, window_bounds = array<i64: 16, 128>}, {pipeline_mode = #tpu.pipeline_mode<synchronous>, transform_indices = @transform_1, window_bounds = array<i64: 128, 32>}, {pipeline_mode = #tpu.pipeline_mode<synchronous>, transform_indices = @transform_2, window_bounds = array<i64: 1, 32>}, {transform_indices = @transform_3, window_bounds = array<i64: 16, 32>}, {pipeline_mode = #tpu.pipeline_mode<synchronous>, transform_indices = @transform_4, window_bounds = array<i64: 1, 32>}, {pipeline_mode = #tpu.pipeline_mode<synchronous>, transform_indices = @transform_5, window_bounds = array<i64: 1, 32>}, {transform_indices = @transform_6, window_bounds = array<i64: 16, 32>}]} {
    %c0 = arith.constant 0 : index
    %c0_0 = arith.constant 0 : index
    %0 = vector.load %arg4[%c0, %c0_0] : memref<16x32xbf16, #tpu.memory_space<vmem>>, vector<16x32xbf16>
    %1 = arith.extf %0 : vector<16x32xbf16> to vector<16x32xf32>
    %c0_1 = arith.constant 0 : index
    %c0_2 = arith.constant 0 : index
    %2 = vector.load %arg1[%c0_1, %c0_2] : memref<16x128xbf16, #tpu.memory_space<vmem>>, vector<16x128xbf16>
    %c0_3 = arith.constant 0 : index
    %c0_4 = arith.constant 0 : index
    %3 = vector.load %arg2[%c0_3, %c0_4] : memref<128x32xbf16, #tpu.memory_space<vmem>>, vector<128x32xbf16>
    %cst = arith.constant dense<0.000000e+00> : vector<16x32xf32>
    %4 = tpu.matmul %2, %3, %cst {dimension_numbers = #tpu.dot_dimension_numbers<[1], [0], [0], [1], [0, 0, 1, 1], [], []>} : vector<16x128xbf16>, vector<128x32xbf16>, vector<16x32xf32> -> vector<16x32xf32>
    %c0_5 = arith.constant 0 : index
    %c0_6 = arith.constant 0 : index
    %5 = vector.load %arg3[%c0_5, %c0_6] : memref<1x32xf32, #tpu.memory_space<vmem>>, vector<1x32xf32>
    %6 = vector.broadcast %5 : vector<1x32xf32> to vector<16x32xf32>
    %7 = arith.addf %4, %6 : vector<16x32xf32>
    %cst_7 = arith.constant 5.000000e-01 : f32
    %8 = vector.broadcast %cst_7 : f32 to vector<16x32xf32>
    %9 = arith.mulf %8, %7 : vector<16x32xf32>
    %10 = arith.addf %1, %9 : vector<16x32xf32>
    %c0_8 = arith.constant 0 : index
    %c0_9 = arith.constant 0 : index
    %11 = vector.load %arg5[%c0_8, %c0_9] : memref<1x32xf32, #tpu.memory_space<vmem>>, vector<1x32xf32>
    %c0_10 = arith.constant 0 : index
    %c0_11 = arith.constant 0 : index
    %12 = vector.load %arg6[%c0_10, %c0_11] : memref<1x32xf32, #tpu.memory_space<vmem>>, vector<1x32xf32>
    %cst_12 = arith.constant dense<0.000000e+00> : vector<16xf32>
    %13 = vector.multi_reduction <add>, %10, %cst_12 [1] : vector<16x32xf32> to vector<16xf32>
    %14 = vector.shape_cast %13 : vector<16xf32> to vector<16x1xf32>
    %cst_13 = arith.constant 3.200000e+01 : f32
    %15 = vector.broadcast %cst_13 : f32 to vector<16x1xf32>
    %16 = arith.divf %14, %15 : vector<16x1xf32>
    %17 = vector.broadcast %16 : vector<16x1xf32> to vector<16x32xf32>
    %18 = arith.subf %10, %17 : vector<16x32xf32>
    %19 = arith.mulf %18, %18 : vector<16x32xf32>
    %cst_14 = arith.constant dense<0.000000e+00> : vector<16xf32>
    %20 = vector.multi_reduction <add>, %19, %cst_14 [1] : vector<16x32xf32> to vector<16xf32>
    %21 = vector.shape_cast %20 : vector<16xf32> to vector<16x1xf32>
    %cst_15 = arith.constant 3.200000e+01 : f32
    %22 = vector.broadcast %cst_15 : f32 to vector<16x1xf32>
    %23 = arith.divf %21, %22 : vector<16x1xf32>
    %24 = vector.broadcast %16 : vector<16x1xf32> to vector<16x32xf32>
    %25 = arith.subf %10, %24 : vector<16x32xf32>
    %cst_16 = arith.constant 9.99999974E-6 : f32
    %26 = vector.broadcast %cst_16 : f32 to vector<16x1xf32>
    %27 = arith.addf %23, %26 : vector<16x1xf32>
    %28 = math.rsqrt %27 : vector<16x1xf32>
    %29 = vector.broadcast %28 : vector<16x1xf32> to vector<16x32xf32>
    %30 = arith.mulf %25, %29 : vector<16x32xf32>
    %31 = vector.broadcast %11 : vector<1x32xf32> to vector<16x32xf32>
    %32 = arith.mulf %30, %31 : vector<16x32xf32>
    %33 = vector.broadcast %12 : vector<1x32xf32> to vector<16x32xf32>
    %34 = arith.addf %32, %33 : vector<16x32xf32>
    %35 = arith.truncf %34 : vector<16x32xf32> to vector<16x32xbf16>
    %c0_17 = arith.constant 0 : index
    %c0_18 = arith.constant 0 : index
    %36 = vector.load %arg7[%c0_17, %c0_18] : memref<16x32xbf16, #tpu.memory_space<vmem>>, vector<16x32xbf16>
    tpu.vector_store %arg7[%c0_17, %c0_18], %35 {strides = array<i32>} : memref<16x32xbf16, #tpu.memory_space<vmem>>, vector<16x32xbf16>,
    return
  }
  func.func @transform_0(%arg0: i32) -> (i32, i32) {
    %c0_i32 = arith.constant 0 : i32
    %c0_i32_0 = arith.constant 0 : i32
    return %arg0, %c0_i32 : i32, i32
  }
  func.func @transform_1(%arg0: i32) -> (i32, i32) {
    %c0_i32 = arith.constant 0 : i32
    %c0_i32_0 = arith.constant 0 : i32
    %c0_i32_1 = arith.constant 0 : i32
    return %c0_i32, %c0_i32_0 : i32, i32
  }
  func.func @transform_2(%arg0: i32) -> (i32, i32) {
    %c0_i32 = arith.constant 0 : i32
    %c0_i32_0 = arith.constant 0 : i32
    %c0_i32_1 = arith.constant 0 : i32
    return %c0_i32, %c0_i32_0 : i32, i32
  }
  func.func @transform_3(%arg0: i32) -> (i32, i32) {
    %c0_i32 = arith.constant 0 : i32
    %c0_i32_0 = arith.constant 0 : i32
    return %arg0, %c0_i32 : i32, i32
  }
  func.func @transform_4(%arg0: i32) -> (i32, i32) {
    %c0_i32 = arith.constant 0 : i32
    %c0_i32_0 = arith.constant 0 : i32
    %c0_i32_1 = arith.constant 0 : i32
    return %c0_i32, %c0_i32_0 : i32, i32
  }
  func.func @transform_5(%arg0: i32) -> (i32, i32) {
    %c0_i32 = arith.constant 0 : i32
    %c0_i32_0 = arith.constant 0 : i32
    %c0_i32_1 = arith.constant 0 : i32
    return %c0_i32, %c0_i32_0 : i32, i32
  }
  func.func @transform_6(%arg0: i32) -> (i32, i32) {
    %c0_i32 = arith.constant 0 : i32
    %c0_i32_0 = arith.constant 0 : i32
    return %arg0, %c0_i32 : i32, i32
  }
}

</mosaic_0001>

<llo_original>
// kernel: acoustic_encoder_forward.19
$region0: #{acoustic_encoder_forward.19}
  #allocation0 [shape = 'u32[]', space=smem, size = 0x4, offset = 0x4, fixed_abs, tag = 'smem constant byte address 0x4 - core index']
  #allocation1 [shape = 'u32[144,128]{1,0:T(1,128)}', space=vmem, size = 0x12000, scoped, tag = 'internal scratch']
  %s0 = inlined_call_operand.vmem [shape: bf16[16,256], index: 0, kind: input, shape index: {}]
  %s1 = inlined_call_operand.vmem [shape: bf16[256,32], index: 1, kind: input, shape index: {}]
  %s2 = inlined_call_operand.vmem [shape: f32[1,32], index: 2, kind: input, shape index: {}]
  %s3 = inlined_call_operand.vmem [shape: bf16[16,32], index: 3, kind: output, shape index: {}]
  %s4 = sld [smem:[#allocation0]]
  $region22: #{acoustic_encoder_forward.19} parent=0
    _
  %s6 = ssub.s32 1, %s4
  %s7 = scalar_select 0, %s6, %s4
  // Predicated region
  $region2: #{acoustic_encoder_forward.19} parent=0 // pred_check
    _
  $region3: #{acoustic_encoder_forward.19} parent=0 // pred_check_branch
    %9 = sbr.rel (0) target = $region5
  $region4: #{acoustic_encoder_forward.19} parent=0 // pred_region
    _
  $region5: #{acoustic_encoder_forward.19} parent=0 // pred_fallthru
    _
  // Predicated region
  $region6: #{acoustic_encoder_forward.19} parent=0 // pred_check
    _
  $region7: #{acoustic_encoder_forward.19} parent=0 // pred_check_branch
    %11 = sbr.rel (0) target = $region9
  $region8: #{acoustic_encoder_forward.19} parent=0 // pred_region
    _
  $region9: #{acoustic_encoder_forward.19} parent=0 // pred_fallthru
    _
  // Predicated region
  $region10: #{acoustic_encoder_forward.19} parent=0 // pred_check
    _
  $region11: #{acoustic_encoder_forward.19} parent=0 // pred_check_branch
    %13 = sbr.rel (0) target = $region13
  $region12: #{acoustic_encoder_forward.19} parent=0 // pred_region
    _
  $region13: #{acoustic_encoder_forward.19} parent=0 // pred_fallthru
    _
  %v15 = vld [vmem:[%s0] sm:$0xff]
  %v16 = vld [vmem:[%s0 + $0x8] sm:$0xff]
  %v17 = vld [vmem:[%s1] sm:$0xf]
  %v18 = vld [vmem:[%s1 + $0x4] sm:$0xf]
  %v19 = vld [vmem:[%s1 + $0x8] sm:$0xf]
  %v20 = vld [vmem:[%s1 + $0xc] sm:$0xf]
  %v21 = vld [vmem:[%s1 + $0x10] sm:$0xf]
  %v22 = vld [vmem:[%s1 + $0x14] sm:$0xf]
  %v23 = vld [vmem:[%s1 + $0x18] sm:$0xf]
  %v24 = vld [vmem:[%s1 + $0x1c] sm:$0xf]
  %v25 = vld [vmem:[%s1 + $0x20] sm:$0xf]
  %v26 = vld [vmem:[%s1 + $0x24] sm:$0xf]
  %v27 = vld [vmem:[%s1 + $0x28] sm:$0xf]
  %v28 = vld [vmem:[%s1 + $0x2c] sm:$0xf]
  %v29 = vld [vmem:[%s1 + $0x30] sm:$0xf]
  %v30 = vld [vmem:[%s1 + $0x34] sm:$0xf]
  %v31 = vld [vmem:[%s1 + $0x38] sm:$0xf]
  %v32 = vld [vmem:[%s1 + $0x3c] sm:$0xf]
  %v33 = vld [vmem:[%s1 + $0x40] sm:$0xf]
  %v34 = vld [vmem:[%s1 + $0x44] sm:$0xf]
  %v35 = vld [vmem:[%s1 + $0x48] sm:$0xf]
  %v36 = vld [vmem:[%s1 + $0x4c] sm:$0xf]
  %v37 = vld [vmem:[%s1 + $0x50] sm:$0xf]
  %v38 = vld [vmem:[%s1 + $0x54] sm:$0xf]
  %v39 = vld [vmem:[%s1 + $0x58] sm:$0xf]
  %v40 = vld [vmem:[%s1 + $0x5c] sm:$0xf]
  %v41 = vld [vmem:[%s1 + $0x60] sm:$0xf]
  %v42 = vld [vmem:[%s1 + $0x64] sm:$0xf]
  %v43 = vld [vmem:[%s1 + $0x68] sm:$0xf]
  %v44 = vld [vmem:[%s1 + $0x6c] sm:$0xf]
  %v45 = vld [vmem:[%s1 + $0x70] sm:$0xf]
  %v46 = vld [vmem:[%s1 + $0x74] sm:$0xf]
  %v47 = vld [vmem:[%s1 + $0x78] sm:$0xf]
  %v48 = vld [vmem:[%s1 + $0x7c] sm:$0xf]
  %v49 = vld [vmem:[%s2] sm:$0x1]
  %v51 = vlaneseq
  %v52 = vshrl.u32 %v51, 7
  %v53 = vsub.s32 0, %v52
  %v54 = vrot.slane %v49, %v53
  %v58 = vunpack.c.l.b16 %v15
  %v59 = vunpack.c.h.b16 %v15
  %v60 = vunpack.c.l.b16 %v16
  %v61 = vunpack.c.h.b16 %v16
  %v62 = vpack.c.b16 %v60, %v58
  %v63 = vpack.c.b16 %v61, %v59
  %v98 = vunpack.c.l.b16 %v17
  %v99 = vunpack.c.l.b16 %v18
  %v100 = vunpack.c.l.b16 %v19
  %v101 = vunpack.c.l.b16 %v20
  %v102 = vunpack.c.l.b16 %v21
  %v103 = vunpack.c.l.b16 %v22
  %v104 = vunpack.c.l.b16 %v23
  %v105 = vunpack.c.l.b16 %v24
  %v106 = vunpack.c.l.b16 %v25
  %v107 = vunpack.c.l.b16 %v26
  %v108 = vunpack.c.l.b16 %v27
  %v109 = vunpack.c.l.b16 %v28
  %v110 = vunpack.c.l.b16 %v29
  %v111 = vunpack.c.l.b16 %v30
  %v112 = vunpack.c.l.b16 %v31
  %v113 = vunpack.c.l.b16 %v32
  %v114 = vunpack.c.l.b16 %v33
  %v115 = vunpack.c.l.b16 %v34
  %v116 = vunpack.c.l.b16 %v35
  %v117 = vunpack.c.l.b16 %v36
  %v118 = vunpack.c.l.b16 %v37
  %v119 = vunpack.c.l.b16 %v38
  %v120 = vunpack.c.l.b16 %v39
  %v121 = vunpack.c.l.b16 %v40
  %v122 = vunpack.c.l.b16 %v41
  %v123 = vunpack.c.l.b16 %v42
  %v124 = vunpack.c.l.b16 %v43
  %v125 = vunpack.c.l.b16 %v44
  %v126 = vunpack.c.l.b16 %v45
  %v127 = vunpack.c.l.b16 %v46
  %v128 = vunpack.c.l.b16 %v47
  %v129 = vunpack.c.l.b16 %v48
  %v130 = vpack.c.b16 %v99, %v98
  %v131 = vpack.c.b16 %v101, %v100
  %v132 = vpack.c.b16 %v103, %v102
  %v133 = vpack.c.b16 %v105, %v104
  %v134 = vpack.c.b16 %v107, %v106
  %v135 = vpack.c.b16 %v109, %v108
  %v136 = vpack.c.b16 %v111, %v110
  %v137 = vpack.c.b16 %v113, %v112
  %v138 = vpack.c.b16 %v115, %v114
  %v139 = vpack.c.b16 %v117, %v116
  %v140 = vpack.c.b16 %v119, %v118
  %v141 = vpack.c.b16 %v121, %v120
  %v142 = vpack.c.b16 %v123, %v122
  %v143 = vpack.c.b16 %v125, %v124
  %v144 = vpack.c.b16 %v127, %v126
  %v145 = vpack.c.b16 %v129, %v128
  %162 = vmatprep.subr.bf16.mxu0 0
  %163 = vmatpush1.bf16.msra.mxu0 %v137
  %164 = vmatprep.subr.bf16.mxu0 0
  %165 = vmatpush1.bf16.msra.mxu0 %v136
  %166 = vmatprep.subr.bf16.mxu0 0
  %167 = vmatpush1.bf16.msra.mxu0 %v135
  %168 = vmatprep.subr.bf16.mxu0 0
  %169 = vmatpush1.bf16.msra.mxu0 %v134
  %170 = vmatprep.subr.bf16.mxu0 0
  %171 = vmatpush1.bf16.msra.mxu0 %v133
  %172 = vmatprep.subr.bf16.mxu0 0
  %173 = vmatpush1.bf16.msra.mxu0 %v132
  %174 = vmatprep.subr.bf16.mxu0 0
  %175 = vmatpush1.bf16.msra.mxu0 %v131
  %176 = vmatprep.subr.bf16.mxu0 0
  %177 = vmatpush1.bf16.msra.mxu0 %v130
  %178 = vmatprep.subr.bf16.mxu0 0
  %179 = vmatpush2.bf16.msra.mxu0 %v145
  %180 = vmatprep.subr.bf16.mxu0 0
  %181 = vmatpush2.bf16.msra.mxu0 %v144
  %182 = vmatprep.subr.bf16.mxu0 0
  %183 = vmatpush2.bf16.msra.mxu0 %v143
  %184 = vmatprep.subr.bf16.mxu0 0
  %185 = vmatpush2.bf16.msra.mxu0 %v142
  %186 = vmatprep.subr.bf16.mxu0 0
  %187 = vmatpush2.bf16.msra.mxu0 %v141
  %188 = vmatprep.subr.bf16.mxu0 0
  %189 = vmatpush2.bf16.msra.mxu0 %v140
  %190 = vmatprep.subr.bf16.mxu0 0
  %191 = vmatpush2.bf16.msra.mxu0 %v139
  %192 = vmatprep.subr.bf16.mxu0 0
  %193 = vmatpush2.bf16.msra.mxu0 %v138
  %194 = vmatprep.mubr.bf16.mxu0 %v63
  %195 = vmatmul.mubr.bf16.gmra.mxu0 %v62
  %v196 = vpop.f32.mrf.mxu0
  %v197 = vadd.f32 %v54, %v196
  %v198 = vpop.f32.mrf.mxu0
  %v199 = vpop.f32.mrf.mxu0
  %v200 = vadd.f32 %v54, %v199
  %v201 = vpop.f32.mrf.mxu0
  %202 = vdwg.mxu0
  %v203 = vpack.c.bf16 %v200, %v197
  %v205 = vunpack.c.l.b16 %v203
  %v206 = vunpack.c.h.b16 %v203
  %v207 = vpack.c.b16 %v205, %v205
  %v208 = vpack.c.b16 %v206, %v206
  %vm211 = vcmask 257024
  %212 = vst.msk [vmem:[%s3] sm:$0xf] %vm211, %v207
  %213 = vst.msk [vmem:[%s3 + $0x4] sm:$0xf] %vm211, %v208
  // Predicated region
  $region14: #{acoustic_encoder_forward.19} parent=0 // pred_check
    _
  $region15: #{acoustic_encoder_forward.19} parent=0 // pred_check_branch
    %215 = sbr.rel (0) target = $region17
  $region16: #{acoustic_encoder_forward.19} parent=0 // pred_region
    _
  $region17: #{acoustic_encoder_forward.19} parent=0 // pred_fallthru
    _
  // Predicated region
  $region18: #{acoustic_encoder_forward.19} parent=0 // pred_check
    _
  $region19: #{acoustic_encoder_forward.19} parent=0 // pred_check_branch
    %217 = sbr.rel (0) target = $region21
  $region20: #{acoustic_encoder_forward.19} parent=0 // pred_region
    _
  $region21: #{acoustic_encoder_forward.19} parent=0 // pred_fallthru
    _

// kernel: acoustic_encoder_forward.18
$region0: #{acoustic_encoder_forward.18}
  #allocation0 [shape = 'u32[]', space=smem, size = 0x4, offset = 0x4, fixed_abs, tag = 'smem constant byte address 0x4 - core index']
  #allocation1 [shape = 'u32[144,128]{1,0:T(1,128)}', space=vmem, size = 0x12000, scoped, tag = 'internal scratch']
  %s0 = inlined_call_operand.vmem [shape: bf16[128,32], index: 0, kind: input, shape index: {}]
  %s1 = inlined_call_operand.vmem [shape: bf16[32,32], index: 1, kind: input, shape index: {}]
  %s2 = inlined_call_operand.vmem [shape: f32[1,32], index: 2, kind: input, shape index: {}]
  %s3 = inlined_call_operand.vmem [shape: bf16[128,32], index: 3, kind: output, shape index: {}]
  %s4 = sld [smem:[#allocation0]]
  $region22: #{acoustic_encoder_forward.18} parent=0
    _
  %s6 = ssub.s32 1, %s4
  %s7 = scalar_select 0, %s6, %s4
  // Predicated region
  $region2: #{acoustic_encoder_forward.18} parent=0 // pred_check
    _
  $region3: #{acoustic_encoder_forward.18} parent=0 // pred_check_branch
    %9 = sbr.rel (0) target = $region5
  $region4: #{acoustic_encoder_forward.18} parent=0 // pred_region
    _
  $region5: #{acoustic_encoder_forward.18} parent=0 // pred_fallthru
    _
  // Predicated region
  $region6: #{acoustic_encoder_forward.18} parent=0 // pred_check
    _
  $region7: #{acoustic_encoder_forward.18} parent=0 // pred_check_branch
    %11 = sbr.rel (0) target = $region9
  $region8: #{acoustic_encoder_forward.18} parent=0 // pred_region
    _
  $region9: #{acoustic_encoder_forward.18} parent=0 // pred_fallthru
    _
  // Predicated region
  $region10: #{acoustic_encoder_forward.18} parent=0 // pred_check
    _
  $region11: #{acoustic_encoder_forward.18} parent=0 // pred_check_branch
    %13 = sbr.rel (0) target = $region13
  $region12: #{acoustic_encoder_forward.18} parent=0 // pred_region
    _
  $region13: #{acoustic_encoder_forward.18} parent=0 // pred_fallthru
    _
  %v15 = vld [vmem:[%s0] sm:$0xf]
  %v16 = vld [vmem:[%s0 + $0x4] sm:$0xf]
  %v17 = vld [vmem:[%s0 + $0x8] sm:$0xf]
  %v18 = vld [vmem:[%s0 + $0xc] sm:$0xf]
  %v19 = vld [vmem:[%s0 + $0x10] sm:$0xf]
  %v20 = vld [vmem:[%s0 + $0x14] sm:$0xf]
  %v21 = vld [vmem:[%s0 + $0x18] sm:$0xf]
  %v22 = vld [vmem:[%s0 + $0x1c] sm:$0xf]
  %v23 = vld [vmem:[%s0 + $0x20] sm:$0xf]
  %v24 = vld [vmem:[%s0 + $0x24] sm:$0xf]
  %v25 = vld [vmem:[%s0 + $0x28] sm:$0xf]
  %v26 = vld [vmem:[%s0 + $0x2c] sm:$0xf]
  %v27 = vld [vmem:[%s0 + $0x30] sm:$0xf]
  %v28 = vld [vmem:[%s0 + $0x34] sm:$0xf]
  %v29 = vld [vmem:[%s0 + $0x38] sm:$0xf]
  %v30 = vld [vmem:[%s0 + $0x3c] sm:$0xf]
  %v31 = vld [vmem:[%s1] sm:$0xf]
  %v32 = vld [vmem:[%s1 + $0x4] sm:$0xf]
  %v33 = vld [vmem:[%s1 + $0x8] sm:$0xf]
  %v34 = vld [vmem:[%s1 + $0xc] sm:$0xf]
  %v35 = vld [vmem:[%s2] sm:$0x1]
  %v37 = vlaneseq
  %v38 = vshrl.u32 %v37, 7
  %v39 = vsub.s32 0, %v38
  %v40 = vrot.slane %v35, %v39
  %v58 = vunpack.c.l.b16 %v15
  %v59 = vunpack.c.l.b16 %v16
  %v60 = vunpack.c.l.b16 %v17
  %v61 = vunpack.c.l.b16 %v18
  %v62 = vunpack.c.l.b16 %v19
  %v63 = vunpack.c.l.b16 %v20
  %v64 = vunpack.c.l.b16 %v21
  %v65 = vunpack.c.l.b16 %v22
  %v66 = vunpack.c.l.b16 %v23
  %v67 = vunpack.c.l.b16 %v24
  %v68 = vunpack.c.l.b16 %v25
  %v69 = vunpack.c.l.b16 %v26
  %v70 = vunpack.c.l.b16 %v27
  %v71 = vunpack.c.l.b16 %v28
  %v72 = vunpack.c.l.b16 %v29
  %v73 = vunpack.c.l.b16 %v30
  %v74 = vpack.c.b16 %v59, %v58
  %v75 = vpack.c.b16 %v61, %v60
  %v76 = vpack.c.b16 %v63, %v62
  %v77 = vpack.c.b16 %v65, %v64
  %v78 = vpack.c.b16 %v67, %v66
  %v79 = vpack.c.b16 %v69, %v68
  %v80 = vpack.c.b16 %v71, %v70
  %v81 = vpack.c.b16 %v73, %v72
  %v86 = vunpack.c.l.b16 %v31
  %v87 = vunpack.c.l.b16 %v32
  %v88 = vunpack.c.l.b16 %v33
  %v89 = vunpack.c.l.b16 %v34
  %v90 = vpack.c.b16 %v87, %v86
  %v91 = vpack.c.b16 %v89, %v88
  %vm94 = vcmask 261120
  %v96 = vsel %vm94, %v74, 0
  %v99 = vsel %vm94, %v75, 0
  %v102 = vsel %vm94, %v76, 0
  %v105 = vsel %vm94, %v77, 0
  %v108 = vsel %vm94, %v78, 0
  %v111 = vsel %vm94, %v79, 0
  %v114 = vsel %vm94, %v80, 0
  %v117 = vsel %vm94, %v81, 0
  %119 = vmatprep.subr.bf16.mxu0 0
  %120 = vmatpush1.bf16.msra.mxu0 0
  %121 = vmatprep.subr.bf16.mxu0 0
  %122 = vmatpush1.bf16.msra.mxu0 0
  %123 = vmatprep.subr.bf16.mxu0 0
  %124 = vmatpush1.bf16.msra.mxu0 0
  %125 = vmatprep.subr.bf16.mxu0 0
  %126 = vmatpush1.bf16.msra.mxu0 0
  %127 = vmatprep.subr.bf16.mxu0 0
  %128 = vmatpush1.bf16.msra.mxu0 0
  %129 = vmatprep.subr.bf16.mxu0 0
  %130 = vmatpush1.bf16.msra.mxu0 0
  %131 = vmatprep.subr.bf16.mxu0 0
  %132 = vmatpush1.bf16.msra.mxu0 %v91
  %133 = vmatprep.subr.bf16.mxu0 0
  %134 = vmatpush1.bf16.msra.mxu0 %v90
  %135 = vmatprep.subr.bf16.mxu0 0
  %136 = vmatpush2.bf16.msra.mxu0 0
  %137 = vmatprep.subr.bf16.mxu0 0
  %138 = vmatpush2.bf16.msra.mxu0 0
  %139 = vmatprep.subr.bf16.mxu0 0
  %140 = vmatpush2.bf16.msra.mxu0 0
  %141 = vmatprep.subr.bf16.mxu0 0
  %142 = vmatpush2.bf16.msra.mxu0 0
  %143 = vmatprep.subr.bf16.mxu0 0
  %144 = vmatpush2.bf16.msra.mxu0 0
  %145 = vmatprep.subr.bf16.mxu0 0
  %146 = vmatpush2.bf16.msra.mxu0 0
  %147 = vmatprep.subr.bf16.mxu0 0
  %148 = vmatpush2.bf16.msra.mxu0 0
  %149 = vmatprep.subr.bf16.mxu0 0
  %150 = vmatpush2.bf16.msra.mxu0 0
  %151 = vmatprep.mubr.bf16.mxu0 0
  %152 = vmatmul.mubr.bf16.gmra.mxu0 %v96
  %v153 = vpop.f32.mrf.mxu0
  %v154 = vadd.f32 %v40, %v153
  %v155 = vpop.f32.mrf.mxu0
  %v156 = vpop.f32.mrf.mxu0
  %v157 = vadd.f32 %v40, %v156
  %v158 = vpop.f32.mrf.mxu0
  %159 = vmatprep.mubr.bf16.mxu0 0
  %160 = vmatmul.mubr.bf16.gmra.mxu0 %v99
  %v161 = vpop.f32.mrf.mxu0
  %v162 = vadd.f32 %v40, %v161
  %v163 = vpop.f32.mrf.mxu0
  %v164 = vpop.f32.mrf.mxu0
  %v165 = vadd.f32 %v40, %v164
  %v166 = vpop.f32.mrf.mxu0
  %167 = vmatprep.mubr.bf16.mxu0 0
  %168 = vmatmul.mubr.bf16.gmra.mxu0 %v102
  %v169 = vpop.f32.mrf.mxu0
  %v170 = vadd.f32 %v40, %v169
  %v171 = vpop.f32.mrf.mxu0
  %v172 = vpop.f32.mrf.mxu0
  %v173 = vadd.f32 %v40, %v172
  %v174 = vpop.f32.mrf.mxu0
  %175 = vmatprep.mubr.bf16.mxu0 0
  %176 = vmatmul.mubr.bf16.gmra.mxu0 %v105
  %v177 = vpop.f32.mrf.mxu0
  %v178 = vadd.f32 %v40, %v177
  %v179 = vpop.f32.mrf.mxu0
  %v180 = vpop.f32.mrf.mxu0
  %v181 = vadd.f32 %v40, %v180
  %v182 = vpop.f32.mrf.mxu0
  %183 = vmatprep.mubr.bf16.mxu0 0
  %184 = vmatmul.mubr.bf16.gmra.mxu0 %v108
  %v185 = vpop.f32.mrf.mxu0
  %v186 = vadd.f32 %v40, %v185
  %v187 = vpop.f32.mrf.mxu0
  %v188 = vpop.f32.mrf.mxu0
  %v189 = vadd.f32 %v40, %v188
  %v190 = vpop.f32.mrf.mxu0
  %191 = vmatprep.mubr.bf16.mxu0 0
  %192 = vmatmul.mubr.bf16.gmra.mxu0 %v111
  %v193 = vpop.f32.mrf.mxu0
  %v194 = vadd.f32 %v40, %v193
  %v195 = vpop.f32.mrf.mxu0
  %v196 = vpop.f32.mrf.mxu0
  %v197 = vadd.f32 %v40, %v196
  %v198 = vpop.f32.mrf.mxu0
  %199 = vmatprep.mubr.bf16.mxu0 0
  %200 = vmatmul.mubr.bf16.gmra.mxu0 %v114
  %v201 = vpop.f32.mrf.mxu0
  %v202 = vadd.f32 %v40, %v201
  %v203 = vpop.f32.mrf.mxu0
  %v204 = vpop.f32.mrf.mxu0
  %v205 = vadd.f32 %v40, %v204
  %v206 = vpop.f32.mrf.mxu0
  %207 = vmatprep.mubr.bf16.mxu0 0
  %208 = vmatmul.mubr.bf16.gmra.mxu0 %v117
  %v209 = vpop.f32.mrf.mxu0
  %v210 = vadd.f32 %v40, %v209
  %v211 = vpop.f32.mrf.mxu0
  %v212 = vpop.f32.mrf.mxu0
  %v213 = vadd.f32 %v40, %v212
  %v214 = vpop.f32.mrf.mxu0
  %215 = vdwg.mxu0
  %v216 = vmax.f32 %v154, 0.0
  %v217 = vmax.f32 %v157, 0.0
  %v218 = vmax.f32 %v162, 0.0
  %v219 = vmax.f32 %v165, 0.0
  %v220 = vmax.f32 %v170, 0.0
  %v221 = vmax.f32 %v173, 0.0
  %v222 = vmax.f32 %v178, 0.0
  %v223 = vmax.f32 %v181, 0.0
  %v224 = vmax.f32 %v186, 0.0
  %v225 = vmax.f32 %v189, 0.0
  %v226 = vmax.f32 %v194, 0.0
  %v227 = vmax.f32 %v197, 0.0
  %v228 = vmax.f32 %v202, 0.0
  %v229 = vmax.f32 %v205, 0.0
  %v230 = vmax.f32 %v210, 0.0
  %v231 = vmax.f32 %v213, 0.0
  %v232 = vpack.c.bf16 %v217, %v216
  %v233 = vpack.c.bf16 %v219, %v218
  %v234 = vpack.c.bf16 %v221, %v220
  %v235 = vpack.c.bf16 %v223, %v222
  %v236 = vpack.c.bf16 %v225, %v224
  %v237 = vpack.c.bf16 %v227, %v226
  %v238 = vpack.c.bf16 %v229, %v228
  %v239 = vpack.c.bf16 %v231, %v230
  %v248 = vunpack.c.l.b16 %v232
  %v249 = vunpack.c.h.b16 %v232
  %v250 = vunpack.c.l.b16 %v233
  %v251 = vunpack.c.h.b16 %v233
  %v252 = vunpack.c.l.b16 %v234
  %v253 = vunpack.c.h.b16 %v234
  %v254 = vunpack.c.l.b16 %v235
  %v255 = vunpack.c.h.b16 %v235
  %v256 = vunpack.c.l.b16 %v236
  %v257 = vunpack.c.h.b16 %v236
  %v258 = vunpack.c.l.b16 %v237
  %v259 = vunpack.c.h.b16 %v237
  %v260 = vunpack.c.l.b16 %v238
  %v261 = vunpack.c.h.b16 %v238
  %v262 = vunpack.c.l.b16 %v239
  %v263 = vunpack.c.h.b16 %v239
  %v264 = vpack.c.b16 %v248, %v248
  %v265 = vpack.c.b16 %v249, %v249
  %v266 = vpack.c.b16 %v250, %v250
  %v267 = vpack.c.b16 %v251, %v251
  %v268 = vpack.c.b16 %v252, %v252
  %v269 = vpack.c.b16 %v253, %v253
  %v270 = vpack.c.b16 %v254, %v254
  %v271 = vpack.c.b16 %v255, %v255
  %v272 = vpack.c.b16 %v256, %v256
  %v273 = vpack.c.b16 %v257, %v257
  %v274 = vpack.c.b16 %v258, %v258
  %v275 = vpack.c.b16 %v259, %v259
  %v276 = vpack.c.b16 %v260, %v260
  %v277 = vpack.c.b16 %v261, %v261
  %v278 = vpack.c.b16 %v262, %v262
  %v279 = vpack.c.b16 %v263, %v263
  %vm296 = vcmask 257024
  %297 = vst.msk [vmem:[%s3] sm:$0xf] %vm296, %v264
  %298 = vst.msk [vmem:[%s3 + $0x4] sm:$0xf] %vm296, %v265
  %299 = vst.msk [vmem:[%s3 + $0x8] sm:$0xf] %vm296, %v266
  %300 = vst.msk [vmem:[%s3 + $0xc] sm:$0xf] %vm296, %v267
  %301 = vst.msk [vmem:[%s3 + $0x10] sm:$0xf] %vm296, %v268
  %302 = vst.msk [vmem:[%s3 + $0x14] sm:$0xf] %vm296, %v269
  %303 = vst.msk [vmem:[%s3 + $0x18] sm:$0xf] %vm296, %v270
  %304 = vst.msk [vmem:[%s3 + $0x1c] sm:$0xf] %vm296, %v271
  %305 = vst.msk [vmem:[%s3 + $0x20] sm:$0xf] %vm296, %v272
  %306 = vst.msk [vmem:[%s3 + $0x24] sm:$0xf] %vm296, %v273
  %307 = vst.msk [vmem:[%s3 + $0x28] sm:$0xf] %vm296, %v274
  %308 = vst.msk [vmem:[%s3 + $0x2c] sm:$0xf] %vm296, %v275
  %309 = vst.msk [vmem:[%s3 + $0x30] sm:$0xf] %vm296, %v276
  %310 = vst.msk [vmem:[%s3 + $0x34] sm:$0xf] %vm296, %v277
  %311 = vst.msk [vmem:[%s3 + $0x38] sm:$0xf] %vm296, %v278
  %312 = vst.msk [vmem:[%s3 + $0x3c] sm:$0xf] %vm296, %v279
  // Predicated region
  $region14: #{acoustic_encoder_forward.18} parent=0 // pred_check
    _
  $region15: #{acoustic_encoder_forward.18} parent=0 // pred_check_branch
    %314 = sbr.rel (0) target = $region17
  $region16: #{acoustic_encoder_forward.18} parent=0 // pred_region
    _
  $region17: #{acoustic_encoder_forward.18} parent=0 // pred_fallthru
    _
  // Predicated region
  $region18: #{acoustic_encoder_forward.18} parent=0 // pred_check
    _
  $region19: #{acoustic_encoder_forward.18} parent=0 // pred_check_branch
    %316 = sbr.rel (0) target = $region21
  $region20: #{acoustic_encoder_forward.18} parent=0 // pred_region
    _
  $region21: #{acoustic_encoder_forward.18} parent=0 // pred_fallthru
    _

// kernel: acoustic_encoder_forward.20
$region0: #{acoustic_encoder_forward.20}
  #allocation0 [shape = 'u32[]', space=smem, size = 0x4, offset = 0x4, fixed_abs, tag = 'smem constant byte address 0x4 - core index']
  #allocation1 [shape = 'u32[144,128]{1,0:T(1,128)}', space=vmem, size = 0x12000, scoped, tag = 'internal scratch']
  %s0 = inlined_call_operand.vmem [shape: bf16[16,32], index: 0, kind: input, shape index: {}]
  %s1 = inlined_call_operand.vmem [shape: f32[1,32], index: 1, kind: input, shape index: {}]
  %s2 = inlined_call_operand.vmem [shape: f32[1,32], index: 2, kind: input, shape index: {}]
  %s3 = inlined_call_operand.vmem [shape: bf16[32,128], index: 3, kind: input, shape index: {}]
  %s4 = inlined_call_operand.vmem [shape: f32[1,128], index: 4, kind: input, shape index: {}]
  %s5 = inlined_call_operand.vmem [shape: bf16[16,128], index: 5, kind: output, shape index: {}]
  %s6 = sld [smem:[#allocation0]]
  $region30: #{acoustic_encoder_forward.20} parent=0
    _
  %s8 = ssub.s32 1, %s6
  %s9 = scalar_select 0, %s8, %s6
  // Predicated region
  $region2: #{acoustic_encoder_forward.20} parent=0 // pred_check
    _
  $region3: #{acoustic_encoder_forward.20} parent=0 // pred_check_branch
    %11 = sbr.rel (0) target = $region5
  $region4: #{acoustic_encoder_forward.20} parent=0 // pred_region
    _
  $region5: #{acoustic_encoder_forward.20} parent=0 // pred_fallthru
    _
  // Predicated region
  $region6: #{acoustic_encoder_forward.20} parent=0 // pred_check
    _
  $region7: #{acoustic_encoder_forward.20} parent=0 // pred_check_branch
    %13 = sbr.rel (0) target = $region9
  $region8: #{acoustic_encoder_forward.20} parent=0 // pred_region
    _
  $region9: #{acoustic_encoder_forward.20} parent=0 // pred_fallthru
    _
  // Predicated region
  $region10: #{acoustic_encoder_forward.20} parent=0 // pred_check
    _
  $region11: #{acoustic_encoder_forward.20} parent=0 // pred_check_branch
    %15 = sbr.rel (0) target = $region13
  $region12: #{acoustic_encoder_forward.20} parent=0 // pred_region
    _
  $region13: #{acoustic_encoder_forward.20} parent=0 // pred_fallthru
    _
  // Predicated region
  $region14: #{acoustic_encoder_forward.20} parent=0 // pred_check
    _
  $region15: #{acoustic_encoder_forward.20} parent=0 // pred_check_branch
    %17 = sbr.rel (0) target = $region17
  $region16: #{acoustic_encoder_forward.20} parent=0 // pred_region
    _
  $region17: #{acoustic_encoder_forward.20} parent=0 // pred_fallthru
    _
  // Predicated region
  $region18: #{acoustic_encoder_forward.20} parent=0 // pred_check
    _
  $region19: #{acoustic_encoder_forward.20} parent=0 // pred_check_branch
    %19 = sbr.rel (0) target = $region21
  $region20: #{acoustic_encoder_forward.20} parent=0 // pred_region
    _
  $region21: #{acoustic_encoder_forward.20} parent=0 // pred_fallthru
    _
  %v21 = vld [vmem:[%s0] sm:$0xf]
  %v22 = vld [vmem:[%s0 + $0x4] sm:$0xf]
  %v23 = vld [vmem:[%s1] sm:$0x1]
  %v24 = vld [vmem:[%s2] sm:$0x1]
  %v25 = vunpack.c.l.bf16 %v21
  %v26 = vunpack.c.l.bf16 %v22
  %vm27 = vcmask 261120
  %v28 = vsel %vm27, %v25, 0.0
  %29 = vadd.xlane.f32.xlu0 %v28
  %v30 = vpop.xlane.xlu0 %29
  %v31 = vsel %vm27, %v26, 0.0
  %32 = vadd.xlane.f32.xlu0 %v31
  %v33 = vpop.xlane.xlu0 %32
  %v34 = vrcp.pop 32.0
  %v35 = vmul.f32 %v30, %v34
  %v36 = vmul.f32 %v33, %v34
  %v37 = vsub.f32 %v25, %v35
  %v38 = vsub.f32 %v26, %v36
  %v39 = vmul.f32 %v37, %v37
  %v40 = vmul.f32 %v38, %v38
  %v41 = vsel %vm27, %v39, 0.0
  %42 = vadd.xlane.f32.xlu0 %v41
  %v43 = vpop.xlane.xlu0 %42
  %v44 = vsel %vm27, %v40, 0.0
  %45 = vadd.xlane.f32.xlu0 %v44
  %v46 = vpop.xlane.xlu0 %45
  %v47 = vmul.f32 %v43, %v34
  %v48 = vmul.f32 %v46, %v34
  %v49 = vadd.f32 %v47, 1e-05
  %v50 = vadd.f32 %v48, 1e-05
  %v51 = vrsqrt.pop %v49
  %v52 = vrsqrt.pop %v50
  %v53 = vmul.f32 %v37, %v51
  %v54 = vmul.f32 %v38, %v52
  %v56 = vlaneseq
  %v57 = vshrl.u32 %v56, 7
  %v58 = vsub.s32 0, %v57
  %v59 = vrot.slane %v23, %v58
  %v61 = vmul.f32 %v53, %v59
  %v62 = vmul.f32 %v54, %v59
  %v64 = vlaneseq
  %v65 = vshrl.u32 %v64, 7
  %v66 = vsub.s32 0, %v65
  %v67 = vrot.slane %v24, %v66
  %v69 = vadd.f32 %v61, %v67
  %v70 = vadd.f32 %v62, %v67
  %v71 = vpack.c.bf16 %v70, %v69
  %v72 = vld [vmem:[%s3] sm:$0xf]
  %v73 = vld [vmem:[%s3 + $0x4] sm:$0xf]
  %v74 = vld [vmem:[%s3 + $0x8] sm:$0xf]
  %v75 = vld [vmem:[%s3 + $0xc] sm:$0xf]
  %v76 = vld [vmem:[%s4] sm:$0x1]
  %v78 = vlaneseq
  %v79 = vshrl.u32 %v78, 7
  %v80 = vsub.s32 0, %v79
  %v81 = vrot.slane %v76, %v80
  %v87 = vunpack.c.l.b16 %v72
  %v88 = vunpack.c.l.b16 %v73
  %v89 = vunpack.c.l.b16 %v74
  %v90 = vunpack.c.l.b16 %v75
  %v91 = vpack.c.b16 %v88, %v87
  %v92 = vpack.c.b16 %v90, %v89
  %v96 = vsel %vm27, %v71, 0
  %98 = vmatprep.subr.bf16.mxu0 0
  %99 = vmatpush1.bf16.msra.mxu0 0
  %100 = vmatprep.subr.bf16.mxu0 0
  %101 = vmatpush1.bf16.msra.mxu0 0
  %102 = vmatprep.subr.bf16.mxu0 0
  %103 = vmatpush1.bf16.msra.mxu0 0
  %104 = vmatprep.subr.bf16.mxu0 0
  %105 = vmatpush1.bf16.msra.mxu0 0
  %106 = vmatprep.subr.bf16.mxu0 0
  %107 = vmatpush1.bf16.msra.mxu0 0
  %108 = vmatprep.subr.bf16.mxu0 0
  %109 = vmatpush1.bf16.msra.mxu0 0
  %110 = vmatprep.subr.bf16.mxu0 0
  %111 = vmatpush1.bf16.msra.mxu0 %v92
  %112 = vmatprep.subr.bf16.mxu0 0
  %113 = vmatpush1.bf16.msra.mxu0 %v91
  %114 = vmatprep.subr.bf16.mxu0 0
  %115 = vmatpush2.bf16.msra.mxu0 0
  %116 = vmatprep.subr.bf16.mxu0 0
  %117 = vmatpush2.bf16.msra.mxu0 0
  %118 = vmatprep.subr.bf16.mxu0 0
  %119 = vmatpush2.bf16.msra.mxu0 0
  %120 = vmatprep.subr.bf16.mxu0 0
  %121 = vmatpush2.bf16.msra.mxu0 0
  %122 = vmatprep.subr.bf16.mxu0 0
  %123 = vmatpush2.bf16.msra.mxu0 0
  %124 = vmatprep.subr.bf16.mxu0 0
  %125 = vmatpush2.bf16.msra.mxu0 0
  %126 = vmatprep.subr.bf16.mxu0 0
  %127 = vmatpush2.bf16.msra.mxu0 0
  %128 = vmatprep.subr.bf16.mxu0 0
  %129 = vmatpush2.bf16.msra.mxu0 0
  %130 = vmatprep.mubr.bf16.mxu0 0
  %131 = vmatmul.mubr.bf16.gmra.mxu0 %v96
  %v132 = vpop.f32.mrf.mxu0
  %v133 = vadd.f32 %v81, %v132
  %v134 = vpop.f32.mrf.mxu0
  %v135 = vpop.f32.mrf.mxu0
  %v136 = vadd.f32 %v81, %v135
  %v137 = vpop.f32.mrf.mxu0
  %138 = vdwg.mxu0
  %v139 = vxor.u32 %v133, 2147483648
  %v140 = vxor.u32 %v136, 2147483648
  %v141 = vmul.f32 %v139, 1.442695
  %v142 = vpow.pop %v141
  %v143 = vmul.f32 %v140, 1.442695
  %v144 = vpow.pop %v143
  %v145 = vadd.f32 %v142, 1.0
  %v146 = vadd.f32 %v144, 1.0
  %v147 = vrcp.pop %v145
  %v148 = vmul.f32 1.0, %v147
  %v149 = vrcp.pop %v146
  %v150 = vmul.f32 1.0, %v149
  %v151 = vmul.f32 %v133, %v148
  %v152 = vmul.f32 %v136, %v150
  %v153 = vpack.c.bf16 %v152, %v151
  %v155 = vunpack.c.l.b16 %v153
  %v156 = vunpack.c.h.b16 %v153
  %v157 = vpack.c.b16 %v155, %v155
  %v158 = vpack.c.b16 %v156, %v156
  %161 = vst [vmem:[%s5] sm:$0xf] %v157
  %162 = vst [vmem:[%s5 + $0x4] sm:$0xf] %v158
  // Predicated region
  $region22: #{acoustic_encoder_forward.20} parent=0 // pred_check
    _
  $region23: #{acoustic_encoder_forward.20} parent=0 // pred_check_branch
    %164 = sbr.rel (0) target = $region25
  $region24: #{acoustic_encoder_forward.20} parent=0 // pred_region
    _
  $region25: #{acoustic_encoder_forward.20} parent=0 // pred_fallthru
    _
  // Predicated region
  $region26: #{acoustic_encoder_forward.20} parent=0 // pred_check
    _
  $region27: #{acoustic_encoder_forward.20} parent=0 // pred_check_branch
    %166 = sbr.rel (0) target = $region29
  $region28: #{acoustic_encoder_forward.20} parent=0 // pred_region
    _
  $region29: #{acoustic_encoder_forward.20} parent=0 // pred_fallthru
    _

// kernel: acoustic_encoder_forward.21
$region0: #{acoustic_encoder_forward.21}
  #allocation0 [shape = 'u32[]', space=smem, size = 0x4, offset = 0x4, fixed_abs, tag = 'smem constant byte address 0x4 - core index']
  #allocation1 [shape = 'u32[144,128]{1,0:T(1,128)}', space=vmem, size = 0x12000, scoped, tag = 'internal scratch']
  %s0 = inlined_call_operand.vmem [shape: bf16[16,128], index: 0, kind: input, shape index: {}]
  %s1 = inlined_call_operand.vmem [shape: bf16[128,32], index: 1, kind: input, shape index: {}]
  %s2 = inlined_call_operand.vmem [shape: f32[1,32], index: 2, kind: input, shape index: {}]
  %s3 = inlined_call_operand.vmem [shape: bf16[16,32], index: 3, kind: input, shape index: {}]
  %s4 = inlined_call_operand.vmem [shape: bf16[16,32], index: 4, kind: output, shape index: {}]
  %s5 = sld [smem:[#allocation0]]
  $region26: #{acoustic_encoder_forward.21} parent=0
    _
  %s7 = ssub.s32 1, %s5
  %s8 = scalar_select 0, %s7, %s5
  // Predicated region
  $region2: #{acoustic_encoder_forward.21} parent=0 // pred_check
    _
  $region3: #{acoustic_encoder_forward.21} parent=0 // pred_check_branch
    %10 = sbr.rel (0) target = $region5
  $region4: #{acoustic_encoder_forward.21} parent=0 // pred_region
    _
  $region5: #{acoustic_encoder_forward.21} parent=0 // pred_fallthru
    _
  // Predicated region
  $region6: #{acoustic_encoder_forward.21} parent=0 // pred_check
    _
  $region7: #{acoustic_encoder_forward.21} parent=0 // pred_check_branch
    %12 = sbr.rel (0) target = $region9
  $region8: #{acoustic_encoder_forward.21} parent=0 // pred_region
    _
  $region9: #{acoustic_encoder_forward.21} parent=0 // pred_fallthru
    _
  // Predicated region
  $region10: #{acoustic_encoder_forward.21} parent=0 // pred_check
    _
  $region11: #{acoustic_encoder_forward.21} parent=0 // pred_check_branch
    %14 = sbr.rel (0) target = $region13
  $region12: #{acoustic_encoder_forward.21} parent=0 // pred_region
    _
  $region13: #{acoustic_encoder_forward.21} parent=0 // pred_fallthru
    _
  // Predicated region
  $region14: #{acoustic_encoder_forward.21} parent=0 // pred_check
    _
  $region15: #{acoustic_encoder_forward.21} parent=0 // pred_check_branch
    %16 = sbr.rel (0) target = $region17
  $region16: #{acoustic_encoder_forward.21} parent=0 // pred_region
    _
  $region17: #{acoustic_encoder_forward.21} parent=0 // pred_fallthru
    _
  %v18 = vld [vmem:[%s3] sm:$0xf]
  %v19 = vld [vmem:[%s3 + $0x4] sm:$0xf]
  %v20 = vunpack.c.l.bf16 %v18
  %v21 = vunpack.c.l.bf16 %v19
  %v22 = vld [vmem:[%s0] sm:$0xf]
  %v23 = vld [vmem:[%s0 + $0x4] sm:$0xf]
  %v24 = vld [vmem:[%s1] sm:$0xf]
  %v25 = vld [vmem:[%s1 + $0x4] sm:$0xf]
  %v26 = vld [vmem:[%s1 + $0x8] sm:$0xf]
  %v27 = vld [vmem:[%s1 + $0xc] sm:$0xf]
  %v28 = vld [vmem:[%s1 + $0x10] sm:$0xf]
  %v29 = vld [vmem:[%s1 + $0x14] sm:$0xf]
  %v30 = vld [vmem:[%s1 + $0x18] sm:$0xf]
  %v31 = vld [vmem:[%s1 + $0x1c] sm:$0xf]
  %v32 = vld [vmem:[%s1 + $0x20] sm:$0xf]
  %v33 = vld [vmem:[%s1 + $0x24] sm:$0xf]
  %v34 = vld [vmem:[%s1 + $0x28] sm:$0xf]
  %v35 = vld [vmem:[%s1 + $0x2c] sm:$0xf]
  %v36 = vld [vmem:[%s1 + $0x30] sm:$0xf]
  %v37 = vld [vmem:[%s1 + $0x34] sm:$0xf]
  %v38 = vld [vmem:[%s1 + $0x38] sm:$0xf]
  %v39 = vld [vmem:[%s1 + $0x3c] sm:$0xf]
  %v40 = vld [vmem:[%s2] sm:$0x1]
  %v42 = vlaneseq
  %v43 = vshrl.u32 %v42, 7
  %v44 = vsub.s32 0, %v43
  %v45 = vrot.slane %v40, %v44
  %v49 = vunpack.c.l.b16 %v22
  %v50 = vunpack.c.l.b16 %v23
  %v51 = vpack.c.b16 %v50, %v49
  %v69 = vunpack.c.l.b16 %v24
  %v70 = vunpack.c.l.b16 %v25
  %v71 = vunpack.c.l.b16 %v26
  %v72 = vunpack.c.l.b16 %v27
  %v73 = vunpack.c.l.b16 %v28
  %v74 = vunpack.c.l.b16 %v29
  %v75 = vunpack.c.l.b16 %v30
  %v76 = vunpack.c.l.b16 %v31
  %v77 = vunpack.c.l.b16 %v32
  %v78 = vunpack.c.l.b16 %v33
  %v79 = vunpack.c.l.b16 %v34
  %v80 = vunpack.c.l.b16 %v35
  %v81 = vunpack.c.l.b16 %v36
  %v82 = vunpack.c.l.b16 %v37
  %v83 = vunpack.c.l.b16 %v38
  %v84 = vunpack.c.l.b16 %v39
  %v85 = vpack.c.b16 %v70, %v69
  %v86 = vpack.c.b16 %v72, %v71
  %v87 = vpack.c.b16 %v74, %v73
  %v88 = vpack.c.b16 %v76, %v75
  %v89 = vpack.c.b16 %v78, %v77
  %v90 = vpack.c.b16 %v80, %v79
  %v91 = vpack.c.b16 %v82, %v81
  %v92 = vpack.c.b16 %v84, %v83
  %101 = vmatprep.subr.bf16.mxu0 0
  %102 = vmatpush1.bf16.msra.mxu0 %v92
  %103 = vmatprep.subr.bf16.mxu0 0
  %104 = vmatpush1.bf16.msra.mxu0 %v91
  %105 = vmatprep.subr.bf16.mxu0 0
  %106 = vmatpush1.bf16.msra.mxu0 %v90
  %107 = vmatprep.subr.bf16.mxu0 0
  %108 = vmatpush1.bf16.msra.mxu0 %v89
  %109 = vmatprep.subr.bf16.mxu0 0
  %110 = vmatpush1.bf16.msra.mxu0 %v88
  %111 = vmatprep.subr.bf16.mxu0 0
  %112 = vmatpush1.bf16.msra.mxu0 %v87
  %113 = vmatprep.subr.bf16.mxu0 0
  %114 = vmatpush1.bf16.msra.mxu0 %v86
  %115 = vmatprep.subr.bf16.mxu0 0
  %116 = vmatpush1.bf16.msra.mxu0 %v85
  %117 = vmatprep.subr.bf16.mxu0 0
  %118 = vmatpush2.bf16.msra.mxu0 0
  %119 = vmatprep.subr.bf16.mxu0 0
  %120 = vmatpush2.bf16.msra.mxu0 0
  %121 = vmatprep.subr.bf16.mxu0 0
  %122 = vmatpush2.bf16.msra.mxu0 0
  %123 = vmatprep.subr.bf16.mxu0 0
  %124 = vmatpush2.bf16.msra.mxu0 0
  %125 = vmatprep.subr.bf16.mxu0 0
  %126 = vmatpush2.bf16.msra.mxu0 0
  %127 = vmatprep.subr.bf16.mxu0 0
  %128 = vmatpush2.bf16.msra.mxu0 0
  %129 = vmatprep.subr.bf16.mxu0 0
  %130 = vmatpush2.bf16.msra.mxu0 0
  %131 = vmatprep.subr.bf16.mxu0 0
  %132 = vmatpush2.bf16.msra.mxu0 0
  %133 = vmatprep.mubr.bf16.mxu0 0
  %134 = vmatmul.mubr.bf16.gmra.mxu0 %v51
  %v135 = vpop.f32.mrf.mxu0
  %v136 = vadd.f32 %v45, %v135
  %v137 = vpop.f32.mrf.mxu0
  %v138 = vpop.f32.mrf.mxu0
  %v139 = vadd.f32 %v45, %v138
  %v140 = vpop.f32.mrf.mxu0
  %141 = vdwg.mxu0
  %v142 = vmul.f32 %v136, 0.5
  %v143 = vmul.f32 %v139, 0.5
  %v144 = vadd.f32 %v20, %v142
  %v145 = vadd.f32 %v21, %v143
  %v146 = vpack.c.bf16 %v145, %v144
  %v148 = vunpack.c.l.b16 %v146
  %v149 = vunpack.c.h.b16 %v146
  %v150 = vpack.c.b16 %v148, %v148
  %v151 = vpack.c.b16 %v149, %v149
  %vm154 = vcmask 257024
  %155 = vst.msk [vmem:[%s4] sm:$0xf] %vm154, %v150
  %156 = vst.msk [vmem:[%s4 + $0x4] sm:$0xf] %vm154, %v151
  // Predicated region
  $region18: #{acoustic_encoder_forward.21} parent=0 // pred_check
    _
  $region19: #{acoustic_encoder_forward.21} parent=0 // pred_check_branch
    %158 = sbr.rel (0) target = $region21
  $region20: #{acoustic_encoder_forward.21} parent=0 // pred_region
    _
  $region21: #{acoustic_encoder_forward.21} parent=0 // pred_fallthru
    _
  // Predicated region
  $region22: #{acoustic_encoder_forward.21} parent=0 // pred_check
    _
  $region23: #{acoustic_encoder_forward.21} parent=0 // pred_check_branch
    %160 = sbr.rel (0) target = $region25
  $region24: #{acoustic_encoder_forward.21} parent=0 // pred_region
    _
  $region25: #{acoustic_encoder_forward.21} parent=0 // pred_fallthru
    _

// kernel: acoustic_encoder_forward.22
$region0: #{acoustic_encoder_forward.22}
  #allocation0 [shape = 'u32[]', space=smem, size = 0x4, offset = 0x4, fixed_abs, tag = 'smem constant byte address 0x4 - core index']
  #allocation1 [shape = 'u32[144,128]{1,0:T(1,128)}', space=vmem, size = 0x12000, scoped, tag = 'internal scratch']
  %s0 = inlined_call_operand.vmem [shape: bf16[16,32], index: 0, kind: input, shape index: {}]
  %s1 = inlined_call_operand.vmem [shape: f32[1,32], index: 1, kind: input, shape index: {}]
  %s2 = inlined_call_operand.vmem [shape: f32[1,32], index: 2, kind: input, shape index: {}]
  %s3 = inlined_call_operand.vmem [shape: bf16[32,96], index: 3, kind: input, shape index: {}]
  %s4 = inlined_call_operand.vmem [shape: f32[1,96], index: 4, kind: input, shape index: {}]
  %s5 = inlined_call_operand.vmem [shape: bf16[16,96], index: 5, kind: output, shape index: {}]
  %s6 = sld [smem:[#allocation0]]
  $region30: #{acoustic_encoder_forward.22} parent=0
    _
  %s8 = ssub.s32 1, %s6
  %s9 = scalar_select 0, %s8, %s6
  // Predicated region
  $region2: #{acoustic_encoder_forward.22} parent=0 // pred_check
    _
  $region3: #{acoustic_encoder_forward.22} parent=0 // pred_check_branch
    %11 = sbr.rel (0) target = $region5
  $region4: #{acoustic_encoder_forward.22} parent=0 // pred_region
    _
  $region5: #{acoustic_encoder_forward.22} parent=0 // pred_fallthru
    _
  // Predicated region
  $region6: #{acoustic_encoder_forward.22} parent=0 // pred_check
    _
  $region7: #{acoustic_encoder_forward.22} parent=0 // pred_check_branch
    %13 = sbr.rel (0) target = $region9
  $region8: #{acoustic_encoder_forward.22} parent=0 // pred_region
    _
  $region9: #{acoustic_encoder_forward.22} parent=0 // pred_fallthru
    _
  // Predicated region
  $region10: #{acoustic_encoder_forward.22} parent=0 // pred_check
    _
  $region11: #{acoustic_encoder_forward.22} parent=0 // pred_check_branch
    %15 = sbr.rel (0) target = $region13
  $region12: #{acoustic_encoder_forward.22} parent=0 // pred_region
    _
  $region13: #{acoustic_encoder_forward.22} parent=0 // pred_fallthru
    _
  // Predicated region
  $region14: #{acoustic_encoder_forward.22} parent=0 // pred_check
    _
  $region15: #{acoustic_encoder_forward.22} parent=0 // pred_check_branch
    %17 = sbr.rel (0) target = $region17
  $region16: #{acoustic_encoder_forward.22} parent=0 // pred_region
    _
  $region17: #{acoustic_encoder_forward.22} parent=0 // pred_fallthru
    _
  // Predicated region
  $region18: #{acoustic_encoder_forward.22} parent=0 // pred_check
    _
  $region19: #{acoustic_encoder_forward.22} parent=0 // pred_check_branch
    %19 = sbr.rel (0) target = $region21
  $region20: #{acoustic_encoder_forward.22} parent=0 // pred_region
    _
  $region21: #{acoustic_encoder_forward.22} parent=0 // pred_fallthru
    _
  %v21 = vld [vmem:[%s0] sm:$0xf]
  %v22 = vld [vmem:[%s0 + $0x4] sm:$0xf]
  %v23 = vld [vmem:[%s1] sm:$0x1]
  %v24 = vld [vmem:[%s2] sm:$0x1]
  %v25 = vunpack.c.l.bf16 %v21
  %v26 = vunpack.c.l.bf16 %v22
  %vm27 = vcmask 261120
  %v28 = vsel %vm27, %v25, 0.0
  %29 = vadd.xlane.f32.xlu0 %v28
  %v30 = vpop.xlane.xlu0 %29
  %v31 = vsel %vm27, %v26, 0.0
  %32 = vadd.xlane.f32.xlu0 %v31
  %v33 = vpop.xlane.xlu0 %32
  %v34 = vrcp.pop 32.0
  %v35 = vmul.f32 %v30, %v34
  %v36 = vmul.f32 %v33, %v34
  %v37 = vsub.f32 %v25, %v35
  %v38 = vsub.f32 %v26, %v36
  %v39 = vmul.f32 %v37, %v37
  %v40 = vmul.f32 %v38, %v38
  %v41 = vsel %vm27, %v39, 0.0
  %42 = vadd.xlane.f32.xlu0 %v41
  %v43 = vpop.xlane.xlu0 %42
  %v44 = vsel %vm27, %v40, 0.0
  %45 = vadd.xlane.f32.xlu0 %v44
  %v46 = vpop.xlane.xlu0 %45
  %v47 = vmul.f32 %v43, %v34
  %v48 = vmul.f32 %v46, %v34
  %v49 = vadd.f32 %v47, 1e-05
  %v50 = vadd.f32 %v48, 1e-05
  %v51 = vrsqrt.pop %v49
  %v52 = vrsqrt.pop %v50
  %v53 = vmul.f32 %v37, %v51
  %v54 = vmul.f32 %v38, %v52
  %v56 = vlaneseq
  %v57 = vshrl.u32 %v56, 7
  %v58 = vsub.s32 0, %v57
  %v59 = vrot.slane %v23, %v58
  %v61 = vmul.f32 %v53, %v59
  %v62 = vmul.f32 %v54, %v59
  %v64 = vlaneseq
  %v65 = vshrl.u32 %v64, 7
  %v66 = vsub.s32 0, %v65
  %v67 = vrot.slane %v24, %v66
  %v69 = vadd.f32 %v61, %v67
  %v70 = vadd.f32 %v62, %v67
  %v71 = vpack.c.bf16 %v70, %v69
  %v72 = vld [vmem:[%s3] sm:$0xf]
  %v73 = vld [vmem:[%s3 + $0x4] sm:$0xf]
  %v74 = vld [vmem:[%s3 + $0x8] sm:$0xf]
  %v75 = vld [vmem:[%s3 + $0xc] sm:$0xf]
  %v76 = vld [vmem:[%s4] sm:$0x1]
  %v78 = vlaneseq
  %v79 = vshrl.u32 %v78, 7
  %v80 = vsub.s32 0, %v79
  %v81 = vrot.slane %v76, %v80
  %v87 = vunpack.c.l.b16 %v72
  %v88 = vunpack.c.l.b16 %v73
  %v89 = vunpack.c.l.b16 %v74
  %v90 = vunpack.c.l.b16 %v75
  %v91 = vpack.c.b16 %v88, %v87
  %v92 = vpack.c.b16 %v90, %v89
  %v96 = vsel %vm27, %v71, 0
  %98 = vmatprep.subr.bf16.mxu0 0
  %99 = vmatpush1.bf16.msra.mxu0 0
  %100 = vmatprep.subr.bf16.mxu0 0
  %101 = vmatpush1.bf16.msra.mxu0 0
  %102 = vmatprep.subr.bf16.mxu0 0
  %103 = vmatpush1.bf16.msra.mxu0 0
  %104 = vmatprep.subr.bf16.mxu0 0
  %105 = vmatpush1.bf16.msra.mxu0 0
  %106 = vmatprep.subr.bf16.mxu0 0
  %107 = vmatpush1.bf16.msra.mxu0 0
  %108 = vmatprep.subr.bf16.mxu0 0
  %109 = vmatpush1.bf16.msra.mxu0 0
  %110 = vmatprep.subr.bf16.mxu0 0
  %111 = vmatpush1.bf16.msra.mxu0 %v92
  %112 = vmatprep.subr.bf16.mxu0 0
  %113 = vmatpush1.bf16.msra.mxu0 %v91
  %114 = vmatprep.subr.bf16.mxu0 0
  %115 = vmatpush2.bf16.msra.mxu0 0
  %116 = vmatprep.subr.bf16.mxu0 0
  %117 = vmatpush2.bf16.msra.mxu0 0
  %118 = vmatprep.subr.bf16.mxu0 0
  %119 = vmatpush2.bf16.msra.mxu0 0
  %120 = vmatprep.subr.bf16.mxu0 0
  %121 = vmatpush2.bf16.msra.mxu0 0
  %122 = vmatprep.subr.bf16.mxu0 0
  %123 = vmatpush2.bf16.msra.mxu0 0
  %124 = vmatprep.subr.bf16.mxu0 0
  %125 = vmatpush2.bf16.msra.mxu0 0
  %126 = vmatprep.subr.bf16.mxu0 0
  %127 = vmatpush2.bf16.msra.mxu0 0
  %128 = vmatprep.subr.bf16.mxu0 0
  %129 = vmatpush2.bf16.msra.mxu0 0
  %130 = vmatprep.mubr.bf16.mxu0 0
  %131 = vmatmul.mubr.bf16.gmra.mxu0 %v96
  %v132 = vpop.f32.mrf.mxu0
  %v133 = vadd.f32 %v81, %v132
  %v134 = vpop.f32.mrf.mxu0
  %v135 = vpop.f32.mrf.mxu0
  %v136 = vadd.f32 %v81, %v135
  %v137 = vpop.f32.mrf.mxu0
  %138 = vdwg.mxu0
  %v139 = vpack.c.bf16 %v136, %v133
  %v141 = vunpack.c.l.b16 %v139
  %v142 = vunpack.c.h.b16 %v139
  %v143 = vpack.c.b16 %v141, %v141
  %v144 = vpack.c.b16 %v142, %v142
  %vm147 = vcmask 781312
  %148 = vst.msk [vmem:[%s5] sm:$0xf] %vm147, %v143
  %149 = vst.msk [vmem:[%s5 + $0x4] sm:$0xf] %vm147, %v144
  // Predicated region
  $region22: #{acoustic_encoder_forward.22} parent=0 // pred_check
    _
  $region23: #{acoustic_encoder_forward.22} parent=0 // pred_check_branch
    %151 = sbr.rel (0) target = $region25
  $region24: #{acoustic_encoder_forward.22} parent=0 // pred_region
    _
  $region25: #{acoustic_encoder_forward.22} parent=0 // pred_fallthru
    _
  // Predicated region
  $region26: #{acoustic_encoder_forward.22} parent=0 // pred_check
    _
  $region27: #{acoustic_encoder_forward.22} parent=0 // pred_check_branch
    %153 = sbr.rel (0) target = $region29
  $region28: #{acoustic_encoder_forward.22} parent=0 // pred_region
    _
  $region29: #{acoustic_encoder_forward.22} parent=0 // pred_fallthru
    _

// kernel: acoustic_encoder_forward.24
$region0: #{acoustic_encoder_forward.24}
  #allocation0 [shape = 'u32[]', space=smem, size = 0x4, offset = 0x4, fixed_abs, tag = 'smem constant byte address 0x4 - core index']
  #allocation1 [shape = 'u32[144,128]{1,0:T(1,128)}', space=vmem, size = 0x12000, scoped, tag = 'internal scratch']
  %s0 = inlined_call_operand.vmem [shape: bf16[16,32], index: 0, kind: input, shape index: {}]
  %s1 = inlined_call_operand.vmem [shape: f32[1,32], index: 1, kind: input, shape index: {}]
  %s2 = inlined_call_operand.vmem [shape: f32[1,32], index: 2, kind: input, shape index: {}]
  %s3 = inlined_call_operand.vmem [shape: bf16[32,64], index: 3, kind: input, shape index: {}]
  %s4 = inlined_call_operand.vmem [shape: f32[1,64], index: 4, kind: input, shape index: {}]
  %s5 = inlined_call_operand.vmem [shape: bf16[16,32], index: 5, kind: output, shape index: {}]
  %s6 = sld [smem:[#allocation0]]
  $region30: #{acoustic_encoder_forward.24} parent=0
    _
  %s8 = ssub.s32 1, %s6
  %s9 = scalar_select 0, %s8, %s6
  // Predicated region
  $region2: #{acoustic_encoder_forward.24} parent=0 // pred_check
    _
  $region3: #{acoustic_encoder_forward.24} parent=0 // pred_check_branch
    %11 = sbr.rel (0) target = $region5
  $region4: #{acoustic_encoder_forward.24} parent=0 // pred_region
    _
  $region5: #{acoustic_encoder_forward.24} parent=0 // pred_fallthru
    _
  // Predicated region
  $region6: #{acoustic_encoder_forward.24} parent=0 // pred_check
    _
  $region7: #{acoustic_encoder_forward.24} parent=0 // pred_check_branch
    %13 = sbr.rel (0) target = $region9
  $region8: #{acoustic_encoder_forward.24} parent=0 // pred_region
    _
  $region9: #{acoustic_encoder_forward.24} parent=0 // pred_fallthru
    _
  // Predicated region
  $region10: #{acoustic_encoder_forward.24} parent=0 // pred_check
    _
  $region11: #{acoustic_encoder_forward.24} parent=0 // pred_check_branch
    %15 = sbr.rel (0) target = $region13
  $region12: #{acoustic_encoder_forward.24} parent=0 // pred_region
    _
  $region13: #{acoustic_encoder_forward.24} parent=0 // pred_fallthru
    _
  // Predicated region
  $region14: #{acoustic_encoder_forward.24} parent=0 // pred_check
    _
  $region15: #{acoustic_encoder_forward.24} parent=0 // pred_check_branch
    %17 = sbr.rel (0) target = $region17
  $region16: #{acoustic_encoder_forward.24} parent=0 // pred_region
    _
  $region17: #{acoustic_encoder_forward.24} parent=0 // pred_fallthru
    _
  // Predicated region
  $region18: #{acoustic_encoder_forward.24} parent=0 // pred_check
    _
  $region19: #{acoustic_encoder_forward.24} parent=0 // pred_check_branch
    %19 = sbr.rel (0) target = $region21
  $region20: #{acoustic_encoder_forward.24} parent=0 // pred_region
    _
  $region21: #{acoustic_encoder_forward.24} parent=0 // pred_fallthru
    _
  %v21 = vld [vmem:[%s0] sm:$0xf]
  %v22 = vld [vmem:[%s0 + $0x4] sm:$0xf]
  %v23 = vld [vmem:[%s1] sm:$0x1]
  %v24 = vld [vmem:[%s2] sm:$0x1]
  %v25 = vunpack.c.l.bf16 %v21
  %v26 = vunpack.c.l.bf16 %v22
  %vm27 = vcmask 261120
  %v28 = vsel %vm27, %v25, 0.0
  %29 = vadd.xlane.f32.xlu0 %v28
  %v30 = vpop.xlane.xlu0 %29
  %v31 = vsel %vm27, %v26, 0.0
  %32 = vadd.xlane.f32.xlu0 %v31
  %v33 = vpop.xlane.xlu0 %32
  %v34 = vrcp.pop 32.0
  %v35 = vmul.f32 %v30, %v34
  %v36 = vmul.f32 %v33, %v34
  %v37 = vsub.f32 %v25, %v35
  %v38 = vsub.f32 %v26, %v36
  %v39 = vmul.f32 %v37, %v37
  %v40 = vmul.f32 %v38, %v38
  %v41 = vsel %vm27, %v39, 0.0
  %42 = vadd.xlane.f32.xlu0 %v41
  %v43 = vpop.xlane.xlu0 %42
  %v44 = vsel %vm27, %v40, 0.0
  %45 = vadd.xlane.f32.xlu0 %v44
  %v46 = vpop.xlane.xlu0 %45
  %v47 = vmul.f32 %v43, %v34
  %v48 = vmul.f32 %v46, %v34
  %v49 = vadd.f32 %v47, 1e-05
  %v50 = vadd.f32 %v48, 1e-05
  %v51 = vrsqrt.pop %v49
  %v52 = vrsqrt.pop %v50
  %v53 = vmul.f32 %v37, %v51
  %v54 = vmul.f32 %v38, %v52
  %v56 = vlaneseq
  %v57 = vshrl.u32 %v56, 7
  %v58 = vsub.s32 0, %v57
  %v59 = vrot.slane %v23, %v58
  %v61 = vmul.f32 %v53, %v59
  %v62 = vmul.f32 %v54, %v59
  %v64 = vlaneseq
  %v65 = vshrl.u32 %v64, 7
  %v66 = vsub.s32 0, %v65
  %v67 = vrot.slane %v24, %v66
  %v69 = vadd.f32 %v61, %v67
  %v70 = vadd.f32 %v62, %v67
  %v71 = vpack.c.bf16 %v70, %v69
  %v72 = vld [vmem:[%s3] sm:$0xf]
  %v73 = vld [vmem:[%s3 + $0x4] sm:$0xf]
  %v74 = vld [vmem:[%s3 + $0x8] sm:$0xf]
  %v75 = vld [vmem:[%s3 + $0xc] sm:$0xf]
  %v76 = vld [vmem:[%s4] sm:$0x1]
  %v78 = vlaneseq
  %v79 = vshrl.u32 %v78, 7
  %v80 = vsub.s32 0, %v79
  %v81 = vrot.slane %v76, %v80
  %v87 = vunpack.c.l.b16 %v72
  %v88 = vunpack.c.l.b16 %v73
  %v89 = vunpack.c.l.b16 %v74
  %v90 = vunpack.c.l.b16 %v75
  %v91 = vpack.c.b16 %v88, %v87
  %v92 = vpack.c.b16 %v90, %v89
  %v96 = vsel %vm27, %v71, 0
  %98 = vmatprep.subr.bf16.mxu0 0
  %99 = vmatpush1.bf16.msra.mxu0 0
  %100 = vmatprep.subr.bf16.mxu0 0
  %101 = vmatpush1.bf16.msra.mxu0 0
  %102 = vmatprep.subr.bf16.mxu0 0
  %103 = vmatpush1.bf16.msra.mxu0 0
  %104 = vmatprep.subr.bf16.mxu0 0
  %105 = vmatpush1.bf16.msra.mxu0 0
  %106 = vmatprep.subr.bf16.mxu0 0
  %107 = vmatpush1.bf16.msra.mxu0 0
  %108 = vmatprep.subr.bf16.mxu0 0
  %109 = vmatpush1.bf16.msra.mxu0 0
  %110 = vmatprep.subr.bf16.mxu0 0
  %111 = vmatpush1.bf16.msra.mxu0 %v92
  %112 = vmatprep.subr.bf16.mxu0 0
  %113 = vmatpush1.bf16.msra.mxu0 %v91
  %114 = vmatprep.subr.bf16.mxu0 0
  %115 = vmatpush2.bf16.msra.mxu0 0
  %116 = vmatprep.subr.bf16.mxu0 0
  %117 = vmatpush2.bf16.msra.mxu0 0
  %118 = vmatprep.subr.bf16.mxu0 0
  %119 = vmatpush2.bf16.msra.mxu0 0
  %120 = vmatprep.subr.bf16.mxu0 0
  %121 = vmatpush2.bf16.msra.mxu0 0
  %122 = vmatprep.subr.bf16.mxu0 0
  %123 = vmatpush2.bf16.msra.mxu0 0
  %124 = vmatprep.subr.bf16.mxu0 0
  %125 = vmatpush2.bf16.msra.mxu0 0
  %126 = vmatprep.subr.bf16.mxu0 0
  %127 = vmatpush2.bf16.msra.mxu0 0
  %128 = vmatprep.subr.bf16.mxu0 0
  %129 = vmatpush2.bf16.msra.mxu0 0
  %130 = vmatprep.mubr.bf16.mxu0 0
  %131 = vmatmul.mubr.bf16.gmra.mxu0 %v96
  %v132 = vpop.f32.mrf.mxu0
  %v133 = vadd.f32 %v81, %v132
  %v134 = vpop.f32.mrf.mxu0
  %v135 = vpop.f32.mrf.mxu0
  %v136 = vadd.f32 %v81, %v135
  %v137 = vpop.f32.mrf.mxu0
  %138 = vdwg.mxu0
  %v139 = vxor.u32 %v133, 2147483648
  %v140 = vxor.u32 %v136, 2147483648
  %v141 = vmul.f32 %v139, 1.442695
  %v142 = vpow.pop %v141
  %v143 = vmul.f32 %v140, 1.442695
  %v144 = vpow.pop %v143
  %v145 = vadd.f32 %v142, 1.0
  %v146 = vadd.f32 %v144, 1.0
  %v147 = vrcp.pop %v145
  %v148 = vmul.f32 1.0, %v147
  %v149 = vrcp.pop %v146
  %v150 = vmul.f32 1.0, %v149
  %153 = vrot.lane.b32.xlu0 %v148, 96
  %v154 = vpop.permute.xlu0 %153
  %155 = vrot.lane.b32.xlu0 %v150, 96
  %v156 = vpop.permute.xlu0 %155
  %v159 = vmul.f32 %v133, %v154
  %v160 = vmul.f32 %v136, %v156
  %v161 = vpack.c.bf16 %v160, %v159
  %v163 = vunpack.c.l.b16 %v161
  %v164 = vunpack.c.h.b16 %v161
  %v165 = vpack.c.b16 %v163, %v163
  %v166 = vpack.c.b16 %v164, %v164
  %vm169 = vcmask 257024
  %170 = vst.msk [vmem:[%s5] sm:$0xf] %vm169, %v165
  %171 = vst.msk [vmem:[%s5 + $0x4] sm:$0xf] %vm169, %v166
  // Predicated region
  $region22: #{acoustic_encoder_forward.24} parent=0 // pred_check
    _
  $region23: #{acoustic_encoder_forward.24} parent=0 // pred_check_branch
    %173 = sbr.rel (0) target = $region25
  $region24: #{acoustic_encoder_forward.24} parent=0 // pred_region
    _
  $region25: #{acoustic_encoder_forward.24} parent=0 // pred_fallthru
    _
  // Predicated region
  $region26: #{acoustic_encoder_forward.24} parent=0 // pred_check
    _
  $region27: #{acoustic_encoder_forward.24} parent=0 // pred_check_branch
    %175 = sbr.rel (0) target = $region29
  $region28: #{acoustic_encoder_forward.24} parent=0 // pred_region
    _
  $region29: #{acoustic_encoder_forward.24} parent=0 // pred_fallthru
    _

// kernel: acoustic_encoder_forward.23
$region0: #{acoustic_encoder_forward.23}
  #allocation0 [shape = 'u32[]', space=smem, size = 0x4, offset = 0x4, fixed_abs, tag = 'smem constant byte address 0x4 - core index']
  #allocation1 [shape = 'u32[144,128]{1,0:T(1,128)}', space=vmem, size = 0x12000, scoped, tag = 'internal scratch']
  #allocation2 [shape = 'bf16[8,32]{1,0:T(8,128)(2,1)}', space=vmem, size = 0x800, scoped, tag = 'scratch operand']
  %s0 = inlined_call_operand.vmem [shape: bf16[2,8,96], index: 0, kind: input, shape index: {}]
  %s1 = inlined_call_operand.vmem [shape: f32[2,1,8], index: 1, kind: input, shape index: {}]
  %s2 = inlined_call_operand.vmem [shape: bf16[32,32], index: 2, kind: input, shape index: {}]
  %s3 = inlined_call_operand.vmem [shape: f32[1,32], index: 3, kind: input, shape index: {}]
  %s4 = inlined_call_operand.vmem [shape: bf16[2,8,32], index: 4, kind: input, shape index: {}]
  %s5 = inlined_call_operand.vmem [shape: bf16[2,8,32], index: 5, kind: output, shape index: {}]
  %s6 = sld [smem:[#allocation0]]
  $region53: #{acoustic_encoder_forward.23} parent=0
    _
  %s8 = ssub.s32 1, %s6
  %s9 = scalar_select 0, %s8, %s6
  loop: start=0, step=1, limit=4
  $region2: #{acoustic_encoder_forward.23} parent=0 // loop_pre_header
    _
  $region3: #{acoustic_encoder_forward.23} parent=0 // loop_header
    %s11 = sphi 0, %s15
    %p12 = scmp.ge.s32.totalorder %s11, 4
    %s21 = sphi 0, %s23
    %s24 = sphi 0, %s21
    %s25 = sphi 0, %s24
    %s41 = sphi 0, %s25
    %s47 = sphi 0, %s49
    %s50 = sphi 0, %s47
    %s51 = sphi 0, %s50
    %s67 = sphi 0, %s51
    %s71 = sphi 0, %s71
    %s73 = sphi 0, %s71
    %s74 = sphi 0, %s73
    %s88 = sphi 0, %s74
    %s92 = sphi 0, %s92
    %s94 = sphi 0, %s92
    %s95 = sphi 0, %s94
    %s109 = sphi 0, %s95
    %s115 = sphi 0, %s117
    %s118 = sphi 0, %s115
    %s119 = sphi 0, %s118
    %s135 = sphi 0, %s119
    %s141 = sphi 0, %s143
    %s144 = sphi 0, %s141
    %s145 = sphi 0, %s144
    %s161 = sphi 0, %s145
  $region4: #{acoustic_encoder_forward.23} parent=0 // loop_header_branch
    %14 = sbr.rel (%p12) target = $region8
  $region5: #{acoustic_encoder_forward.23} parent=0 // loop_body
    %s16 = ssub.s32 %s11, 1
    %s17 = ssub.s32 %s11, 2
    %s18 = sadd.s32 %s11, 1
    %s19 = ssub.s32 %s11, %s18
    %p20 = scmp.eq.s32.totalorder %s19, 0
    %s22 = sadd.s32 %s21, 1
    %s23 = scalar_select %p20, %s21, %s22
    %p26 = pneg %p20
    %p27 = scmp.eq.s32.totalorder %s11, 1
    %p28 = por %p26, %p27
    %p29 = scmp.ne.s32.totalorder %s21, %s24
    %p30 = scmp.eq.s32.totalorder %s11, 0
    %p31 = por %p29, %p30
    %p32 = scmp.ne.s32.totalorder %s21, %s24
    %p33 = scmp.eq.s32.totalorder %s16, 1
    %p34 = por %p32, %p33
    %p35 = scmp.ne.s32.totalorder %s24, %s25
    %p36 = scmp.eq.s32.totalorder %s16, 0
    %p37 = por %p35, %p36
    %p38 = scmp.ne.s32.totalorder %s24, %s25
    %p39 = scmp.eq.s32.totalorder %s17, 1
    %p40 = por %p38, %p39
    %p42 = scmp.ne.s32.totalorder %s25, %s41
    %p43 = scmp.eq.s32.totalorder %s17, 0
    %p44 = por %p42, %p43
    %s45 = ssub.s32 %s11, %s18
    %p46 = scmp.eq.s32.totalorder %s45, 0
    %s48 = sadd.s32 %s47, 1
    %s49 = scalar_select %p46, %s47, %s48
    %p52 = pneg %p46
    %p53 = scmp.eq.s32.totalorder %s11, 1
    %p54 = por %p52, %p53
    %p55 = scmp.ne.s32.totalorder %s47, %s50
    %p56 = scmp.eq.s32.totalorder %s11, 0
    %p57 = por %p55, %p56
    %p58 = scmp.ne.s32.totalorder %s47, %s50
    %p59 = scmp.eq.s32.totalorder %s16, 1
    %p60 = por %p58, %p59
    %p61 = scmp.ne.s32.totalorder %s50, %s51
    %p62 = scmp.eq.s32.totalorder %s16, 0
    %p63 = por %p61, %p62
    %p64 = scmp.ne.s32.totalorder %s50, %s51
    %p65 = scmp.eq.s32.totalorder %s17, 1
    %p66 = por %p64, %p65
    %p68 = scmp.ne.s32.totalorder %s51, %s67
    %p69 = scmp.eq.s32.totalorder %s17, 0
    %p70 = por %p68, %p69
    %s72 = sadd.s32 %s71, 1
    %p75 = scmp.eq.s32.totalorder %s11, 1
    %p76 = scmp.ne.s32.totalorder %s71, %s73
    %p77 = scmp.eq.s32.totalorder %s11, 0
    %p78 = por %p76, %p77
    %p79 = scmp.ne.s32.totalorder %s71, %s73
    %p80 = scmp.eq.s32.totalorder %s16, 1
    %p81 = por %p79, %p80
    %p82 = scmp.ne.s32.totalorder %s73, %s74
    %p83 = scmp.eq.s32.totalorder %s16, 0
    %p84 = por %p82, %p83
    %p85 = scmp.ne.s32.totalorder %s73, %s74
    %p86 = scmp.eq.s32.totalorder %s17, 1
    %p87 = por %p85, %p86
    %p89 = scmp.ne.s32.totalorder %s74, %s88
    %p90 = scmp.eq.s32.totalorder %s17, 0
    %p91 = por %p89, %p90
    %s93 = sadd.s32 %s92, 1
    %p96 = scmp.eq.s32.totalorder %s11, 1
    %p97 = scmp.ne.s32.totalorder %s92, %s94
    %p98 = scmp.eq.s32.totalorder %s11, 0
    %p99 = por %p97, %p98
    %p100 = scmp.ne.s32.totalorder %s92, %s94
    %p101 = scmp.eq.s32.totalorder %s16, 1
    %p102 = por %p100, %p101
    %p103 = scmp.ne.s32.totalorder %s94, %s95
    %p104 = scmp.eq.s32.totalorder %s16, 0
    %p105 = por %p103, %p104
    %p106 = scmp.ne.s32.totalorder %s94, %s95
    %p107 = scmp.eq.s32.totalorder %s17, 1
    %p108 = por %p106, %p107
    %p110 = scmp.ne.s32.totalorder %s95, %s109
    %p111 = scmp.eq.s32.totalorder %s17, 0
    %p112 = por %p110, %p111
    %s113 = ssub.s32 %s11, %s18
    %p114 = scmp.eq.s32.totalorder %s113, 0
    %s116 = sadd.s32 %s115, 1
    %s117 = scalar_select %p114, %s115, %s116
    %p120 = pneg %p114
    %p121 = scmp.eq.s32.totalorder %s11, 1
    %p122 = por %p120, %p121
    %p123 = scmp.ne.s32.totalorder %s115, %s118
    %p124 = scmp.eq.s32.totalorder %s11, 0
    %p125 = por %p123, %p124
    %p126 = scmp.ne.s32.totalorder %s115, %s118
    %p127 = scmp.eq.s32.totalorder %s16, 1
    %p128 = por %p126, %p127
    %p129 = scmp.ne.s32.totalorder %s118, %s119
    %p130 = scmp.eq.s32.totalorder %s16, 0
    %p131 = por %p129, %p130
    %p132 = scmp.ne.s32.totalorder %s118, %s119
    %p133 = scmp.eq.s32.totalorder %s17, 1
    %p134 = por %p132, %p133
    %p136 = scmp.ne.s32.totalorder %s119, %s135
    %p137 = scmp.eq.s32.totalorder %s17, 0
    %p138 = por %p136, %p137
    %s139 = ssub.s32 %s11, %s18
    %p140 = scmp.eq.s32.totalorder %s139, 0
    %s142 = sadd.s32 %s141, 1
    %s143 = scalar_select %p140, %s141, %s142
    %p146 = pneg %p140
    %p147 = scmp.eq.s32.totalorder %s11, 1
    %p148 = por %p146, %p147
    %p149 = scmp.ne.s32.totalorder %s141, %s144
    %p150 = scmp.eq.s32.totalorder %s11, 0
    %p151 = por %p149, %p150
    %p152 = scmp.ne.s32.totalorder %s141, %s144
    %p153 = scmp.eq.s32.totalorder %s16, 1
    %p154 = por %p152, %p153
    %p155 = scmp.ne.s32.totalorder %s144, %s145
    %p156 = scmp.eq.s32.totalorder %s16, 0
    %p157 = por %p155, %p156
    %p158 = scmp.ne.s32.totalorder %s144, %s145
    %p159 = scmp.eq.s32.totalorder %s17, 1
    %p160 = por %p158, %p159
    %p162 = scmp.ne.s32.totalorder %s145, %s161
    %p163 = scmp.eq.s32.totalorder %s17, 0
    %p164 = por %p162, %p163
    %p165 = scmp.le.s32.totalorder 1, %s11
    %p166 = scmp.lt.s32.totalorder %s11, 3
    %p167 = pnand %p165, %p166
    %p168 = pneg %p167
    // Predicated region
    $region9: #{acoustic_encoder_forward.23} parent=5 // pred_check
      _
    $region10: #{acoustic_encoder_forward.23} parent=5 // pred_check_branch
      %170 = sbr.rel (%p167) target = $region12
    $region11: #{acoustic_encoder_forward.23} parent=5 // pred_region
      %s171 = ssub.s32 %s11, 1
      // Predicated region
      $region13: #{acoustic_encoder_forward.23} parent=11 // pred_check
        %p172 = pneg %p84
      $region14: #{acoustic_encoder_forward.23} parent=11 // pred_check_branch
        %174 = sbr.rel (%p172) target = $region16
      $region15: #{acoustic_encoder_forward.23} parent=11 // pred_region
        _
      $region16: #{acoustic_encoder_forward.23} parent=11 // pred_fallthru
        _
      // Predicated region
      $region17: #{acoustic_encoder_forward.23} parent=11 // pred_check
        %p175 = pneg %p105
      $region18: #{acoustic_encoder_forward.23} parent=11 // pred_check_branch
        %177 = sbr.rel (%p175) target = $region20
      $region19: #{acoustic_encoder_forward.23} parent=11 // pred_region
        _
      $region20: #{acoustic_encoder_forward.23} parent=11 // pred_fallthru
        _
    $region12: #{acoustic_encoder_forward.23} parent=5 // pred_fallthru
      _
    %p178 = scmp.lt.s32.totalorder %s11, 2
    // Predicated region
    $region21: #{acoustic_encoder_forward.23} parent=5 // pred_check
      %p179 = pneg %p178
    $region22: #{acoustic_encoder_forward.23} parent=5 // pred_check_branch
      %181 = sbr.rel (%p179) target = $region24
    $region23: #{acoustic_encoder_forward.23} parent=5 // pred_region
      // Predicated region
      $region25: #{acoustic_encoder_forward.23} parent=23 // pred_check
        %p182 = pneg %p31
      $region26: #{acoustic_encoder_forward.23} parent=23 // pred_check_branch
        %184 = sbr.rel (%p182) target = $region28
      $region27: #{acoustic_encoder_forward.23} parent=23 // pred_region
        %p185 = scmp.lt.s32.totalorder %s11, 1
        %s186 = scalar_select %p185, %s11, 1
        %s187 = smul.addr %s186, 4
        %s188 = scalar_lea.vmem %s0, %s187
      $region28: #{acoustic_encoder_forward.23} parent=23 // pred_fallthru
        _
      // Predicated region
      $region29: #{acoustic_encoder_forward.23} parent=23 // pred_check
        %p189 = pneg %p57
      $region30: #{acoustic_encoder_forward.23} parent=23 // pred_check_branch
        %191 = sbr.rel (%p189) target = $region32
      $region31: #{acoustic_encoder_forward.23} parent=23 // pred_region
        %p192 = scmp.lt.s32.totalorder %s11, 1
        %s193 = scalar_select %p192, %s11, 1
        %s194 = scalar_lea.vmem %s1, %s193
      $region32: #{acoustic_encoder_forward.23} parent=23 // pred_fallthru
        _
      // Predicated region
      $region33: #{acoustic_encoder_forward.23} parent=23 // pred_check
        %p195 = pneg %p125
      $region34: #{acoustic_encoder_forward.23} parent=23 // pred_check_branch
        %197 = sbr.rel (%p195) target = $region36
      $region35: #{acoustic_encoder_forward.23} parent=23 // pred_region
        %p198 = scmp.lt.s32.totalorder %s11, 1
        %s199 = scalar_select %p198, %s11, 1
        %s200 = smul.addr %s199, 4
        %s201 = scalar_lea.vmem %s4, %s200
      $region36: #{acoustic_encoder_forward.23} parent=23 // pred_fallthru
        _
    $region24: #{acoustic_encoder_forward.23} parent=5 // pred_fallthru
      _
    %p202 = scmp.le.s32.totalorder 1, %s11
    %p203 = scmp.lt.s32.totalorder %s11, 3
    %p204 = pnand %p202, %p203
    %p205 = pneg %p204
    // Predicated region
    $region37: #{acoustic_encoder_forward.23} parent=5 // pred_check
      _
    $region38: #{acoustic_encoder_forward.23} parent=5 // pred_check_branch
      %207 = sbr.rel (%p204) target = $region40
    $region39: #{acoustic_encoder_forward.23} parent=5 // pred_region
      %s208 = ssub.s32 %s11, 1
      %p209 = scmp.lt.s32.totalorder %s16, 1
      %s210 = scalar_select %p209, %s16, 1
      %s211 = smul.addr %s210, 4
      %s212 = scalar_lea.vmem %s0, %s211
      %p213 = pneg %p37
      %p214 = pneg %p34
      %p215 = scmp.lt.s32.totalorder %s16, 1
      %s216 = scalar_select %p215, %s16, 1
      %s217 = scalar_lea.vmem %s1, %s216
      %p218 = pneg %p63
      %p219 = pneg %p60
      %p220 = pneg %p84
      %p221 = pneg %p81
      %p222 = pneg %p105
      %p223 = pneg %p102
      %p224 = scmp.lt.s32.totalorder %s16, 1
      %s225 = scalar_select %p224, %s16, 1
      %s226 = smul.addr %s225, 4
      %s227 = scalar_lea.vmem %s4, %s226
      %p228 = pneg %p131
      %p229 = pneg %p128
      %p230 = pneg %p157
      %p231 = pneg %p154
      %p232 = scmp.lt.s32.totalorder %s16, 1
      %s233 = scalar_select %p232, %s16, 1
      %s234 = smul.addr %s233, 4
      %s235 = scalar_lea.vmem %s5, %s234
      %p236 = scmp.lt.s32.totalorder %s16, 1
      %s237 = scalar_select %p236, %s16, 1
      %s238 = smul.addr %s237, 4
      %s239 = scalar_lea.vmem %s0, %s238
      %p240 = scmp.lt.s32.totalorder %s16, 1
      %s241 = scalar_select %p240, %s16, 1
      %s242 = scalar_lea.vmem %s1, %s241
      %p243 = scmp.lt.s32.totalorder %s16, 1
      %s244 = scalar_select %p243, %s16, 1
      %s245 = smul.addr %s244, 4
      %s246 = scalar_lea.vmem %s4, %s245
      %p247 = scmp.lt.s32.totalorder %s16, 1
      %s248 = scalar_select %p247, %s16, 1
      %s249 = smul.addr %s248, 4
      %s250 = scalar_lea.vmem %s5, %s249
      %v252 = vld [vmem:[%s239] sm:$0xf]
      %v253 = vld [vmem:[%s242] sm:$0x1]
      %v255 = vunpack.c.l.b16 %v252
      %v256 = vpack.c.b16 %v255, %v255
      %257 = vrot.lane.b32.xlu0 %v256, 96
      %v258 = vpop.permute.xlu0 %257
      %vm259 = vcmask 31744
      %v261 = vsel %vm259, %v252, 0
      %v264 = vsel %vm259, %v258, 0
      %266 = vmatprep.subr.bf16.mxu0 0
      %267 = vmatpush1.bf16.xpose.msra.mxu0 0
      %268 = vmatprep.subr.bf16.mxu0 0
      %269 = vmatpush1.bf16.xpose.msra.mxu0 0
      %270 = vmatprep.subr.bf16.mxu0 0
      %271 = vmatpush1.bf16.xpose.msra.mxu0 0
      %272 = vmatprep.subr.bf16.mxu0 0
      %273 = vmatpush1.bf16.xpose.msra.mxu0 0
      %274 = vmatprep.subr.bf16.mxu0 0
      %275 = vmatpush1.bf16.xpose.msra.mxu0 0
      %276 = vmatprep.subr.bf16.mxu0 0
      %277 = vmatpush1.bf16.xpose.msra.mxu0 0
      %278 = vmatprep.subr.bf16.mxu0 0
      %279 = vmatpush1.bf16.xpose.msra.mxu0 0
      %280 = vmatprep.subr.bf16.mxu0 0
      %281 = vmatpush1.bf16.xpose.msra.mxu0 %v264
      %282 = vmatprep.subr.bf16.mxu0 0
      %283 = vmatpush2.bf16.xpose.msra.mxu0 0
      %284 = vmatprep.subr.bf16.mxu0 0
      %285 = vmatpush2.bf16.xpose.msra.mxu0 0
      %286 = vmatprep.subr.bf16.mxu0 0
      %287 = vmatpush2.bf16.xpose.msra.mxu0 0
      %288 = vmatprep.subr.bf16.mxu0 0
      %289 = vmatpush2.bf16.xpose.msra.mxu0 0
      %290 = vmatprep.subr.bf16.mxu0 0
      %291 = vmatpush2.bf16.xpose.msra.mxu0 0
      %292 = vmatprep.subr.bf16.mxu0 0
      %293 = vmatpush2.bf16.xpose.msra.mxu0 0
      %294 = vmatprep.subr.bf16.mxu0 0
      %295 = vmatpush2.bf16.xpose.msra.mxu0 0
      %296 = vmatprep.subr.bf16.mxu0 0
      %297 = vmatpush2.bf16.xpose.msra.mxu0 0
      %298 = vmatprep.mubr.bf16.mxu0 0
      %299 = vmatmul.mubr.bf16.gmra.mxu0 %v261
      %v300 = vpop.f32.mrf.mxu0
      %v301 = vadd.f32 0.0, %v300
      %v302 = vpop.f32.mrf.mxu0
      %v303 = vpop.f32.mrf.mxu0
      %v304 = vpop.f32.mrf.mxu0
      %305 = vdwg.mxu0
      %v306 = vmul.f32 %v301, 0.5
      %v308 = vlaneseq
      %v309 = vshrl.u32 %v308, 7
      %v310 = vsub.s32 0, %v309
      %v311 = vrot.slane %v253, %v310
      %v313 = vadd.f32 %v306, %v311
      %vm314 = vcmask 64512
      %v315 = vsel %vm314, %v313, -inf
      %316 = vmax.xlane.f32.xlu0 %v315
      %v317 = vpop.xlane.xlu0 %316
      %v318 = vsub.f32 %v313, %v317
      %v319 = vmul.f32 %v318, 1.442695
      %v320 = vpow.pop %v319
      %v321 = vsel %vm314, %v320, 0.0
      %322 = vadd.xlane.f32.xlu0 %v321
      %v323 = vpop.xlane.xlu0 %322
      %v324 = vrcp.pop %v323
      %v325 = vmul.f32 %v320, %v324
      %v326 = vpack.c.bf16 %v325, %v325
      %327 = vrot.lane.b32.xlu0 %v256, 64
      %v328 = vpop.permute.xlu0 %327
      %v330 = vsel %vm314, %v326, 0
      %vm332 = vcmask 1043456
      %v334 = vsel %vm332, %v328, 0
      %336 = vmatprep.subr.bf16.mxu0 0
      %337 = vmatpush1.bf16.msra.mxu0 0
      %338 = vmatprep.subr.bf16.mxu0 0
      %339 = vmatpush1.bf16.msra.mxu0 0
      %340 = vmatprep.subr.bf16.mxu0 0
      %341 = vmatpush1.bf16.msra.mxu0 0
      %342 = vmatprep.subr.bf16.mxu0 0
      %343 = vmatpush1.bf16.msra.mxu0 0
      %344 = vmatprep.subr.bf16.mxu0 0
      %345 = vmatpush1.bf16.msra.mxu0 0
      %346 = vmatprep.subr.bf16.mxu0 0
      %347 = vmatpush1.bf16.msra.mxu0 0
      %348 = vmatprep.subr.bf16.mxu0 0
      %349 = vmatpush1.bf16.msra.mxu0 0
      %350 = vmatprep.subr.bf16.mxu0 0
      %351 = vmatpush1.bf16.msra.mxu0 %v334
      %352 = vmatprep.subr.bf16.mxu0 0
      %353 = vmatpush2.bf16.msra.mxu0 0
      %354 = vmatprep.subr.bf16.mxu0 0
      %355 = vmatpush2.bf16.msra.mxu0 0
      %356 = vmatprep.subr.bf16.mxu0 0
      %357 = vmatpush2.bf16.msra.mxu0 0
      %358 = vmatprep.subr.bf16.mxu0 0
      %359 = vmatpush2.bf16.msra.mxu0 0
      %360 = vmatprep.subr.bf16.mxu0 0
      %361 = vmatpush2.bf16.msra.mxu0 0
      %362 = vmatprep.subr.bf16.mxu0 0
      %363 = vmatpush2.bf16.msra.mxu0 0
      %364 = vmatprep.subr.bf16.mxu0 0
      %365 = vmatpush2.bf16.msra.mxu0 0
      %366 = vmatprep.subr.bf16.mxu0 0
      %367 = vmatpush2.bf16.msra.mxu0 0
      %368 = vmatprep.mubr.bf16.mxu0 0
      %369 = vmatmul.mubr.bf16.gmra.mxu0 %v330
      %v370 = vpop.f32.mrf.mxu0
      %v371 = vadd.f32 0.0, %v370
      %v372 = vpop.f32.mrf.mxu0
      %v373 = vpop.f32.mrf.mxu0
      %v374 = vpop.f32.mrf.mxu0
      %375 = vdwg.mxu0
      %v376 = vpack.c.bf16 %v371, %v371
      %vm377 = vcmask 27648
      %378 = vst.msk [vmem:[#allocation2] sm:$0xf] %vm377, %v376
      %379 = vrot.lane.b32.xlu0 %v256, 124
      %v380 = vpop.permute.xlu0 %379
      %381 = vrot.lane.b32.xlu0 %v256, 92
      %v382 = vpop.permute.xlu0 %381
      %v384 = vsel %vm259, %v380, 0
      %v387 = vsel %vm259, %v382, 0
      %389 = vmatprep.subr.bf16.mxu0 0
      %390 = vmatpush1.bf16.xpose.msra.mxu0 0
      %391 = vmatprep.subr.bf16.mxu0 0
      %392 = vmatpush1.bf16.xpose.msra.mxu0 0
      %393 = vmatprep.subr.bf16.mxu0 0
      %394 = vmatpush1.bf16.xpose.msra.mxu0 0
      %395 = vmatprep.subr.bf16.mxu0 0
      %396 = vmatpush1.bf16.xpose.msra.mxu0 0
      %397 = vmatprep.subr.bf16.mxu0 0
      %398 = vmatpush1.bf16.xpose.msra.mxu0 0
      %399 = vmatprep.subr.bf16.mxu0 0
      %400 = vmatpush1.bf16.xpose.msra.mxu0 0
      %401 = vmatprep.subr.bf16.mxu0 0
      %402 = vmatpush1.bf16.xpose.msra.mxu0 0
      %403 = vmatprep.subr.bf16.mxu0 0
      %404 = vmatpush1.bf16.xpose.msra.mxu0 %v387
      %405 = vmatprep.subr.bf16.mxu0 0
      %406 = vmatpush2.bf16.xpose.msra.mxu0 0
      %407 = vmatprep.subr.bf16.mxu0 0
      %408 = vmatpush2.bf16.xpose.msra.mxu0 0
      %409 = vmatprep.subr.bf16.mxu0 0
      %410 = vmatpush2.bf16.xpose.msra.mxu0 0
      %411 = vmatprep.subr.bf16.mxu0 0
      %412 = vmatpush2.bf16.xpose.msra.mxu0 0
      %413 = vmatprep.subr.bf16.mxu0 0
      %414 = vmatpush2.bf16.xpose.msra.mxu0 0
      %415 = vmatprep.subr.bf16.mxu0 0
      %416 = vmatpush2.bf16.xpose.msra.mxu0 0
      %417 = vmatprep.subr.bf16.mxu0 0
      %418 = vmatpush2.bf16.xpose.msra.mxu0 0
      %419 = vmatprep.subr.bf16.mxu0 0
      %420 = vmatpush2.bf16.xpose.msra.mxu0 0
      %421 = vmatprep.mubr.bf16.mxu0 0
      %422 = vmatmul.mubr.bf16.gmra.mxu0 %v384
      %v423 = vpop.f32.mrf.mxu0
      %v424 = vadd.f32 0.0, %v423
      %v425 = vpop.f32.mrf.mxu0
      %v426 = vpop.f32.mrf.mxu0
      %v427 = vpop.f32.mrf.mxu0
      %428 = vdwg.mxu0
      %v429 = vmul.f32 %v424, 0.5
      %v430 = vadd.f32 %v429, %v311
      %v431 = vsel %vm314, %v430, -inf
      %432 = vmax.xlane.f32.xlu0 %v431
      %v433 = vpop.xlane.xlu0 %432
      %v434 = vsub.f32 %v430, %v433
      %v435 = vmul.f32 %v434, 1.442695
      %v436 = vpow.pop %v435
      %v437 = vsel %vm314, %v436, 0.0
      %438 = vadd.xlane.f32.xlu0 %v437
      %v439 = vpop.xlane.xlu0 %438
      %v440 = vrcp.pop %v439
      %v441 = vmul.f32 %v436, %v440
      %v442 = vpack.c.bf16 %v441, %v441
      %443 = vrot.lane.b32.xlu0 %v256, 60
      %v444 = vpop.permute.xlu0 %443
      %v446 = vsel %vm314, %v442, 0
      %v449 = vsel %vm332, %v444, 0
      %451 = vmatprep.subr.bf16.mxu0 0
      %452 = vmatpush1.bf16.msra.mxu0 0
      %453 = vmatprep.subr.bf16.mxu0 0
      %454 = vmatpush1.bf16.msra.mxu0 0
      %455 = vmatprep.subr.bf16.mxu0 0
      %456 = vmatpush1.bf16.msra.mxu0 0
      %457 = vmatprep.subr.bf16.mxu0 0
      %458 = vmatpush1.bf16.msra.mxu0 0
      %459 = vmatprep.subr.bf16.mxu0 0
      %460 = vmatpush1.bf16.msra.mxu0 0
      %461 = vmatprep.subr.bf16.mxu0 0
      %462 = vmatpush1.bf16.msra.mxu0 0
      %463 = vmatprep.subr.bf16.mxu0 0
      %464 = vmatpush1.bf16.msra.mxu0 0
      %465 = vmatprep.subr.bf16.mxu0 0
      %466 = vmatpush1.bf16.msra.mxu0 %v449
      %467 = vmatprep.subr.bf16.mxu0 0
      %468 = vmatpush2.bf16.msra.mxu0 0
      %469 = vmatprep.subr.bf16.mxu0 0
      %470 = vmatpush2.bf16.msra.mxu0 0
      %471 = vmatprep.subr.bf16.mxu0 0
      %472 = vmatpush2.bf16.msra.mxu0 0
      %473 = vmatprep.subr.bf16.mxu0 0
      %474 = vmatpush2.bf16.msra.mxu0 0
      %475 = vmatprep.subr.bf16.mxu0 0
      %476 = vmatpush2.bf16.msra.mxu0 0
      %477 = vmatprep.subr.bf16.mxu0 0
      %478 = vmatpush2.bf16.msra.mxu0 0
      %479 = vmatprep.subr.bf16.mxu0 0
      %480 = vmatpush2.bf16.msra.mxu0 0
      %481 = vmatprep.subr.bf16.mxu0 0
      %482 = vmatpush2.bf16.msra.mxu0 0
      %483 = vmatprep.mubr.bf16.mxu0 0
      %484 = vmatmul.mubr.bf16.gmra.mxu0 %v446
      %v485 = vpop.f32.mrf.mxu0
      %v486 = vadd.f32 0.0, %v485
      %v487 = vpop.f32.mrf.mxu0
      %v488 = vpop.f32.mrf.mxu0
      %v489 = vpop.f32.mrf.mxu0
      %490 = vdwg.mxu0
      %v491 = vpack.c.bf16 %v486, %v486
      %v493 = vunpack.c.l.b16 %v491
      %v494 = vpack.c.b16 %v493, %v493
      %495 = vrot.lane.b32.xlu0 %v494, 4
      %v496 = vpop.permute.xlu0 %495
      %vm498 = vcmask 60448
      %499 = vst.msk [vmem:[#allocation2] sm:$0xf] %vm498, %v496
      %500 = vrot.lane.b32.xlu0 %v256, 120
      %v501 = vpop.permute.xlu0 %500
      %502 = vrot.lane.b32.xlu0 %v256, 88
      %v503 = vpop.permute.xlu0 %502
      %v505 = vsel %vm259, %v501, 0
      %v508 = vsel %vm259, %v503, 0
      %510 = vmatprep.subr.bf16.mxu0 0
      %511 = vmatpush1.bf16.xpose.msra.mxu0 0
      %512 = vmatprep.subr.bf16.mxu0 0
      %513 = vmatpush1.bf16.xpose.msra.mxu0 0
      %514 = vmatprep.subr.bf16.mxu0 0
      %515 = vmatpush1.bf16.xpose.msra.mxu0 0
      %516 = vmatprep.subr.bf16.mxu0 0
      %517 = vmatpush1.bf16.xpose.msra.mxu0 0
      %518 = vmatprep.subr.bf16.mxu0 0
      %519 = vmatpush1.bf16.xpose.msra.mxu0 0
      %520 = vmatprep.subr.bf16.mxu0 0
      %521 = vmatpush1.bf16.xpose.msra.mxu0 0
      %522 = vmatprep.subr.bf16.mxu0 0
      %523 = vmatpush1.bf16.xpose.msra.mxu0 0
      %524 = vmatprep.subr.bf16.mxu0 0
      %525 = vmatpush1.bf16.xpose.msra.mxu0 %v508
      %526 = vmatprep.subr.bf16.mxu0 0
      %527 = vmatpush2.bf16.xpose.msra.mxu0 0
      %528 = vmatprep.subr.bf16.mxu0 0
      %529 = vmatpush2.bf16.xpose.msra.mxu0 0
      %530 = vmatprep.subr.bf16.mxu0 0
      %531 = vmatpush2.bf16.xpose.msra.mxu0 0
      %532 = vmatprep.subr.bf16.mxu0 0
      %533 = vmatpush2.bf16.xpose.msra.mxu0 0
      %534 = vmatprep.subr.bf16.mxu0 0
      %535 = vmatpush2.bf16.xpose.msra.mxu0 0
      %536 = vmatprep.subr.bf16.mxu0 0
      %537 = vmatpush2.bf16.xpose.msra.mxu0 0
      %538 = vmatprep.subr.bf16.mxu0 0
      %539 = vmatpush2.bf16.xpose.msra.mxu0 0
      %540 = vmatprep.subr.bf16.mxu0 0
      %541 = vmatpush2.bf16.xpose.msra.mxu0 0
      %542 = vmatprep.mubr.bf16.mxu0 0
      %543 = vmatmul.mubr.bf16.gmra.mxu0 %v505
      %v544 = vpop.f32.mrf.mxu0
      %v545 = vadd.f32 0.0, %v544
      %v546 = vpop.f32.mrf.mxu0
      %v547 = vpop.f32.mrf.mxu0
      %v548 = vpop.f32.mrf.mxu0
      %549 = vdwg.mxu0
      %v550 = vmul.f32 %v545, 0.5
      %v551 = vadd.f32 %v550, %v311
      %v552 = vsel %vm314, %v551, -inf
      %553 = vmax.xlane.f32.xlu0 %v552
      %v554 = vpop.xlane.xlu0 %553
      %v555 = vsub.f32 %v551, %v554
      %v556 = vmul.f32 %v555, 1.442695
      %v557 = vpow.pop %v556
      %v558 = vsel %vm314, %v557, 0.0
      %559 = vadd.xlane.f32.xlu0 %v558
      %v560 = vpop.xlane.xlu0 %559
      %v561 = vrcp.pop %v560
      %v562 = vmul.f32 %v557, %v561
      %v563 = vpack.c.bf16 %v562, %v562
      %564 = vrot.lane.b32.xlu0 %v256, 56
      %v565 = vpop.permute.xlu0 %564
      %v567 = vsel %vm314, %v563, 0
      %v570 = vsel %vm332, %v565, 0
      %572 = vmatprep.subr.bf16.mxu0 0
      %573 = vmatpush1.bf16.msra.mxu0 0
      %574 = vmatprep.subr.bf16.mxu0 0
      %575 = vmatpush1.bf16.msra.mxu0 0
      %576 = vmatprep.subr.bf16.mxu0 0
      %577 = vmatpush1.bf16.msra.mxu0 0
      %578 = vmatprep.subr.bf16.mxu0 0
      %579 = vmatpush1.bf16.msra.mxu0 0
      %580 = vmatprep.subr.bf16.mxu0 0
      %581 = vmatpush1.bf16.msra.mxu0 0
      %582 = vmatprep.subr.bf16.mxu0 0
      %583 = vmatpush1.bf16.msra.mxu0 0
      %584 = vmatprep.subr.bf16.mxu0 0
      %585 = vmatpush1.bf16.msra.mxu0 0
      %586 = vmatprep.subr.bf16.mxu0 0
      %587 = vmatpush1.bf16.msra.mxu0 %v570
      %588 = vmatprep.subr.bf16.mxu0 0
      %589 = vmatpush2.bf16.msra.mxu0 0
      %590 = vmatprep.subr.bf16.mxu0 0
      %591 = vmatpush2.bf16.msra.mxu0 0
      %592 = vmatprep.subr.bf16.mxu0 0
      %593 = vmatpush2.bf16.msra.mxu0 0
      %594 = vmatprep.subr.bf16.mxu0 0
      %595 = vmatpush2.bf16.msra.mxu0 0
      %596 = vmatprep.subr.bf16.mxu0 0
      %597 = vmatpush2.bf16.msra.mxu0 0
      %598 = vmatprep.subr.bf16.mxu0 0
      %599 = vmatpush2.bf16.msra.mxu0 0
      %600 = vmatprep.subr.bf16.mxu0 0
      %601 = vmatpush2.bf16.msra.mxu0 0
      %602 = vmatprep.subr.bf16.mxu0 0
      %603 = vmatpush2.bf16.msra.mxu0 0
      %604 = vmatprep.mubr.bf16.mxu0 0
      %605 = vmatmul.mubr.bf16.gmra.mxu0 %v567
      %v606 = vpop.f32.mrf.mxu0
      %v607 = vadd.f32 0.0, %v606
      %v608 = vpop.f32.mrf.mxu0
      %v609 = vpop.f32.mrf.mxu0
      %v610 = vpop.f32.mrf.mxu0
      %611 = vdwg.mxu0
      %v612 = vpack.c.bf16 %v607, %v607
      %v614 = vunpack.c.l.b16 %v612
      %v615 = vpack.c.b16 %v614, %v614
      %616 = vrot.lane.b32.xlu0 %v615, 8
      %v617 = vpop.permute.xlu0 %616
      %vm619 = vcmask 93248
      %620 = vst.msk [vmem:[#allocation2] sm:$0xf] %vm619, %v617
      %621 = vrot.lane.b32.xlu0 %v256, 116
      %v622 = vpop.permute.xlu0 %621
      %623 = vrot.lane.b32.xlu0 %v256, 84
      %v624 = vpop.permute.xlu0 %623
      %v626 = vsel %vm259, %v622, 0
      %v629 = vsel %vm259, %v624, 0
      %631 = vmatprep.subr.bf16.mxu0 0
      %632 = vmatpush1.bf16.xpose.msra.mxu0 0
      %633 = vmatprep.subr.bf16.mxu0 0
      %634 = vmatpush1.bf16.xpose.msra.mxu0 0
      %635 = vmatprep.subr.bf16.mxu0 0
      %636 = vmatpush1.bf16.xpose.msra.mxu0 0
      %637 = vmatprep.subr.bf16.mxu0 0
      %638 = vmatpush1.bf16.xpose.msra.mxu0 0
      %639 = vmatprep.subr.bf16.mxu0 0
      %640 = vmatpush1.bf16.xpose.msra.mxu0 0
      %641 = vmatprep.subr.bf16.mxu0 0
      %642 = vmatpush1.bf16.xpose.msra.mxu0 0
      %643 = vmatprep.subr.bf16.mxu0 0
      %644 = vmatpush1.bf16.xpose.msra.mxu0 0
      %645 = vmatprep.subr.bf16.mxu0 0
      %646 = vmatpush1.bf16.xpose.msra.mxu0 %v629
      %647 = vmatprep.subr.bf16.mxu0 0
      %648 = vmatpush2.bf16.xpose.msra.mxu0 0
      %649 = vmatprep.subr.bf16.mxu0 0
      %650 = vmatpush2.bf16.xpose.msra.mxu0 0
      %651 = vmatprep.subr.bf16.mxu0 0
      %652 = vmatpush2.bf16.xpose.msra.mxu0 0
      %653 = vmatprep.subr.bf16.mxu0 0
      %654 = vmatpush2.bf16.xpose.msra.mxu0 0
      %655 = vmatprep.subr.bf16.mxu0 0
      %656 = vmatpush2.bf16.xpose.msra.mxu0 0
      %657 = vmatprep.subr.bf16.mxu0 0
      %658 = vmatpush2.bf16.xpose.msra.mxu0 0
      %659 = vmatprep.subr.bf16.mxu0 0
      %660 = vmatpush2.bf16.xpose.msra.mxu0 0
      %661 = vmatprep.subr.bf16.mxu0 0
      %662 = vmatpush2.bf16.xpose.msra.mxu0 0
      %663 = vmatprep.mubr.bf16.mxu0 0
      %664 = vmatmul.mubr.bf16.gmra.mxu0 %v626
      %v665 = vpop.f32.mrf.mxu0
      %v666 = vadd.f32 0.0, %v665
      %v667 = vpop.f32.mrf.mxu0
      %v668 = vpop.f32.mrf.mxu0
      %v669 = vpop.f32.mrf.mxu0
      %670 = vdwg.mxu0
      %v671 = vmul.f32 %v666, 0.5
      %v672 = vadd.f32 %v671, %v311
      %v673 = vsel %vm314, %v672, -inf
      %674 = vmax.xlane.f32.xlu0 %v673
      %v675 = vpop.xlane.xlu0 %674
      %v676 = vsub.f32 %v672, %v675
      %v677 = vmul.f32 %v676, 1.442695
      %v678 = vpow.pop %v677
      %v679 = vsel %vm314, %v678, 0.0
      %680 = vadd.xlane.f32.xlu0 %v679
      %v681 = vpop.xlane.xlu0 %680
      %v682 = vrcp.pop %v681
      %v683 = vmul.f32 %v678, %v682
      %v684 = vpack.c.bf16 %v683, %v683
      %685 = vrot.lane.b32.xlu0 %v256, 52
      %v686 = vpop.permute.xlu0 %685
      %v688 = vsel %vm314, %v684, 0
      %v691 = vsel %vm332, %v686, 0
      %693 = vmatprep.subr.bf16.mxu0 0
      %694 = vmatpush1.bf16.msra.mxu0 0
      %695 = vmatprep.subr.bf16.mxu0 0
      %696 = vmatpush1.bf16.msra.mxu0 0
      %697 = vmatprep.subr.bf16.mxu0 0
      %698 = vmatpush1.bf16.msra.mxu0 0
      %699 = vmatprep.subr.bf16.mxu0 0
      %700 = vmatpush1.bf16.msra.mxu0 0
      %701 = vmatprep.subr.bf16.mxu0 0
      %702 = vmatpush1.bf16.msra.mxu0 0
      %703 = vmatprep.subr.bf16.mxu0 0
      %704 = vmatpush1.bf16.msra.mxu0 0
      %705 = vmatprep.subr.bf16.mxu0 0
      %706 = vmatpush1.bf16.msra.mxu0 0
      %707 = vmatprep.subr.bf16.mxu0 0
      %708 = vmatpush1.bf16.msra.mxu0 %v691
      %709 = vmatprep.subr.bf16.mxu0 0
      %710 = vmatpush2.bf16.msra.mxu0 0
      %711 = vmatprep.subr.bf16.mxu0 0
      %712 = vmatpush2.bf16.msra.mxu0 0
      %713 = vmatprep.subr.bf16.mxu0 0
      %714 = vmatpush2.bf16.msra.mxu0 0
      %715 = vmatprep.subr.bf16.mxu0 0
      %716 = vmatpush2.bf16.msra.mxu0 0
      %717 = vmatprep.subr.bf16.mxu0 0
      %718 = vmatpush2.bf16.msra.mxu0 0
      %719 = vmatprep.subr.bf16.mxu0 0
      %720 = vmatpush2.bf16.msra.mxu0 0
      %721 = vmatprep.subr.bf16.mxu0 0
      %722 = vmatpush2.bf16.msra.mxu0 0
      %723 = vmatprep.subr.bf16.mxu0 0
      %724 = vmatpush2.bf16.msra.mxu0 0
      %725 = vmatprep.mubr.bf16.mxu0 0
      %726 = vmatmul.mubr.bf16.gmra.mxu0 %v688
      %v727 = vpop.f32.mrf.mxu0
      %v728 = vadd.f32 0.0, %v727
      %v729 = vpop.f32.mrf.mxu0
      %v730 = vpop.f32.mrf.mxu0
      %v731 = vpop.f32.mrf.mxu0
      %732 = vdwg.mxu0
      %v733 = vpack.c.bf16 %v728, %v728
      %v735 = vunpack.c.l.b16 %v733
      %v736 = vpack.c.b16 %v735, %v735
      %737 = vrot.lane.b32.xlu0 %v736, 12
      %v738 = vpop.permute.xlu0 %737
      %vm740 = vcmask 126048
      %741 = vst.msk [vmem:[#allocation2] sm:$0xf] %vm740, %v738
      %742 = vrot.lane.b32.xlu0 %v256, 112
      %v743 = vpop.permute.xlu0 %742
      %744 = vrot.lane.b32.xlu0 %v256, 80
      %v745 = vpop.permute.xlu0 %744
      %v747 = vsel %vm259, %v743, 0
      %v750 = vsel %vm259, %v745, 0
      %752 = vmatprep.subr.bf16.mxu0 0
      %753 = vmatpush1.bf16.xpose.msra.mxu0 0
      %754 = vmatprep.subr.bf16.mxu0 0
      %755 = vmatpush1.bf16.xpose.msra.mxu0 0
      %756 = vmatprep.subr.bf16.mxu0 0
      %757 = vmatpush1.bf16.xpose.msra.mxu0 0
      %758 = vmatprep.subr.bf16.mxu0 0
      %759 = vmatpush1.bf16.xpose.msra.mxu0 0
      %760 = vmatprep.subr.bf16.mxu0 0
      %761 = vmatpush1.bf16.xpose.msra.mxu0 0
      %762 = vmatprep.subr.bf16.mxu0 0
      %763 = vmatpush1.bf16.xpose.msra.mxu0 0
      %764 = vmatprep.subr.bf16.mxu0 0
      %765 = vmatpush1.bf16.xpose.msra.mxu0 0
      %766 = vmatprep.subr.bf16.mxu0 0
      %767 = vmatpush1.bf16.xpose.msra.mxu0 %v750
      %768 = vmatprep.subr.bf16.mxu0 0
      %769 = vmatpush2.bf16.xpose.msra.mxu0 0
      %770 = vmatprep.subr.bf16.mxu0 0
      %771 = vmatpush2.bf16.xpose.msra.mxu0 0
      %772 = vmatprep.subr.bf16.mxu0 0
      %773 = vmatpush2.bf16.xpose.msra.mxu0 0
      %774 = vmatprep.subr.bf16.mxu0 0
      %775 = vmatpush2.bf16.xpose.msra.mxu0 0
      %776 = vmatprep.subr.bf16.mxu0 0
      %777 = vmatpush2.bf16.xpose.msra.mxu0 0
      %778 = vmatprep.subr.bf16.mxu0 0
      %779 = vmatpush2.bf16.xpose.msra.mxu0 0
      %780 = vmatprep.subr.bf16.mxu0 0
      %781 = vmatpush2.bf16.xpose.msra.mxu0 0
      %782 = vmatprep.subr.bf16.mxu0 0
      %783 = vmatpush2.bf16.xpose.msra.mxu0 0
      %784 = vmatprep.mubr.bf16.mxu0 0
      %785 = vmatmul.mubr.bf16.gmra.mxu0 %v747
      %v786 = vpop.f32.mrf.mxu0
      %v787 = vadd.f32 0.0, %v786
      %v788 = vpop.f32.mrf.mxu0
      %v789 = vpop.f32.mrf.mxu0
      %v790 = vpop.f32.mrf.mxu0
      %791 = vdwg.mxu0
      %v792 = vmul.f32 %v787, 0.5
      %v793 = vadd.f32 %v792, %v311
      %v794 = vsel %vm314, %v793, -inf
      %795 = vmax.xlane.f32.xlu0 %v794
      %v796 = vpop.xlane.xlu0 %795
      %v797 = vsub.f32 %v793, %v796
      %v798 = vmul.f32 %v797, 1.442695
      %v799 = vpow.pop %v798
      %v800 = vsel %vm314, %v799, 0.0
      %801 = vadd.xlane.f32.xlu0 %v800
      %v802 = vpop.xlane.xlu0 %801
      %v803 = vrcp.pop %v802
      %v804 = vmul.f32 %v799, %v803
      %v805 = vpack.c.bf16 %v804, %v804
      %806 = vrot.lane.b32.xlu0 %v256, 48
      %v807 = vpop.permute.xlu0 %806
      %v809 = vsel %vm314, %v805, 0
      %v812 = vsel %vm332, %v807, 0
      %814 = vmatprep.subr.bf16.mxu0 0
      %815 = vmatpush1.bf16.msra.mxu0 0
      %816 = vmatprep.subr.bf16.mxu0 0
      %817 = vmatpush1.bf16.msra.mxu0 0
      %818 = vmatprep.subr.bf16.mxu0 0
      %819 = vmatpush1.bf16.msra.mxu0 0
      %820 = vmatprep.subr.bf16.mxu0 0
      %821 = vmatpush1.bf16.msra.mxu0 0
      %822 = vmatprep.subr.bf16.mxu0 0
      %823 = vmatpush1.bf16.msra.mxu0 0
      %824 = vmatprep.subr.bf16.mxu0 0
      %825 = vmatpush1.bf16.msra.mxu0 0
      %826 = vmatprep.subr.bf16.mxu0 0
      %827 = vmatpush1.bf16.msra.mxu0 0
      %828 = vmatprep.subr.bf16.mxu0 0
      %829 = vmatpush1.bf16.msra.mxu0 %v812
      %830 = vmatprep.subr.bf16.mxu0 0
      %831 = vmatpush2.bf16.msra.mxu0 0
      %832 = vmatprep.subr.bf16.mxu0 0
      %833 = vmatpush2.bf16.msra.mxu0 0
      %834 = vmatprep.subr.bf16.mxu0 0
      %835 = vmatpush2.bf16.msra.mxu0 0
      %836 = vmatprep.subr.bf16.mxu0 0
      %837 = vmatpush2.bf16.msra.mxu0 0
      %838 = vmatprep.subr.bf16.mxu0 0
      %839 = vmatpush2.bf16.msra.mxu0 0
      %840 = vmatprep.subr.bf16.mxu0 0
      %841 = vmatpush2.bf16.msra.mxu0 0
      %842 = vmatprep.subr.bf16.mxu0 0
      %843 = vmatpush2.bf16.msra.mxu0 0
      %844 = vmatprep.subr.bf16.mxu0 0
      %845 = vmatpush2.bf16.msra.mxu0 0
      %846 = vmatprep.mubr.bf16.mxu0 0
      %847 = vmatmul.mubr.bf16.gmra.mxu0 %v809
      %v848 = vpop.f32.mrf.mxu0
      %v849 = vadd.f32 0.0, %v848
      %v850 = vpop.f32.mrf.mxu0
      %v851 = vpop.f32.mrf.mxu0
      %v852 = vpop.f32.mrf.mxu0
      %853 = vdwg.mxu0
      %v854 = vpack.c.bf16 %v849, %v849
      %v856 = vunpack.c.l.b16 %v854
      %v857 = vpack.c.b16 %v856, %v856
      %858 = vrot.lane.b32.xlu0 %v857, 16
      %v859 = vpop.permute.xlu0 %858
      %vm861 = vcmask 158848
      %862 = vst.msk [vmem:[#allocation2] sm:$0xf] %vm861, %v859
      %863 = vrot.lane.b32.xlu0 %v256, 108
      %v864 = vpop.permute.xlu0 %863
      %865 = vrot.lane.b32.xlu0 %v256, 76
      %v866 = vpop.permute.xlu0 %865
      %v868 = vsel %vm259, %v864, 0
      %v871 = vsel %vm259, %v866, 0
      %873 = vmatprep.subr.bf16.mxu0 0
      %874 = vmatpush1.bf16.xpose.msra.mxu0 0
      %875 = vmatprep.subr.bf16.mxu0 0
      %876 = vmatpush1.bf16.xpose.msra.mxu0 0
      %877 = vmatprep.subr.bf16.mxu0 0
      %878 = vmatpush1.bf16.xpose.msra.mxu0 0
      %879 = vmatprep.subr.bf16.mxu0 0
      %880 = vmatpush1.bf16.xpose.msra.mxu0 0
      %881 = vmatprep.subr.bf16.mxu0 0
      %882 = vmatpush1.bf16.xpose.msra.mxu0 0
      %883 = vmatprep.subr.bf16.mxu0 0
      %884 = vmatpush1.bf16.xpose.msra.mxu0 0
      %885 = vmatprep.subr.bf16.mxu0 0
      %886 = vmatpush1.bf16.xpose.msra.mxu0 0
      %887 = vmatprep.subr.bf16.mxu0 0
      %888 = vmatpush1.bf16.xpose.msra.mxu0 %v871
      %889 = vmatprep.subr.bf16.mxu0 0
      %890 = vmatpush2.bf16.xpose.msra.mxu0 0
      %891 = vmatprep.subr.bf16.mxu0 0
      %892 = vmatpush2.bf16.xpose.msra.mxu0 0
      %893 = vmatprep.subr.bf16.mxu0 0
      %894 = vmatpush2.bf16.xpose.msra.mxu0 0
      %895 = vmatprep.subr.bf16.mxu0 0
      %896 = vmatpush2.bf16.xpose.msra.mxu0 0
      %897 = vmatprep.subr.bf16.mxu0 0
      %898 = vmatpush2.bf16.xpose.msra.mxu0 0
      %899 = vmatprep.subr.bf16.mxu0 0
      %900 = vmatpush2.bf16.xpose.msra.mxu0 0
      %901 = vmatprep.subr.bf16.mxu0 0
      %902 = vmatpush2.bf16.xpose.msra.mxu0 0
      %903 = vmatprep.subr.bf16.mxu0 0
      %904 = vmatpush2.bf16.xpose.msra.mxu0 0
      %905 = vmatprep.mubr.bf16.mxu0 0
      %906 = vmatmul.mubr.bf16.gmra.mxu0 %v868
      %v907 = vpop.f32.mrf.mxu0
      %v908 = vadd.f32 0.0, %v907
      %v909 = vpop.f32.mrf.mxu0
      %v910 = vpop.f32.mrf.mxu0
      %v911 = vpop.f32.mrf.mxu0
      %912 = vdwg.mxu0
      %v913 = vmul.f32 %v908, 0.5
      %v914 = vadd.f32 %v913, %v311
      %v915 = vsel %vm314, %v914, -inf
      %916 = vmax.xlane.f32.xlu0 %v915
      %v917 = vpop.xlane.xlu0 %916
      %v918 = vsub.f32 %v914, %v917
      %v919 = vmul.f32 %v918, 1.442695
      %v920 = vpow.pop %v919
      %v921 = vsel %vm314, %v920, 0.0
      %922 = vadd.xlane.f32.xlu0 %v921
      %v923 = vpop.xlane.xlu0 %922
      %v924 = vrcp.pop %v923
      %v925 = vmul.f32 %v920, %v924
      %v926 = vpack.c.bf16 %v925, %v925
      %927 = vrot.lane.b32.xlu0 %v256, 44
      %v928 = vpop.permute.xlu0 %927
      %v930 = vsel %vm314, %v926, 0
      %v933 = vsel %vm332, %v928, 0
      %935 = vmatprep.subr.bf16.mxu0 0
      %936 = vmatpush1.bf16.msra.mxu0 0
      %937 = vmatprep.subr.bf16.mxu0 0
      %938 = vmatpush1.bf16.msra.mxu0 0
      %939 = vmatprep.subr.bf16.mxu0 0
      %940 = vmatpush1.bf16.msra.mxu0 0
      %941 = vmatprep.subr.bf16.mxu0 0
      %942 = vmatpush1.bf16.msra.mxu0 0
      %943 = vmatprep.subr.bf16.mxu0 0
      %944 = vmatpush1.bf16.msra.mxu0 0
      %945 = vmatprep.subr.bf16.mxu0 0
      %946 = vmatpush1.bf16.msra.mxu0 0
      %947 = vmatprep.subr.bf16.mxu0 0
      %948 = vmatpush1.bf16.msra.mxu0 0
      %949 = vmatprep.subr.bf16.mxu0 0
      %950 = vmatpush1.bf16.msra.mxu0 %v933
      %951 = vmatprep.subr.bf16.mxu0 0
      %952 = vmatpush2.bf16.msra.mxu0 0
      %953 = vmatprep.subr.bf16.mxu0 0
      %954 = vmatpush2.bf16.msra.mxu0 0
      %955 = vmatprep.subr.bf16.mxu0 0
      %956 = vmatpush2.bf16.msra.mxu0 0
      %957 = vmatprep.subr.bf16.mxu0 0
      %958 = vmatpush2.bf16.msra.mxu0 0
      %959 = vmatprep.subr.bf16.mxu0 0
      %960 = vmatpush2.bf16.msra.mxu0 0
      %961 = vmatprep.subr.bf16.mxu0 0
      %962 = vmatpush2.bf16.msra.mxu0 0
      %963 = vmatprep.subr.bf16.mxu0 0
      %964 = vmatpush2.bf16.msra.mxu0 0
      %965 = vmatprep.subr.bf16.mxu0 0
      %966 = vmatpush2.bf16.msra.mxu0 0
      %967 = vmatprep.mubr.bf16.mxu0 0
      %968 = vmatmul.mubr.bf16.gmra.mxu0 %v930
      %v969 = vpop.f32.mrf.mxu0
      %v970 = vadd.f32 0.0, %v969
      %v971 = vpop.f32.mrf.mxu0
      %v972 = vpop.f32.mrf.mxu0
      %v973 = vpop.f32.mrf.mxu0
      %974 = vdwg.mxu0
      %v975 = vpack.c.bf16 %v970, %v970
      %v977 = vunpack.c.l.b16 %v975
      %v978 = vpack.c.b16 %v977, %v977
      %979 = vrot.lane.b32.xlu0 %v978, 20
      %v980 = vpop.permute.xlu0 %979
      %vm982 = vcmask 191648
      %983 = vst.msk [vmem:[#allocation2] sm:$0xf] %vm982, %v980
      %984 = vrot.lane.b32.xlu0 %v256, 104
      %v985 = vpop.permute.xlu0 %984
      %986 = vrot.lane.b32.xlu0 %v256, 72
      %v987 = vpop.permute.xlu0 %986
      %v989 = vsel %vm259, %v985, 0
      %v992 = vsel %vm259, %v987, 0
      %994 = vmatprep.subr.bf16.mxu0 0
      %995 = vmatpush1.bf16.xpose.msra.mxu0 0
      %996 = vmatprep.subr.bf16.mxu0 0
      %997 = vmatpush1.bf16.xpose.msra.mxu0 0
      %998 = vmatprep.subr.bf16.mxu0 0
      %999 = vmatpush1.bf16.xpose.msra.mxu0 0
      %1000 = vmatprep.subr.bf16.mxu0 0
      %1001 = vmatpush1.bf16.xpose.msra.mxu0 0
      %1002 = vmatprep.subr.bf16.mxu0 0
      %1003 = vmatpush1.bf16.xpose.msra.mxu0 0
      %1004 = vmatprep.subr.bf16.mxu0 0
      %1005 = vmatpush1.bf16.xpose.msra.mxu0 0
      %1006 = vmatprep.subr.bf16.mxu0 0
      %1007 = vmatpush1.bf16.xpose.msra.mxu0 0
      %1008 = vmatprep.subr.bf16.mxu0 0
      %1009 = vmatpush1.bf16.xpose.msra.mxu0 %v992
      %1010 = vmatprep.subr.bf16.mxu0 0
      %1011 = vmatpush2.bf16.xpose.msra.mxu0 0
      %1012 = vmatprep.subr.bf16.mxu0 0
      %1013 = vmatpush2.bf16.xpose.msra.mxu0 0
      %1014 = vmatprep.subr.bf16.mxu0 0
      %1015 = vmatpush2.bf16.xpose.msra.mxu0 0
      %1016 = vmatprep.subr.bf16.mxu0 0
      %1017 = vmatpush2.bf16.xpose.msra.mxu0 0
      %1018 = vmatprep.subr.bf16.mxu0 0
      %1019 = vmatpush2.bf16.xpose.msra.mxu0 0
      %1020 = vmatprep.subr.bf16.mxu0 0
      %1021 = vmatpush2.bf16.xpose.msra.mxu0 0
      %1022 = vmatprep.subr.bf16.mxu0 0
      %1023 = vmatpush2.bf16.xpose.msra.mxu0 0
      %1024 = vmatprep.subr.bf16.mxu0 0
      %1025 = vmatpush2.bf16.xpose.msra.mxu0 0
      %1026 = vmatprep.mubr.bf16.mxu0 0
      %1027 = vmatmul.mubr.bf16.gmra.mxu0 %v989
      %v1028 = vpop.f32.mrf.mxu0
      %v1029 = vadd.f32 0.0, %v1028
      %v1030 = vpop.f32.mrf.mxu0
      %v1031 = vpop.f32.mrf.mxu0
      %v1032 = vpop.f32.mrf.mxu0
      %1033 = vdwg.mxu0
      %v1034 = vmul.f32 %v1029, 0.5
      %v1035 = vadd.f32 %v1034, %v311
      %v1036 = vsel %vm314, %v1035, -inf
      %1037 = vmax.xlane.f32.xlu0 %v1036
      %v1038 = vpop.xlane.xlu0 %1037
      %v1039 = vsub.f32 %v1035, %v1038
      %v1040 = vmul.f32 %v1039, 1.442695
      %v1041 = vpow.pop %v1040
      %v1042 = vsel %vm314, %v1041, 0.0
      %1043 = vadd.xlane.f32.xlu0 %v1042
      %v1044 = vpop.xlane.xlu0 %1043
      %v1045 = vrcp.pop %v1044
      %v1046 = vmul.f32 %v1041, %v1045
      %v1047 = vpack.c.bf16 %v1046, %v1046
      %1048 = vrot.lane.b32.xlu0 %v256, 40
      %v1049 = vpop.permute.xlu0 %1048
      %v1051 = vsel %vm314, %v1047, 0
      %v1054 = vsel %vm332, %v1049, 0
      %1056 = vmatprep.subr.bf16.mxu0 0
      %1057 = vmatpush1.bf16.msra.mxu0 0
      %1058 = vmatprep.subr.bf16.mxu0 0
      %1059 = vmatpush1.bf16.msra.mxu0 0
      %1060 = vmatprep.subr.bf16.mxu0 0
      %1061 = vmatpush1.bf16.msra.mxu0 0
      %1062 = vmatprep.subr.bf16.mxu0 0
      %1063 = vmatpush1.bf16.msra.mxu0 0
      %1064 = vmatprep.subr.bf16.mxu0 0
      %1065 = vmatpush1.bf16.msra.mxu0 0
      %1066 = vmatprep.subr.bf16.mxu0 0
      %1067 = vmatpush1.bf16.msra.mxu0 0
      %1068 = vmatprep.subr.bf16.mxu0 0
      %1069 = vmatpush1.bf16.msra.mxu0 0
      %1070 = vmatprep.subr.bf16.mxu0 0
      %1071 = vmatpush1.bf16.msra.mxu0 %v1054
      %1072 = vmatprep.subr.bf16.mxu0 0
      %1073 = vmatpush2.bf16.msra.mxu0 0
      %1074 = vmatprep.subr.bf16.mxu0 0
      %1075 = vmatpush2.bf16.msra.mxu0 0
      %1076 = vmatprep.subr.bf16.mxu0 0
      %1077 = vmatpush2.bf16.msra.mxu0 0
      %1078 = vmatprep.subr.bf16.mxu0 0
      %1079 = vmatpush2.bf16.msra.mxu0 0
      %1080 = vmatprep.subr.bf16.mxu0 0
      %1081 = vmatpush2.bf16.msra.mxu0 0
      %1082 = vmatprep.subr.bf16.mxu0 0
      %1083 = vmatpush2.bf16.msra.mxu0 0
      %1084 = vmatprep.subr.bf16.mxu0 0
      %1085 = vmatpush2.bf16.msra.mxu0 0
      %1086 = vmatprep.subr.bf16.mxu0 0
      %1087 = vmatpush2.bf16.msra.mxu0 0
      %1088 = vmatprep.mubr.bf16.mxu0 0
      %1089 = vmatmul.mubr.bf16.gmra.mxu0 %v1051
      %v1090 = vpop.f32.mrf.mxu0
      %v1091 = vadd.f32 0.0, %v1090
      %v1092 = vpop.f32.mrf.mxu0
      %v1093 = vpop.f32.mrf.mxu0
      %v1094 = vpop.f32.mrf.mxu0
      %1095 = vdwg.mxu0
      %v1096 = vpack.c.bf16 %v1091, %v1091
      %v1098 = vunpack.c.l.b16 %v1096
      %v1099 = vpack.c.b16 %v1098, %v1098
      %1100 = vrot.lane.b32.xlu0 %v1099, 24
      %v1101 = vpop.permute.xlu0 %1100
      %vm1103 = vcmask 224448
      %1104 = vst.msk [vmem:[#allocation2] sm:$0xf] %vm1103, %v1101
      %1105 = vrot.lane.b32.xlu0 %v256, 100
      %v1106 = vpop.permute.xlu0 %1105
      %1107 = vrot.lane.b32.xlu0 %v256, 68
      %v1108 = vpop.permute.xlu0 %1107
      %v1110 = vsel %vm259, %v1106, 0
      %v1113 = vsel %vm259, %v1108, 0
      %1115 = vmatprep.subr.bf16.mxu0 0
      %1116 = vmatpush1.bf16.xpose.msra.mxu0 0
      %1117 = vmatprep.subr.bf16.mxu0 0
      %1118 = vmatpush1.bf16.xpose.msra.mxu0 0
      %1119 = vmatprep.subr.bf16.mxu0 0
      %1120 = vmatpush1.bf16.xpose.msra.mxu0 0
      %1121 = vmatprep.subr.bf16.mxu0 0
      %1122 = vmatpush1.bf16.xpose.msra.mxu0 0
      %1123 = vmatprep.subr.bf16.mxu0 0
      %1124 = vmatpush1.bf16.xpose.msra.mxu0 0
      %1125 = vmatprep.subr.bf16.mxu0 0
      %1126 = vmatpush1.bf16.xpose.msra.mxu0 0
      %1127 = vmatprep.subr.bf16.mxu0 0
      %1128 = vmatpush1.bf16.xpose.msra.mxu0 0
      %1129 = vmatprep.subr.bf16.mxu0 0
      %1130 = vmatpush1.bf16.xpose.msra.mxu0 %v1113
      %1131 = vmatprep.subr.bf16.mxu0 0
      %1132 = vmatpush2.bf16.xpose.msra.mxu0 0
      %1133 = vmatprep.subr.bf16.mxu0 0
      %1134 = vmatpush2.bf16.xpose.msra.mxu0 0
      %1135 = vmatprep.subr.bf16.mxu0 0
      %1136 = vmatpush2.bf16.xpose.msra.mxu0 0
      %1137 = vmatprep.subr.bf16.mxu0 0
      %1138 = vmatpush2.bf16.xpose.msra.mxu0 0
      %1139 = vmatprep.subr.bf16.mxu0 0
      %1140 = vmatpush2.bf16.xpose.msra.mxu0 0
      %1141 = vmatprep.subr.bf16.mxu0 0
      %1142 = vmatpush2.bf16.xpose.msra.mxu0 0
      %1143 = vmatprep.subr.bf16.mxu0 0
      %1144 = vmatpush2.bf16.xpose.msra.mxu0 0
      %1145 = vmatprep.subr.bf16.mxu0 0
      %1146 = vmatpush2.bf16.xpose.msra.mxu0 0
      %1147 = vmatprep.mubr.bf16.mxu0 0
      %1148 = vmatmul.mubr.bf16.gmra.mxu0 %v1110
      %v1149 = vpop.f32.mrf.mxu0
      %v1150 = vadd.f32 0.0, %v1149
      %v1151 = vpop.f32.mrf.mxu0
      %v1152 = vpop.f32.mrf.mxu0
      %v1153 = vpop.f32.mrf.mxu0
      %1154 = vdwg.mxu0
      %v1155 = vmul.f32 %v1150, 0.5
      %v1156 = vadd.f32 %v1155, %v311
      %v1157 = vsel %vm314, %v1156, -inf
      %1158 = vmax.xlane.f32.xlu0 %v1157
      %v1159 = vpop.xlane.xlu0 %1158
      %v1160 = vsub.f32 %v1156, %v1159
      %v1161 = vmul.f32 %v1160, 1.442695
      %v1162 = vpow.pop %v1161
      %v1163 = vsel %vm314, %v1162, 0.0
      %1164 = vadd.xlane.f32.xlu0 %v1163
      %v1165 = vpop.xlane.xlu0 %1164
      %v1166 = vrcp.pop %v1165
      %v1167 = vmul.f32 %v1162, %v1166
      %v1168 = vpack.c.bf16 %v1167, %v1167
      %1169 = vrot.lane.b32.xlu0 %v256, 36
      %v1170 = vpop.permute.xlu0 %1169
      %v1172 = vsel %vm314, %v1168, 0
      %v1175 = vsel %vm332, %v1170, 0
      %1177 = vmatprep.subr.bf16.mxu0 0
      %1178 = vmatpush1.bf16.msra.mxu0 0
      %1179 = vmatprep.subr.bf16.mxu0 0
      %1180 = vmatpush1.bf16.msra.mxu0 0
      %1181 = vmatprep.subr.bf16.mxu0 0
      %1182 = vmatpush1.bf16.msra.mxu0 0
      %1183 = vmatprep.subr.bf16.mxu0 0
      %1184 = vmatpush1.bf16.msra.mxu0 0
      %1185 = vmatprep.subr.bf16.mxu0 0
      %1186 = vmatpush1.bf16.msra.mxu0 0
      %1187 = vmatprep.subr.bf16.mxu0 0
      %1188 = vmatpush1.bf16.msra.mxu0 0
      %1189 = vmatprep.subr.bf16.mxu0 0
      %1190 = vmatpush1.bf16.msra.mxu0 0
      %1191 = vmatprep.subr.bf16.mxu0 0
      %1192 = vmatpush1.bf16.msra.mxu0 %v1175
      %1193 = vmatprep.subr.bf16.mxu0 0
      %1194 = vmatpush2.bf16.msra.mxu0 0
      %1195 = vmatprep.subr.bf16.mxu0 0
      %1196 = vmatpush2.bf16.msra.mxu0 0
      %1197 = vmatprep.subr.bf16.mxu0 0
      %1198 = vmatpush2.bf16.msra.mxu0 0
      %1199 = vmatprep.subr.bf16.mxu0 0
      %1200 = vmatpush2.bf16.msra.mxu0 0
      %1201 = vmatprep.subr.bf16.mxu0 0
      %1202 = vmatpush2.bf16.msra.mxu0 0
      %1203 = vmatprep.subr.bf16.mxu0 0
      %1204 = vmatpush2.bf16.msra.mxu0 0
      %1205 = vmatprep.subr.bf16.mxu0 0
      %1206 = vmatpush2.bf16.msra.mxu0 0
      %1207 = vmatprep.subr.bf16.mxu0 0
      %1208 = vmatpush2.bf16.msra.mxu0 0
      %1209 = vmatprep.mubr.bf16.mxu0 0
      %1210 = vmatmul.mubr.bf16.gmra.mxu0 %v1172
      %v1211 = vpop.f32.mrf.mxu0
      %v1212 = vadd.f32 0.0, %v1211
      %v1213 = vpop.f32.mrf.mxu0
      %v1214 = vpop.f32.mrf.mxu0
      %v1215 = vpop.f32.mrf.mxu0
      %1216 = vdwg.mxu0
      %v1217 = vpack.c.bf16 %v1212, %v1212
      %v1219 = vunpack.c.l.b16 %v1217
      %v1220 = vpack.c.b16 %v1219, %v1219
      %1221 = vrot.lane.b32.xlu0 %v1220, 28
      %v1222 = vpop.permute.xlu0 %1221
      %vm1224 = vcmask 257248
      %1225 = vst.msk [vmem:[#allocation2] sm:$0xf] %vm1224, %v1222
      %v1226 = vld [vmem:[#allocation2] sm:$0xf]
      %v1227 = vld [vmem:[%s2] sm:$0xf]
      %v1228 = vld [vmem:[%s2 + $0x4] sm:$0xf]
      %v1229 = vld [vmem:[%s2 + $0x8] sm:$0xf]
      %v1230 = vld [vmem:[%s2 + $0xc] sm:$0xf]
      %v1231 = vld [vmem:[%s3] sm:$0x1]
      %v1233 = vlaneseq
      %v1234 = vshrl.u32 %v1233, 7
      %v1235 = vsub.s32 0, %v1234
      %v1236 = vrot.slane %v1231, %v1235
      %v1242 = vunpack.c.l.b16 %v1227
      %v1243 = vunpack.c.l.b16 %v1228
      %v1244 = vunpack.c.l.b16 %v1229
      %v1245 = vunpack.c.l.b16 %v1230
      %v1246 = vpack.c.b16 %v1243, %v1242
      %v1247 = vpack.c.b16 %v1245, %v1244
      %vm1250 = vcmask 261120
      %v1252 = vsel %vm1250, %v1226, 0
      %1254 = vmatprep.subr.bf16.mxu0 0
      %1255 = vmatpush1.bf16.msra.mxu0 0
      %1256 = vmatprep.subr.bf16.mxu0 0
      %1257 = vmatpush1.bf16.msra.mxu0 0
      %1258 = vmatprep.subr.bf16.mxu0 0
      %1259 = vmatpush1.bf16.msra.mxu0 0
      %1260 = vmatprep.subr.bf16.mxu0 0
      %1261 = vmatpush1.bf16.msra.mxu0 0
      %1262 = vmatprep.subr.bf16.mxu0 0
      %1263 = vmatpush1.bf16.msra.mxu0 0
      %1264 = vmatprep.subr.bf16.mxu0 0
      %1265 = vmatpush1.bf16.msra.mxu0 0
      %1266 = vmatprep.subr.bf16.mxu0 0
      %1267 = vmatpush1.bf16.msra.mxu0 %v1247
      %1268 = vmatprep.subr.bf16.mxu0 0
      %1269 = vmatpush1.bf16.msra.mxu0 %v1246
      %1270 = vmatprep.subr.bf16.mxu0 0
      %1271 = vmatpush2.bf16.msra.mxu0 0
      %1272 = vmatprep.subr.bf16.mxu0 0
      %1273 = vmatpush2.bf16.msra.mxu0 0
      %1274 = vmatprep.subr.bf16.mxu0 0
      %1275 = vmatpush2.bf16.msra.mxu0 0
      %1276 = vmatprep.subr.bf16.mxu0 0
      %1277 = vmatpush2.bf16.msra.mxu0 0
      %1278 = vmatprep.subr.bf16.mxu0 0
      %1279 = vmatpush2.bf16.msra.mxu0 0
      %1280 = vmatprep.subr.bf16.mxu0 0
      %1281 = vmatpush2.bf16.msra.mxu0 0
      %1282 = vmatprep.subr.bf16.mxu0 0
      %1283 = vmatpush2.bf16.msra.mxu0 0
      %1284 = vmatprep.subr.bf16.mxu0 0
      %1285 = vmatpush2.bf16.msra.mxu0 0
      %1286 = vmatprep.mubr.bf16.mxu0 0
      %1287 = vmatmul.mubr.bf16.gmra.mxu0 %v1252
      %v1288 = vpop.f32.mrf.mxu0
      %v1289 = vadd.f32 %v1236, %v1288
      %v1290 = vpop.f32.mrf.mxu0
      %v1291 = vpop.f32.mrf.mxu0
      %v1292 = vpop.f32.mrf.mxu0
      %1293 = vdwg.mxu0
      %v1294 = vld [vmem:[%s246] sm:$0xf]
      %v1295 = vunpack.c.l.bf16 %v1294
      %v1296 = vadd.f32 %v1295, %v1289
      %v1297 = vpack.c.bf16 %v1296, %v1296
      %vm1298 = vcmask 257024
      %1299 = vst.msk [vmem:[%s250] sm:$0xf] %vm1298, %v1297
      %p1300 = scmp.lt.s32.totalorder %s16, 1
      %s1301 = scalar_select %p1300, %s16, 1
      %s1302 = smul.addr %s1301, 4
      %s1303 = scalar_lea.vmem %s5, %s1302
      // Predicated region
      $region41: #{acoustic_encoder_forward.23} parent=39 // pred_check
        %p1304 = pneg %p154
      $region42: #{acoustic_encoder_forward.23} parent=39 // pred_check_branch
        %1306 = sbr.rel (%p1304) target = $region44
      $region43: #{acoustic_encoder_forward.23} parent=39 // pred_region
        _
      $region44: #{acoustic_encoder_forward.23} parent=39 // pred_fallthru
        _
    $region40: #{acoustic_encoder_forward.23} parent=5 // pred_fallthru
      _
    %p1307 = scmp.le.s32.totalorder 2, %s11
    // Predicated region
    $region45: #{acoustic_encoder_forward.23} parent=5 // pred_check
      %p1308 = pneg %p1307
    $region46: #{acoustic_encoder_forward.23} parent=5 // pred_check_branch
      %1310 = sbr.rel (%p1308) target = $region48
    $region47: #{acoustic_encoder_forward.23} parent=5 // pred_region
      %s1311 = ssub.s32 %s11, 2
      // Predicated region
      $region49: #{acoustic_encoder_forward.23} parent=47 // pred_check
        %p1312 = pneg %p160
      $region50: #{acoustic_encoder_forward.23} parent=47 // pred_check_branch
        %1314 = sbr.rel (%p1312) target = $region52
      $region51: #{acoustic_encoder_forward.23} parent=47 // pred_region
        %p1315 = scmp.lt.s32.totalorder %s17, 1
        %s1316 = scalar_select %p1315, %s17, 1
        %s1317 = smul.addr %s1316, 4
        %s1318 = scalar_lea.vmem %s5, %s1317
      $region52: #{acoustic_encoder_forward.23} parent=47 // pred_fallthru
        _
    $region48: #{acoustic_encoder_forward.23} parent=5 // pred_fallthru
      _
  $region6: #{acoustic_encoder_forward.23} parent=0 // loop_footer
    %s15 = sadd.s32 1, %s11
  $region7: #{acoustic_encoder_forward.23} parent=0 // loop_footer_branch
    %10 = sbr.rel target = $region3
  $region8: #{acoustic_encoder_forward.23} parent=0 // loop_exit
    _

// kernel: acoustic_encoder_forward.25
$region0: #{acoustic_encoder_forward.25}
  #allocation0 [shape = 'u32[]', space=smem, size = 0x4, offset = 0x4, fixed_abs, tag = 'smem constant byte address 0x4 - core index']
  #allocation1 [shape = 'u32[144,128]{1,0:T(1,128)}', space=vmem, size = 0x12000, scoped, tag = 'internal scratch']
  %s0 = inlined_call_operand.vmem [shape: bf16[2,38,32], index: 0, kind: input, shape index: {}]
  %s1 = inlined_call_operand.vmem [shape: f32[31,32], index: 1, kind: input, shape index: {}]
  %s2 = inlined_call_operand.vmem [shape: f32[1,32], index: 2, kind: input, shape index: {}]
  %s3 = inlined_call_operand.vmem [shape: f32[1,32], index: 3, kind: input, shape index: {}]
  %s4 = inlined_call_operand.vmem [shape: f32[1,32], index: 4, kind: input, shape index: {}]
  %s5 = inlined_call_operand.vmem [shape: bf16[32,32], index: 5, kind: input, shape index: {}]
  %s6 = inlined_call_operand.vmem [shape: f32[1,32], index: 6, kind: input, shape index: {}]
  %s7 = inlined_call_operand.vmem [shape: bf16[2,8,32], index: 7, kind: input, shape index: {}]
  %s8 = inlined_call_operand.vmem [shape: bf16[2,8,32], index: 8, kind: output, shape index: {}]
  %s9 = sld [smem:[#allocation0]]
  $region65: #{acoustic_encoder_forward.25} parent=0
    _
  %s11 = ssub.s32 1, %s9
  %s12 = scalar_select 0, %s11, %s9
  loop: start=0, step=1, limit=4
  $region2: #{acoustic_encoder_forward.25} parent=0 // loop_pre_header
    _
  $region3: #{acoustic_encoder_forward.25} parent=0 // loop_header
    %s14 = sphi 0, %s18
    %p15 = scmp.ge.s32.totalorder %s14, 4
    %s24 = sphi 0, %s26
    %s27 = sphi 0, %s24
    %s28 = sphi 0, %s27
    %s44 = sphi 0, %s28
    %s48 = sphi 0, %s48
    %s50 = sphi 0, %s48
    %s51 = sphi 0, %s50
    %s65 = sphi 0, %s51
    %s69 = sphi 0, %s69
    %s71 = sphi 0, %s69
    %s72 = sphi 0, %s71
    %s86 = sphi 0, %s72
    %s90 = sphi 0, %s90
    %s92 = sphi 0, %s90
    %s93 = sphi 0, %s92
    %s107 = sphi 0, %s93
    %s111 = sphi 0, %s111
    %s113 = sphi 0, %s111
    %s114 = sphi 0, %s113
    %s128 = sphi 0, %s114
    %s132 = sphi 0, %s132
    %s134 = sphi 0, %s132
    %s135 = sphi 0, %s134
    %s149 = sphi 0, %s135
    %s153 = sphi 0, %s153
    %s155 = sphi 0, %s153
    %s156 = sphi 0, %s155
    %s170 = sphi 0, %s156
    %s176 = sphi 0, %s178
    %s179 = sphi 0, %s176
    %s180 = sphi 0, %s179
    %s196 = sphi 0, %s180
    %s202 = sphi 0, %s204
    %s205 = sphi 0, %s202
    %s206 = sphi 0, %s205
    %s222 = sphi 0, %s206
  $region4: #{acoustic_encoder_forward.25} parent=0 // loop_header_branch
    %17 = sbr.rel (%p15) target = $region8
  $region5: #{acoustic_encoder_forward.25} parent=0 // loop_body
    %s19 = ssub.s32 %s14, 1
    %s20 = ssub.s32 %s14, 2
    %s21 = sadd.s32 %s14, 1
    %s22 = ssub.s32 %s14, %s21
    %p23 = scmp.eq.s32.totalorder %s22, 0
    %s25 = sadd.s32 %s24, 1
    %s26 = scalar_select %p23, %s24, %s25
    %p29 = pneg %p23
    %p30 = scmp.eq.s32.totalorder %s14, 1
    %p31 = por %p29, %p30
    %p32 = scmp.ne.s32.totalorder %s24, %s27
    %p33 = scmp.eq.s32.totalorder %s14, 0
    %p34 = por %p32, %p33
    %p35 = scmp.ne.s32.totalorder %s24, %s27
    %p36 = scmp.eq.s32.totalorder %s19, 1
    %p37 = por %p35, %p36
    %p38 = scmp.ne.s32.totalorder %s27, %s28
    %p39 = scmp.eq.s32.totalorder %s19, 0
    %p40 = por %p38, %p39
    %p41 = scmp.ne.s32.totalorder %s27, %s28
    %p42 = scmp.eq.s32.totalorder %s20, 1
    %p43 = por %p41, %p42
    %p45 = scmp.ne.s32.totalorder %s28, %s44
    %p46 = scmp.eq.s32.totalorder %s20, 0
    %p47 = por %p45, %p46
    %s49 = sadd.s32 %s48, 1
    %p52 = scmp.eq.s32.totalorder %s14, 1
    %p53 = scmp.ne.s32.totalorder %s48, %s50
    %p54 = scmp.eq.s32.totalorder %s14, 0
    %p55 = por %p53, %p54
    %p56 = scmp.ne.s32.totalorder %s48, %s50
    %p57 = scmp.eq.s32.totalorder %s19, 1
    %p58 = por %p56, %p57
    %p59 = scmp.ne.s32.totalorder %s50, %s51
    %p60 = scmp.eq.s32.totalorder %s19, 0
    %p61 = por %p59, %p60
    %p62 = scmp.ne.s32.totalorder %s50, %s51
    %p63 = scmp.eq.s32.totalorder %s20, 1
    %p64 = por %p62, %p63
    %p66 = scmp.ne.s32.totalorder %s51, %s65
    %p67 = scmp.eq.s32.totalorder %s20, 0
    %p68 = por %p66, %p67
    %s70 = sadd.s32 %s69, 1
    %p73 = scmp.eq.s32.totalorder %s14, 1
    %p74 = scmp.ne.s32.totalorder %s69, %s71
    %p75 = scmp.eq.s32.totalorder %s14, 0
    %p76 = por %p74, %p75
    %p77 = scmp.ne.s32.totalorder %s69, %s71
    %p78 = scmp.eq.s32.totalorder %s19, 1
    %p79 = por %p77, %p78
    %p80 = scmp.ne.s32.totalorder %s71, %s72
    %p81 = scmp.eq.s32.totalorder %s19, 0
    %p82 = por %p80, %p81
    %p83 = scmp.ne.s32.totalorder %s71, %s72
    %p84 = scmp.eq.s32.totalorder %s20, 1
    %p85 = por %p83, %p84
    %p87 = scmp.ne.s32.totalorder %s72, %s86
    %p88 = scmp.eq.s32.totalorder %s20, 0
    %p89 = por %p87, %p88
    %s91 = sadd.s32 %s90, 1
    %p94 = scmp.eq.s32.totalorder %s14, 1
    %p95 = scmp.ne.s32.totalorder %s90, %s92
    %p96 = scmp.eq.s32.totalorder %s14, 0
    %p97 = por %p95, %p96
    %p98 = scmp.ne.s32.totalorder %s90, %s92
    %p99 = scmp.eq.s32.totalorder %s19, 1
    %p100 = por %p98, %p99
    %p101 = scmp.ne.s32.totalorder %s92, %s93
    %p102 = scmp.eq.s32.totalorder %s19, 0
    %p103 = por %p101, %p102
    %p104 = scmp.ne.s32.totalorder %s92, %s93
    %p105 = scmp.eq.s32.totalorder %s20, 1
    %p106 = por %p104, %p105
    %p108 = scmp.ne.s32.totalorder %s93, %s107
    %p109 = scmp.eq.s32.totalorder %s20, 0
    %p110 = por %p108, %p109
    %s112 = sadd.s32 %s111, 1
    %p115 = scmp.eq.s32.totalorder %s14, 1
    %p116 = scmp.ne.s32.totalorder %s111, %s113
    %p117 = scmp.eq.s32.totalorder %s14, 0
    %p118 = por %p116, %p117
    %p119 = scmp.ne.s32.totalorder %s111, %s113
    %p120 = scmp.eq.s32.totalorder %s19, 1
    %p121 = por %p119, %p120
    %p122 = scmp.ne.s32.totalorder %s113, %s114
    %p123 = scmp.eq.s32.totalorder %s19, 0
    %p124 = por %p122, %p123
    %p125 = scmp.ne.s32.totalorder %s113, %s114
    %p126 = scmp.eq.s32.totalorder %s20, 1
    %p127 = por %p125, %p126
    %p129 = scmp.ne.s32.totalorder %s114, %s128
    %p130 = scmp.eq.s32.totalorder %s20, 0
    %p131 = por %p129, %p130
    %s133 = sadd.s32 %s132, 1
    %p136 = scmp.eq.s32.totalorder %s14, 1
    %p137 = scmp.ne.s32.totalorder %s132, %s134
    %p138 = scmp.eq.s32.totalorder %s14, 0
    %p139 = por %p137, %p138
    %p140 = scmp.ne.s32.totalorder %s132, %s134
    %p141 = scmp.eq.s32.totalorder %s19, 1
    %p142 = por %p140, %p141
    %p143 = scmp.ne.s32.totalorder %s134, %s135
    %p144 = scmp.eq.s32.totalorder %s19, 0
    %p145 = por %p143, %p144
    %p146 = scmp.ne.s32.totalorder %s134, %s135
    %p147 = scmp.eq.s32.totalorder %s20, 1
    %p148 = por %p146, %p147
    %p150 = scmp.ne.s32.totalorder %s135, %s149
    %p151 = scmp.eq.s32.totalorder %s20, 0
    %p152 = por %p150, %p151
    %s154 = sadd.s32 %s153, 1
    %p157 = scmp.eq.s32.totalorder %s14, 1
    %p158 = scmp.ne.s32.totalorder %s153, %s155
    %p159 = scmp.eq.s32.totalorder %s14, 0
    %p160 = por %p158, %p159
    %p161 = scmp.ne.s32.totalorder %s153, %s155
    %p162 = scmp.eq.s32.totalorder %s19, 1
    %p163 = por %p161, %p162
    %p164 = scmp.ne.s32.totalorder %s155, %s156
    %p165 = scmp.eq.s32.totalorder %s19, 0
    %p166 = por %p164, %p165
    %p167 = scmp.ne.s32.totalorder %s155, %s156
    %p168 = scmp.eq.s32.totalorder %s20, 1
    %p169 = por %p167, %p168
    %p171 = scmp.ne.s32.totalorder %s156, %s170
    %p172 = scmp.eq.s32.totalorder %s20, 0
    %p173 = por %p171, %p172
    %s174 = ssub.s32 %s14, %s21
    %p175 = scmp.eq.s32.totalorder %s174, 0
    %s177 = sadd.s32 %s176, 1
    %s178 = scalar_select %p175, %s176, %s177
    %p181 = pneg %p175
    %p182 = scmp.eq.s32.totalorder %s14, 1
    %p183 = por %p181, %p182
    %p184 = scmp.ne.s32.totalorder %s176, %s179
    %p185 = scmp.eq.s32.totalorder %s14, 0
    %p186 = por %p184, %p185
    %p187 = scmp.ne.s32.totalorder %s176, %s179
    %p188 = scmp.eq.s32.totalorder %s19, 1
    %p189 = por %p187, %p188
    %p190 = scmp.ne.s32.totalorder %s179, %s180
    %p191 = scmp.eq.s32.totalorder %s19, 0
    %p192 = por %p190, %p191
    %p193 = scmp.ne.s32.totalorder %s179, %s180
    %p194 = scmp.eq.s32.totalorder %s20, 1
    %p195 = por %p193, %p194
    %p197 = scmp.ne.s32.totalorder %s180, %s196
    %p198 = scmp.eq.s32.totalorder %s20, 0
    %p199 = por %p197, %p198
    %s200 = ssub.s32 %s14, %s21
    %p201 = scmp.eq.s32.totalorder %s200, 0
    %s203 = sadd.s32 %s202, 1
    %s204 = scalar_select %p201, %s202, %s203
    %p207 = pneg %p201
    %p208 = scmp.eq.s32.totalorder %s14, 1
    %p209 = por %p207, %p208
    %p210 = scmp.ne.s32.totalorder %s202, %s205
    %p211 = scmp.eq.s32.totalorder %s14, 0
    %p212 = por %p210, %p211
    %p213 = scmp.ne.s32.totalorder %s202, %s205
    %p214 = scmp.eq.s32.totalorder %s19, 1
    %p215 = por %p213, %p214
    %p216 = scmp.ne.s32.totalorder %s205, %s206
    %p217 = scmp.eq.s32.totalorder %s19, 0
    %p218 = por %p216, %p217
    %p219 = scmp.ne.s32.totalorder %s205, %s206
    %p220 = scmp.eq.s32.totalorder %s20, 1
    %p221 = por %p219, %p220
    %p223 = scmp.ne.s32.totalorder %s206, %s222
    %p224 = scmp.eq.s32.totalorder %s20, 0
    %p225 = por %p223, %p224
    %p226 = scmp.le.s32.totalorder 1, %s14
    %p227 = scmp.lt.s32.totalorder %s14, 3
    %p228 = pnand %p226, %p227
    %p229 = pneg %p228
    // Predicated region
    $region9: #{acoustic_encoder_forward.25} parent=5 // pred_check
      _
    $region10: #{acoustic_encoder_forward.25} parent=5 // pred_check_branch
      %231 = sbr.rel (%p228) target = $region12
    $region11: #{acoustic_encoder_forward.25} parent=5 // pred_region
      %s232 = ssub.s32 %s14, 1
      // Predicated region
      $region13: #{acoustic_encoder_forward.25} parent=11 // pred_check
        %p233 = pneg %p61
      $region14: #{acoustic_encoder_forward.25} parent=11 // pred_check_branch
        %235 = sbr.rel (%p233) target = $region16
      $region15: #{acoustic_encoder_forward.25} parent=11 // pred_region
        _
      $region16: #{acoustic_encoder_forward.25} parent=11 // pred_fallthru
        _
      // Predicated region
      $region17: #{acoustic_encoder_forward.25} parent=11 // pred_check
        %p236 = pneg %p82
      $region18: #{acoustic_encoder_forward.25} parent=11 // pred_check_branch
        %238 = sbr.rel (%p236) target = $region20
      $region19: #{acoustic_encoder_forward.25} parent=11 // pred_region
        _
      $region20: #{acoustic_encoder_forward.25} parent=11 // pred_fallthru
        _
      // Predicated region
      $region21: #{acoustic_encoder_forward.25} parent=11 // pred_check
        %p239 = pneg %p103
      $region22: #{acoustic_encoder_forward.25} parent=11 // pred_check_branch
        %241 = sbr.rel (%p239) target = $region24
      $region23: #{acoustic_encoder_forward.25} parent=11 // pred_region
        _
      $region24: #{acoustic_encoder_forward.25} parent=11 // pred_fallthru
        _
      // Predicated region
      $region25: #{acoustic_encoder_forward.25} parent=11 // pred_check
        %p242 = pneg %p124
      $region26: #{acoustic_encoder_forward.25} parent=11 // pred_check_branch
        %244 = sbr.rel (%p242) target = $region28
      $region27: #{acoustic_encoder_forward.25} parent=11 // pred_region
        _
      $region28: #{acoustic_encoder_forward.25} parent=11 // pred_fallthru
        _
      // Predicated region
      $region29: #{acoustic_encoder_forward.25} parent=11 // pred_check
        %p245 = pneg %p145
      $region30: #{acoustic_encoder_forward.25} parent=11 // pred_check_branch
        %247 = sbr.rel (%p245) target = $region32
      $region31: #{acoustic_encoder_forward.25} parent=11 // pred_region
        _
      $region32: #{acoustic_encoder_forward.25} parent=11 // pred_fallthru
        _
      // Predicated region
      $region33: #{acoustic_encoder_forward.25} parent=11 // pred_check
        %p248 = pneg %p166
      $region34: #{acoustic_encoder_forward.25} parent=11 // pred_check_branch
        %250 = sbr.rel (%p248) target = $region36
      $region35: #{acoustic_encoder_forward.25} parent=11 // pred_region
        _
      $region36: #{acoustic_encoder_forward.25} parent=11 // pred_fallthru
        _
    $region12: #{acoustic_encoder_forward.25} parent=5 // pred_fallthru
      _
    %p251 = scmp.lt.s32.totalorder %s14, 2
    // Predicated region
    $region37: #{acoustic_encoder_forward.25} parent=5 // pred_check
      %p252 = pneg %p251
    $region38: #{acoustic_encoder_forward.25} parent=5 // pred_check_branch
      %254 = sbr.rel (%p252) target = $region40
    $region39: #{acoustic_encoder_forward.25} parent=5 // pred_region
      // Predicated region
      $region41: #{acoustic_encoder_forward.25} parent=39 // pred_check
        %p255 = pneg %p34
      $region42: #{acoustic_encoder_forward.25} parent=39 // pred_check_branch
        %257 = sbr.rel (%p255) target = $region44
      $region43: #{acoustic_encoder_forward.25} parent=39 // pred_region
        %p258 = scmp.lt.s32.totalorder %s14, 1
        %s259 = scalar_select %p258, %s14, 1
        %s260 = smul.addr %s259, 5
        %s261 = smul.addr %s260, 4
        %s262 = scalar_lea.vmem %s0, %s261
      $region44: #{acoustic_encoder_forward.25} parent=39 // pred_fallthru
        _
      // Predicated region
      $region45: #{acoustic_encoder_forward.25} parent=39 // pred_check
        %p263 = pneg %p186
      $region46: #{acoustic_encoder_forward.25} parent=39 // pred_check_branch
        %265 = sbr.rel (%p263) target = $region48
      $region47: #{acoustic_encoder_forward.25} parent=39 // pred_region
        %p266 = scmp.lt.s32.totalorder %s14, 1
        %s267 = scalar_select %p266, %s14, 1
        %s268 = smul.addr %s267, 4
        %s269 = scalar_lea.vmem %s7, %s268
      $region48: #{acoustic_encoder_forward.25} parent=39 // pred_fallthru
        _
    $region40: #{acoustic_encoder_forward.25} parent=5 // pred_fallthru
      _
    %p270 = scmp.le.s32.totalorder 1, %s14
    %p271 = scmp.lt.s32.totalorder %s14, 3
    %p272 = pnand %p270, %p271
    %p273 = pneg %p272
    // Predicated region
    $region49: #{acoustic_encoder_forward.25} parent=5 // pred_check
      _
    $region50: #{acoustic_encoder_forward.25} parent=5 // pred_check_branch
      %275 = sbr.rel (%p272) target = $region52
    $region51: #{acoustic_encoder_forward.25} parent=5 // pred_region
      %s276 = ssub.s32 %s14, 1
      %p277 = scmp.lt.s32.totalorder %s19, 1
      %s278 = scalar_select %p277, %s19, 1
      %s279 = smul.addr %s278, 5
      %s280 = smul.addr %s279, 4
      %s281 = scalar_lea.vmem %s0, %s280
      %p282 = pneg %p40
      %p283 = pneg %p37
      %p284 = pneg %p61
      %p285 = pneg %p58
      %p286 = pneg %p82
      %p287 = pneg %p79
      %p288 = pneg %p103
      %p289 = pneg %p100
      %p290 = pneg %p124
      %p291 = pneg %p121
      %p292 = pneg %p145
      %p293 = pneg %p142
      %p294 = pneg %p166
      %p295 = pneg %p163
      %p296 = scmp.lt.s32.totalorder %s19, 1
      %s297 = scalar_select %p296, %s19, 1
      %s298 = smul.addr %s297, 4
      %s299 = scalar_lea.vmem %s7, %s298
      %p300 = pneg %p192
      %p301 = pneg %p189
      %p302 = pneg %p218
      %p303 = pneg %p215
      %p304 = scmp.lt.s32.totalorder %s19, 1
      %s305 = scalar_select %p304, %s19, 1
      %s306 = smul.addr %s305, 4
      %s307 = scalar_lea.vmem %s8, %s306
      %p308 = scmp.lt.s32.totalorder %s19, 1
      %s309 = scalar_select %p308, %s19, 1
      %s310 = smul.addr %s309, 5
      %s311 = smul.addr %s310, 4
      %s312 = scalar_lea.vmem %s0, %s311
      %p313 = scmp.lt.s32.totalorder %s19, 1
      %s314 = scalar_select %p313, %s19, 1
      %s315 = smul.addr %s314, 4
      %s316 = scalar_lea.vmem %s7, %s315
      %p317 = scmp.lt.s32.totalorder %s19, 1
      %s318 = scalar_select %p317, %s19, 1
      %s319 = smul.addr %s318, 4
      %s320 = scalar_lea.vmem %s8, %s319
      %v322 = vld [vmem:[%s312] sm:$0xf]
      %v323 = vld [vmem:[%s312 + $0x4] sm:$0xf]
      %v324 = vld [vmem:[%s312 + $0x8] sm:$0xf]
      %v325 = vld [vmem:[%s312 + $0xc] sm:$0xf]
      %v326 = vld [vmem:[%s312 + $0x10] sm:$0x7]
      %v327 = vunpack.c.l.bf16 %v322
      %v328 = vunpack.c.l.bf16 %v323
      %v329 = vunpack.c.l.bf16 %v324
      %v330 = vunpack.c.l.bf16 %v325
      %v331 = vunpack.c.l.bf16 %v326
      %v332 = vld [vmem:[%s1] sm:$0xff]
      %v333 = vld [vmem:[%s1 + $0x8] sm:$0xff]
      %v334 = vld [vmem:[%s1 + $0x10] sm:$0xff]
      %v335 = vld [vmem:[%s1 + $0x18] sm:$0x7f]
      %v336 = vld [vmem:[%s2] sm:$0x1]
      %v338 = vlaneseq
      %v339 = vshrl.u32 %v338, 7
      %v340 = vsub.s32 0, %v339
      %v341 = vrot.slane %v336, %v340
      %v343 = vlaneseq
      %v344 = vshrl.u32 %v343, 7
      %v345 = vsub.s32 0, %v344
      %v346 = vrot.slane %v332, %v345
      %v347 = vmul.f32 %v327, %v346
      %v348 = vadd.f32 %v341, %v347
      %v349 = vlaneseq
      %v350 = vshrl.u32 %v349, 7
      %v351 = vsub.s32 1, %v350
      %v352 = vrot.slane %v332, %v351
      %v353 = vmul.f32 %v327, %v352
      %v354 = vmul.f32 %v328, %v352
      %vm357 = vcmask 1046528
      %v358 = vrot.slane %v353, 1
      %v359 = vrot.slane %v354, 1
      %v360 = vsel %vm357, %v358, %v359
      %v362 = vadd.f32 %v348, %v360
      %v363 = vlaneseq
      %v364 = vshrl.u32 %v363, 7
      %v365 = vsub.s32 2, %v364
      %v366 = vrot.slane %v332, %v365
      %v367 = vmul.f32 %v327, %v366
      %v368 = vmul.f32 %v328, %v366
      %vm371 = vcmask 1045504
      %v372 = vrot.slane %v367, 2
      %v373 = vrot.slane %v368, 2
      %v374 = vsel %vm371, %v372, %v373
      %v376 = vadd.f32 %v362, %v374
      %v377 = vlaneseq
      %v378 = vshrl.u32 %v377, 7
      %v379 = vsub.s32 3, %v378
      %v380 = vrot.slane %v332, %v379
      %v381 = vmul.f32 %v327, %v380
      %v382 = vmul.f32 %v328, %v380
      %vm385 = vcmask 1044480
      %v386 = vrot.slane %v381, 3
      %v387 = vrot.slane %v382, 3
      %v388 = vsel %vm385, %v386, %v387
      %v390 = vadd.f32 %v376, %v388
      %v391 = vlaneseq
      %v392 = vshrl.u32 %v391, 7
      %v393 = vsub.s32 4, %v392
      %v394 = vrot.slane %v332, %v393
      %v395 = vmul.f32 %v327, %v394
      %v396 = vmul.f32 %v328, %v394
      %vm399 = vcmask 1043456
      %v400 = vrot.slane %v395, 4
      %v401 = vrot.slane %v396, 4
      %v402 = vsel %vm399, %v400, %v401
      %v404 = vadd.f32 %v390, %v402
      %v405 = vlaneseq
      %v406 = vshrl.u32 %v405, 7
      %v407 = vsub.s32 5, %v406
      %v408 = vrot.slane %v332, %v407
      %v409 = vmul.f32 %v327, %v408
      %v410 = vmul.f32 %v328, %v408
      %vm413 = vcmask 1042432
      %v414 = vrot.slane %v409, 5
      %v415 = vrot.slane %v410, 5
      %v416 = vsel %vm413, %v414, %v415
      %v418 = vadd.f32 %v404, %v416
      %v419 = vlaneseq
      %v420 = vshrl.u32 %v419, 7
      %v421 = vsub.s32 6, %v420
      %v422 = vrot.slane %v332, %v421
      %v423 = vmul.f32 %v327, %v422
      %v424 = vmul.f32 %v328, %v422
      %vm427 = vcmask 1041408
      %v428 = vrot.slane %v423, 6
      %v429 = vrot.slane %v424, 6
      %v430 = vsel %vm427, %v428, %v429
      %v432 = vadd.f32 %v418, %v430
      %v433 = vlaneseq
      %v434 = vshrl.u32 %v433, 7
      %v435 = vsub.s32 7, %v434
      %v436 = vrot.slane %v332, %v435
      %v437 = vmul.f32 %v327, %v436
      %v438 = vmul.f32 %v328, %v436
      %vm441 = vcmask 1040384
      %v442 = vrot.slane %v437, 7
      %v443 = vrot.slane %v438, 7
      %v444 = vsel %vm441, %v442, %v443
      %v446 = vadd.f32 %v432, %v444
      %v447 = vlaneseq
      %v448 = vshrl.u32 %v447, 7
      %v449 = vsub.s32 0, %v448
      %v450 = vrot.slane %v333, %v449
      %v451 = vmul.f32 %v328, %v450
      %v452 = vadd.f32 %v446, %v451
      %v453 = vlaneseq
      %v454 = vshrl.u32 %v453, 7
      %v455 = vsub.s32 1, %v454
      %v456 = vrot.slane %v333, %v455
      %v457 = vmul.f32 %v328, %v456
      %v458 = vmul.f32 %v329, %v456
      %v461 = vrot.slane %v457, 1
      %v462 = vrot.slane %v458, 1
      %v463 = vsel %vm357, %v461, %v462
      %v465 = vadd.f32 %v452, %v463
      %v466 = vlaneseq
      %v467 = vshrl.u32 %v466, 7
      %v468 = vsub.s32 2, %v467
      %v469 = vrot.slane %v333, %v468
      %v470 = vmul.f32 %v328, %v469
      %v471 = vmul.f32 %v329, %v469
      %v474 = vrot.slane %v470, 2
      %v475 = vrot.slane %v471, 2
      %v476 = vsel %vm371, %v474, %v475
      %v478 = vadd.f32 %v465, %v476
      %v479 = vlaneseq
      %v480 = vshrl.u32 %v479, 7
      %v481 = vsub.s32 3, %v480
      %v482 = vrot.slane %v333, %v481
      %v483 = vmul.f32 %v328, %v482
      %v484 = vmul.f32 %v329, %v482
      %v487 = vrot.slane %v483, 3
      %v488 = vrot.slane %v484, 3
      %v489 = vsel %vm385, %v487, %v488
      %v491 = vadd.f32 %v478, %v489
      %v492 = vlaneseq
      %v493 = vshrl.u32 %v492, 7
      %v494 = vsub.s32 4, %v493
      %v495 = vrot.slane %v333, %v494
      %v496 = vmul.f32 %v328, %v495
      %v497 = vmul.f32 %v329, %v495
      %v500 = vrot.slane %v496, 4
      %v501 = vrot.slane %v497, 4
      %v502 = vsel %vm399, %v500, %v501
      %v504 = vadd.f32 %v491, %v502
      %v505 = vlaneseq
      %v506 = vshrl.u32 %v505, 7
      %v507 = vsub.s32 5, %v506
      %v508 = vrot.slane %v333, %v507
      %v509 = vmul.f32 %v328, %v508
      %v510 = vmul.f32 %v329, %v508
      %v513 = vrot.slane %v509, 5
      %v514 = vrot.slane %v510, 5
      %v515 = vsel %vm413, %v513, %v514
      %v517 = vadd.f32 %v504, %v515
      %v518 = vlaneseq
      %v519 = vshrl.u32 %v518, 7
      %v520 = vsub.s32 6, %v519
      %v521 = vrot.slane %v333, %v520
      %v522 = vmul.f32 %v328, %v521
      %v523 = vmul.f32 %v329, %v521
      %v526 = vrot.slane %v522, 6
      %v527 = vrot.slane %v523, 6
      %v528 = vsel %vm427, %v526, %v527
      %v530 = vadd.f32 %v517, %v528
      %v531 = vlaneseq
      %v532 = vshrl.u32 %v531, 7
      %v533 = vsub.s32 7, %v532
      %v534 = vrot.slane %v333, %v533
      %v535 = vmul.f32 %v328, %v534
      %v536 = vmul.f32 %v329, %v534
      %v539 = vrot.slane %v535, 7
      %v540 = vrot.slane %v536, 7
      %v541 = vsel %vm441, %v539, %v540
      %v543 = vadd.f32 %v530, %v541
      %v544 = vlaneseq
      %v545 = vshrl.u32 %v544, 7
      %v546 = vsub.s32 0, %v545
      %v547 = vrot.slane %v334, %v546
      %v548 = vmul.f32 %v329, %v547
      %v549 = vadd.f32 %v543, %v548
      %v550 = vlaneseq
      %v551 = vshrl.u32 %v550, 7
      %v552 = vsub.s32 1, %v551
      %v553 = vrot.slane %v334, %v552
      %v554 = vmul.f32 %v329, %v553
      %v555 = vmul.f32 %v330, %v553
      %v558 = vrot.slane %v554, 1
      %v559 = vrot.slane %v555, 1
      %v560 = vsel %vm357, %v558, %v559
      %v562 = vadd.f32 %v549, %v560
      %v563 = vlaneseq
      %v564 = vshrl.u32 %v563, 7
      %v565 = vsub.s32 2, %v564
      %v566 = vrot.slane %v334, %v565
      %v567 = vmul.f32 %v329, %v566
      %v568 = vmul.f32 %v330, %v566
      %v571 = vrot.slane %v567, 2
      %v572 = vrot.slane %v568, 2
      %v573 = vsel %vm371, %v571, %v572
      %v575 = vadd.f32 %v562, %v573
      %v576 = vlaneseq
      %v577 = vshrl.u32 %v576, 7
      %v578 = vsub.s32 3, %v577
      %v579 = vrot.slane %v334, %v578
      %v580 = vmul.f32 %v329, %v579
      %v581 = vmul.f32 %v330, %v579
      %v584 = vrot.slane %v580, 3
      %v585 = vrot.slane %v581, 3
      %v586 = vsel %vm385, %v584, %v585
      %v588 = vadd.f32 %v575, %v586
      %v589 = vlaneseq
      %v590 = vshrl.u32 %v589, 7
      %v591 = vsub.s32 4, %v590
      %v592 = vrot.slane %v334, %v591
      %v593 = vmul.f32 %v329, %v592
      %v594 = vmul.f32 %v330, %v592
      %v597 = vrot.slane %v593, 4
      %v598 = vrot.slane %v594, 4
      %v599 = vsel %vm399, %v597, %v598
      %v601 = vadd.f32 %v588, %v599
      %v602 = vlaneseq
      %v603 = vshrl.u32 %v602, 7
      %v604 = vsub.s32 5, %v603
      %v605 = vrot.slane %v334, %v604
      %v606 = vmul.f32 %v329, %v605
      %v607 = vmul.f32 %v330, %v605
      %v610 = vrot.slane %v606, 5
      %v611 = vrot.slane %v607, 5
      %v612 = vsel %vm413, %v610, %v611
      %v614 = vadd.f32 %v601, %v612
      %v615 = vlaneseq
      %v616 = vshrl.u32 %v615, 7
      %v617 = vsub.s32 6, %v616
      %v618 = vrot.slane %v334, %v617
      %v619 = vmul.f32 %v329, %v618
      %v620 = vmul.f32 %v330, %v618
      %v623 = vrot.slane %v619, 6
      %v624 = vrot.slane %v620, 6
      %v625 = vsel %vm427, %v623, %v624
      %v627 = vadd.f32 %v614, %v625
      %v628 = vlaneseq
      %v629 = vshrl.u32 %v628, 7
      %v630 = vsub.s32 7, %v629
      %v631 = vrot.slane %v334, %v630
      %v632 = vmul.f32 %v329, %v631
      %v633 = vmul.f32 %v330, %v631
      %v636 = vrot.slane %v632, 7
      %v637 = vrot.slane %v633, 7
      %v638 = vsel %vm441, %v636, %v637
      %v640 = vadd.f32 %v627, %v638
      %v641 = vlaneseq
      %v642 = vshrl.u32 %v641, 7
      %v643 = vsub.s32 0, %v642
      %v644 = vrot.slane %v335, %v643
      %v645 = vmul.f32 %v330, %v644
      %v646 = vadd.f32 %v640, %v645
      %v647 = vlaneseq
      %v648 = vshrl.u32 %v647, 7
      %v649 = vsub.s32 1, %v648
      %v650 = vrot.slane %v335, %v649
      %v651 = vmul.f32 %v330, %v650
      %v652 = vmul.f32 %v331, %v650
      %v655 = vrot.slane %v651, 1
      %v656 = vrot.slane %v652, 1
      %v657 = vsel %vm357, %v655, %v656
      %v659 = vadd.f32 %v646, %v657
      %v660 = vlaneseq
      %v661 = vshrl.u32 %v660, 7
      %v662 = vsub.s32 2, %v661
      %v663 = vrot.slane %v335, %v662
      %v664 = vmul.f32 %v330, %v663
      %v665 = vmul.f32 %v331, %v663
      %v668 = vrot.slane %v664, 2
      %v669 = vrot.slane %v665, 2
      %v670 = vsel %vm371, %v668, %v669
      %v672 = vadd.f32 %v659, %v670
      %v673 = vlaneseq
      %v674 = vshrl.u32 %v673, 7
      %v675 = vsub.s32 3, %v674
      %v676 = vrot.slane %v335, %v675
      %v677 = vmul.f32 %v330, %v676
      %v678 = vmul.f32 %v331, %v676
      %v681 = vrot.slane %v677, 3
      %v682 = vrot.slane %v678, 3
      %v683 = vsel %vm385, %v681, %v682
      %v685 = vadd.f32 %v672, %v683
      %v686 = vlaneseq
      %v687 = vshrl.u32 %v686, 7
      %v688 = vsub.s32 4, %v687
      %v689 = vrot.slane %v335, %v688
      %v690 = vmul.f32 %v330, %v689
      %v691 = vmul.f32 %v331, %v689
      %v694 = vrot.slane %v690, 4
      %v695 = vrot.slane %v691, 4
      %v696 = vsel %vm399, %v694, %v695
      %v698 = vadd.f32 %v685, %v696
      %v699 = vlaneseq
      %v700 = vshrl.u32 %v699, 7
      %v701 = vsub.s32 5, %v700
      %v702 = vrot.slane %v335, %v701
      %v703 = vmul.f32 %v330, %v702
      %v704 = vmul.f32 %v331, %v702
      %v707 = vrot.slane %v703, 5
      %v708 = vrot.slane %v704, 5
      %v709 = vsel %vm413, %v707, %v708
      %v711 = vadd.f32 %v698, %v709
      %v712 = vlaneseq
      %v713 = vshrl.u32 %v712, 7
      %v714 = vsub.s32 6, %v713
      %v715 = vrot.slane %v335, %v714
      %v716 = vmul.f32 %v330, %v715
      %v717 = vmul.f32 %v331, %v715
      %v720 = vrot.slane %v716, 6
      %v721 = vrot.slane %v717, 6
      %v722 = vsel %vm427, %v720, %v721
      %v724 = vadd.f32 %v711, %v722
      %v725 = vld [vmem:[%s3] sm:$0x1]
      %v727 = vlaneseq
      %v728 = vshrl.u32 %v727, 7
      %v729 = vsub.s32 0, %v728
      %v730 = vrot.slane %v725, %v729
      %v732 = vmul.f32 %v724, %v730
      %v733 = vld [vmem:[%s4] sm:$0x1]
      %v735 = vlaneseq
      %v736 = vshrl.u32 %v735, 7
      %v737 = vsub.s32 0, %v736
      %v738 = vrot.slane %v733, %v737
      %v740 = vadd.f32 %v732, %v738
      %v741 = vxor.u32 %v740, 2147483648
      %v742 = vmul.f32 %v741, 1.442695
      %v743 = vpow.pop %v742
      %v744 = vadd.f32 %v743, 1.0
      %v745 = vrcp.pop %v744
      %v746 = vmul.f32 1.0, %v745
      %v747 = vmul.f32 %v740, %v746
      %v748 = vpack.c.bf16 %v747, %v747
      %v749 = vld [vmem:[%s5] sm:$0xf]
      %v750 = vld [vmem:[%s5 + $0x4] sm:$0xf]
      %v751 = vld [vmem:[%s5 + $0x8] sm:$0xf]
      %v752 = vld [vmem:[%s5 + $0xc] sm:$0xf]
      %v753 = vld [vmem:[%s6] sm:$0x1]
      %v755 = vlaneseq
      %v756 = vshrl.u32 %v755, 7
      %v757 = vsub.s32 0, %v756
      %v758 = vrot.slane %v753, %v757
      %v764 = vunpack.c.l.b16 %v749
      %v765 = vunpack.c.l.b16 %v750
      %v766 = vunpack.c.l.b16 %v751
      %v767 = vunpack.c.l.b16 %v752
      %v768 = vpack.c.b16 %v765, %v764
      %v769 = vpack.c.b16 %v767, %v766
      %vm772 = vcmask 261120
      %v774 = vsel %vm772, %v748, 0
      %776 = vmatprep.subr.bf16.mxu0 0
      %777 = vmatpush1.bf16.msra.mxu0 0
      %778 = vmatprep.subr.bf16.mxu0 0
      %779 = vmatpush1.bf16.msra.mxu0 0
      %780 = vmatprep.subr.bf16.mxu0 0
      %781 = vmatpush1.bf16.msra.mxu0 0
      %782 = vmatprep.subr.bf16.mxu0 0
      %783 = vmatpush1.bf16.msra.mxu0 0
      %784 = vmatprep.subr.bf16.mxu0 0
      %785 = vmatpush1.bf16.msra.mxu0 0
      %786 = vmatprep.subr.bf16.mxu0 0
      %787 = vmatpush1.bf16.msra.mxu0 0
      %788 = vmatprep.subr.bf16.mxu0 0
      %789 = vmatpush1.bf16.msra.mxu0 %v769
      %790 = vmatprep.subr.bf16.mxu0 0
      %791 = vmatpush1.bf16.msra.mxu0 %v768
      %792 = vmatprep.subr.bf16.mxu0 0
      %793 = vmatpush2.bf16.msra.mxu0 0
      %794 = vmatprep.subr.bf16.mxu0 0
      %795 = vmatpush2.bf16.msra.mxu0 0
      %796 = vmatprep.subr.bf16.mxu0 0
      %797 = vmatpush2.bf16.msra.mxu0 0
      %798 = vmatprep.subr.bf16.mxu0 0
      %799 = vmatpush2.bf16.msra.mxu0 0
      %800 = vmatprep.subr.bf16.mxu0 0
      %801 = vmatpush2.bf16.msra.mxu0 0
      %802 = vmatprep.subr.bf16.mxu0 0
      %803 = vmatpush2.bf16.msra.mxu0 0
      %804 = vmatprep.subr.bf16.mxu0 0
      %805 = vmatpush2.bf16.msra.mxu0 0
      %806 = vmatprep.subr.bf16.mxu0 0
      %807 = vmatpush2.bf16.msra.mxu0 0
      %808 = vmatprep.mubr.bf16.mxu0 0
      %809 = vmatmul.mubr.bf16.gmra.mxu0 %v774
      %v810 = vpop.f32.mrf.mxu0
      %v811 = vadd.f32 %v758, %v810
      %v812 = vpop.f32.mrf.mxu0
      %v813 = vpop.f32.mrf.mxu0
      %v814 = vpop.f32.mrf.mxu0
      %815 = vdwg.mxu0
      %v816 = vld [vmem:[%s316] sm:$0xf]
      %v817 = vunpack.c.l.bf16 %v816
      %v818 = vadd.f32 %v817, %v811
      %v819 = vpack.c.bf16 %v818, %v818
      %vm820 = vcmask 257024
      %821 = vst.msk [vmem:[%s320] sm:$0xf] %vm820, %v819
      %p822 = scmp.lt.s32.totalorder %s19, 1
      %s823 = scalar_select %p822, %s19, 1
      %s824 = smul.addr %s823, 4
      %s825 = scalar_lea.vmem %s8, %s824
      // Predicated region
      $region53: #{acoustic_encoder_forward.25} parent=51 // pred_check
        %p826 = pneg %p215
      $region54: #{acoustic_encoder_forward.25} parent=51 // pred_check_branch
        %828 = sbr.rel (%p826) target = $region56
      $region55: #{acoustic_encoder_forward.25} parent=51 // pred_region
        _
      $region56: #{acoustic_encoder_forward.25} parent=51 // pred_fallthru
        _
    $region52: #{acoustic_encoder_forward.25} parent=5 // pred_fallthru
      _
    %p829 = scmp.le.s32.totalorder 2, %s14
    // Predicated region
    $region57: #{acoustic_encoder_forward.25} parent=5 // pred_check
      %p830 = pneg %p829
    $region58: #{acoustic_encoder_forward.25} parent=5 // pred_check_branch
      %832 = sbr.rel (%p830) target = $region60
    $region59: #{acoustic_encoder_forward.25} parent=5 // pred_region
      %s833 = ssub.s32 %s14, 2
      // Predicated region
      $region61: #{acoustic_encoder_forward.25} parent=59 // pred_check
        %p834 = pneg %p221
      $region62: #{acoustic_encoder_forward.25} parent=59 // pred_check_branch
        %836 = sbr.rel (%p834) target = $region64
      $region63: #{acoustic_encoder_forward.25} parent=59 // pred_region
        %p837 = scmp.lt.s32.totalorder %s20, 1
        %s838 = scalar_select %p837, %s20, 1
        %s839 = smul.addr %s838, 4
        %s840 = scalar_lea.vmem %s8, %s839
      $region64: #{acoustic_encoder_forward.25} parent=59 // pred_fallthru
        _
    $region60: #{acoustic_encoder_forward.25} parent=5 // pred_fallthru
      _
  $region6: #{acoustic_encoder_forward.25} parent=0 // loop_footer
    %s18 = sadd.s32 1, %s14
  $region7: #{acoustic_encoder_forward.25} parent=0 // loop_footer_branch
    %13 = sbr.rel target = $region3
  $region8: #{acoustic_encoder_forward.25} parent=0 // loop_exit
    _

// kernel: acoustic_encoder_forward.27
$region0: #{acoustic_encoder_forward.27}
  #allocation0 [shape = 'u32[]', space=smem, size = 0x4, offset = 0x4, fixed_abs, tag = 'smem constant byte address 0x4 - core index']
  #allocation1 [shape = 'u32[144,128]{1,0:T(1,128)}', space=vmem, size = 0x12000, scoped, tag = 'internal scratch']
  %s0 = inlined_call_operand.vmem [shape: bf16[16,128], index: 0, kind: input, shape index: {}]
  %s1 = inlined_call_operand.vmem [shape: bf16[128,32], index: 1, kind: input, shape index: {}]
  %s2 = inlined_call_operand.vmem [shape: f32[1,32], index: 2, kind: input, shape index: {}]
  %s3 = inlined_call_operand.vmem [shape: bf16[16,32], index: 3, kind: input, shape index: {}]
  %s4 = inlined_call_operand.vmem [shape: f32[1,32], index: 4, kind: input, shape index: {}]
  %s5 = inlined_call_operand.vmem [shape: f32[1,32], index: 5, kind: input, shape index: {}]
  %s6 = inlined_call_operand.vmem [shape: bf16[16,32], index: 6, kind: output, shape index: {}]
  %s7 = sld [smem:[#allocation0]]
  $region34: #{acoustic_encoder_forward.27} parent=0
    _
  %s9 = ssub.s32 1, %s7
  %s10 = scalar_select 0, %s9, %s7
  // Predicated region
  $region2: #{acoustic_encoder_forward.27} parent=0 // pred_check
    _
  $region3: #{acoustic_encoder_forward.27} parent=0 // pred_check_branch
    %12 = sbr.rel (0) target = $region5
  $region4: #{acoustic_encoder_forward.27} parent=0 // pred_region
    _
  $region5: #{acoustic_encoder_forward.27} parent=0 // pred_fallthru
    _
  // Predicated region
  $region6: #{acoustic_encoder_forward.27} parent=0 // pred_check
    _
  $region7: #{acoustic_encoder_forward.27} parent=0 // pred_check_branch
    %14 = sbr.rel (0) target = $region9
  $region8: #{acoustic_encoder_forward.27} parent=0 // pred_region
    _
  $region9: #{acoustic_encoder_forward.27} parent=0 // pred_fallthru
    _
  // Predicated region
  $region10: #{acoustic_encoder_forward.27} parent=0 // pred_check
    _
  $region11: #{acoustic_encoder_forward.27} parent=0 // pred_check_branch
    %16 = sbr.rel (0) target = $region13
  $region12: #{acoustic_encoder_forward.27} parent=0 // pred_region
    _
  $region13: #{acoustic_encoder_forward.27} parent=0 // pred_fallthru
    _
  // Predicated region
  $region14: #{acoustic_encoder_forward.27} parent=0 // pred_check
    _
  $region15: #{acoustic_encoder_forward.27} parent=0 // pred_check_branch
    %18 = sbr.rel (0) target = $region17
  $region16: #{acoustic_encoder_forward.27} parent=0 // pred_region
    _
  $region17: #{acoustic_encoder_forward.27} parent=0 // pred_fallthru
    _
  // Predicated region
  $region18: #{acoustic_encoder_forward.27} parent=0 // pred_check
    _
  $region19: #{acoustic_encoder_forward.27} parent=0 // pred_check_branch
    %20 = sbr.rel (0) target = $region21
  $region20: #{acoustic_encoder_forward.27} parent=0 // pred_region
    _
  $region21: #{acoustic_encoder_forward.27} parent=0 // pred_fallthru
    _
  // Predicated region
  $region22: #{acoustic_encoder_forward.27} parent=0 // pred_check
    _
  $region23: #{acoustic_encoder_forward.27} parent=0 // pred_check_branch
    %22 = sbr.rel (0) target = $region25
  $region24: #{acoustic_encoder_forward.27} parent=0 // pred_region
    _
  $region25: #{acoustic_encoder_forward.27} parent=0 // pred_fallthru
    _
  %v24 = vld [vmem:[%s3] sm:$0xf]
  %v25 = vld [vmem:[%s3 + $0x4] sm:$0xf]
  %v26 = vunpack.c.l.bf16 %v24
  %v27 = vunpack.c.l.bf16 %v25
  %v28 = vld [vmem:[%s0] sm:$0xf]
  %v29 = vld [vmem:[%s0 + $0x4] sm:$0xf]
  %v30 = vld [vmem:[%s1] sm:$0xf]
  %v31 = vld [vmem:[%s1 + $0x4] sm:$0xf]
  %v32 = vld [vmem:[%s1 + $0x8] sm:$0xf]
  %v33 = vld [vmem:[%s1 + $0xc] sm:$0xf]
  %v34 = vld [vmem:[%s1 + $0x10] sm:$0xf]
  %v35 = vld [vmem:[%s1 + $0x14] sm:$0xf]
  %v36 = vld [vmem:[%s1 + $0x18] sm:$0xf]
  %v37 = vld [vmem:[%s1 + $0x1c] sm:$0xf]
  %v38 = vld [vmem:[%s1 + $0x20] sm:$0xf]
  %v39 = vld [vmem:[%s1 + $0x24] sm:$0xf]
  %v40 = vld [vmem:[%s1 + $0x28] sm:$0xf]
  %v41 = vld [vmem:[%s1 + $0x2c] sm:$0xf]
  %v42 = vld [vmem:[%s1 + $0x30] sm:$0xf]
  %v43 = vld [vmem:[%s1 + $0x34] sm:$0xf]
  %v44 = vld [vmem:[%s1 + $0x38] sm:$0xf]
  %v45 = vld [vmem:[%s1 + $0x3c] sm:$0xf]
  %v46 = vld [vmem:[%s2] sm:$0x1]
  %v48 = vlaneseq
  %v49 = vshrl.u32 %v48, 7
  %v50 = vsub.s32 0, %v49
  %v51 = vrot.slane %v46, %v50
  %v55 = vunpack.c.l.b16 %v28
  %v56 = vunpack.c.l.b16 %v29
  %v57 = vpack.c.b16 %v56, %v55
  %v75 = vunpack.c.l.b16 %v30
  %v76 = vunpack.c.l.b16 %v31
  %v77 = vunpack.c.l.b16 %v32
  %v78 = vunpack.c.l.b16 %v33
  %v79 = vunpack.c.l.b16 %v34
  %v80 = vunpack.c.l.b16 %v35
  %v81 = vunpack.c.l.b16 %v36
  %v82 = vunpack.c.l.b16 %v37
  %v83 = vunpack.c.l.b16 %v38
  %v84 = vunpack.c.l.b16 %v39
  %v85 = vunpack.c.l.b16 %v40
  %v86 = vunpack.c.l.b16 %v41
  %v87 = vunpack.c.l.b16 %v42
  %v88 = vunpack.c.l.b16 %v43
  %v89 = vunpack.c.l.b16 %v44
  %v90 = vunpack.c.l.b16 %v45
  %v91 = vpack.c.b16 %v76, %v75
  %v92 = vpack.c.b16 %v78, %v77
  %v93 = vpack.c.b16 %v80, %v79
  %v94 = vpack.c.b16 %v82, %v81
  %v95 = vpack.c.b16 %v84, %v83
  %v96 = vpack.c.b16 %v86, %v85
  %v97 = vpack.c.b16 %v88, %v87
  %v98 = vpack.c.b16 %v90, %v89
  %107 = vmatprep.subr.bf16.mxu0 0
  %108 = vmatpush1.bf16.msra.mxu0 %v98
  %109 = vmatprep.subr.bf16.mxu0 0
  %110 = vmatpush1.bf16.msra.mxu0 %v97
  %111 = vmatprep.subr.bf16.mxu0 0
  %112 = vmatpush1.bf16.msra.mxu0 %v96
  %113 = vmatprep.subr.bf16.mxu0 0
  %114 = vmatpush1.bf16.msra.mxu0 %v95
  %115 = vmatprep.subr.bf16.mxu0 0
  %116 = vmatpush1.bf16.msra.mxu0 %v94
  %117 = vmatprep.subr.bf16.mxu0 0
  %118 = vmatpush1.bf16.msra.mxu0 %v93
  %119 = vmatprep.subr.bf16.mxu0 0
  %120 = vmatpush1.bf16.msra.mxu0 %v92
  %121 = vmatprep.subr.bf16.mxu0 0
  %122 = vmatpush1.bf16.msra.mxu0 %v91
  %123 = vmatprep.subr.bf16.mxu0 0
  %124 = vmatpush2.bf16.msra.mxu0 0
  %125 = vmatprep.subr.bf16.mxu0 0
  %126 = vmatpush2.bf16.msra.mxu0 0
  %127 = vmatprep.subr.bf16.mxu0 0
  %128 = vmatpush2.bf16.msra.mxu0 0
  %129 = vmatprep.subr.bf16.mxu0 0
  %130 = vmatpush2.bf16.msra.mxu0 0
  %131 = vmatprep.subr.bf16.mxu0 0
  %132 = vmatpush2.bf16.msra.mxu0 0
  %133 = vmatprep.subr.bf16.mxu0 0
  %134 = vmatpush2.bf16.msra.mxu0 0
  %135 = vmatprep.subr.bf16.mxu0 0
  %136 = vmatpush2.bf16.msra.mxu0 0
  %137 = vmatprep.subr.bf16.mxu0 0
  %138 = vmatpush2.bf16.msra.mxu0 0
  %139 = vmatprep.mubr.bf16.mxu0 0
  %140 = vmatmul.mubr.bf16.gmra.mxu0 %v57
  %v141 = vpop.f32.mrf.mxu0
  %v142 = vadd.f32 %v51, %v141
  %v143 = vpop.f32.mrf.mxu0
  %v144 = vpop.f32.mrf.mxu0
  %v145 = vadd.f32 %v51, %v144
  %v146 = vpop.f32.mrf.mxu0
  %147 = vdwg.mxu0
  %v148 = vmul.f32 %v142, 0.5
  %v149 = vmul.f32 %v145, 0.5
  %v150 = vadd.f32 %v26, %v148
  %v151 = vadd.f32 %v27, %v149
  %v152 = vld [vmem:[%s4] sm:$0x1]
  %v153 = vld [vmem:[%s5] sm:$0x1]
  %vm154 = vcmask 261120
  %v155 = vsel %vm154, %v150, 0.0
  %156 = vadd.xlane.f32.xlu0 %v155
  %v157 = vpop.xlane.xlu0 %156
  %v158 = vsel %vm154, %v151, 0.0
  %159 = vadd.xlane.f32.xlu0 %v158
  %v160 = vpop.xlane.xlu0 %159
  %v161 = vrcp.pop 32.0
  %v162 = vmul.f32 %v157, %v161
  %v163 = vmul.f32 %v160, %v161
  %v164 = vsub.f32 %v150, %v162
  %v165 = vsub.f32 %v151, %v163
  %v166 = vmul.f32 %v164, %v164
  %v167 = vmul.f32 %v165, %v165
  %v168 = vsel %vm154, %v166, 0.0
  %169 = vadd.xlane.f32.xlu0 %v168
  %v170 = vpop.xlane.xlu0 %169
  %v171 = vsel %vm154, %v167, 0.0
  %172 = vadd.xlane.f32.xlu0 %v171
  %v173 = vpop.xlane.xlu0 %172
  %v174 = vmul.f32 %v170, %v161
  %v175 = vmul.f32 %v173, %v161
  %v176 = vadd.f32 %v174, 1e-05
  %v177 = vadd.f32 %v175, 1e-05
  %v178 = vrsqrt.pop %v176
  %v179 = vrsqrt.pop %v177
  %v180 = vmul.f32 %v164, %v178
  %v181 = vmul.f32 %v165, %v179
  %v183 = vlaneseq
  %v184 = vshrl.u32 %v183, 7
  %v185 = vsub.s32 0, %v184
  %v186 = vrot.slane %v152, %v185
  %v188 = vmul.f32 %v180, %v186
  %v189 = vmul.f32 %v181, %v186
  %v191 = vlaneseq
  %v192 = vshrl.u32 %v191, 7
  %v193 = vsub.s32 0, %v192
  %v194 = vrot.slane %v153, %v193
  %v196 = vadd.f32 %v188, %v194
  %v197 = vadd.f32 %v189, %v194
  %v198 = vpack.c.bf16 %v197, %v196
  %v200 = vunpack.c.l.b16 %v198
  %v201 = vunpack.c.h.b16 %v198
  %v202 = vpack.c.b16 %v200, %v200
  %v203 = vpack.c.b16 %v201, %v201
  %vm206 = vcmask 257024
  %207 = vst.msk [vmem:[%s6] sm:$0xf] %vm206, %v202
  %208 = vst.msk [vmem:[%s6 + $0x4] sm:$0xf] %vm206, %v203
  // Predicated region
  $region26: #{acoustic_encoder_forward.27} parent=0 // pred_check
    _
  $region27: #{acoustic_encoder_forward.27} parent=0 // pred_check_branch
    %210 = sbr.rel (0) target = $region29
  $region28: #{acoustic_encoder_forward.27} parent=0 // pred_region
    _
  $region29: #{acoustic_encoder_forward.27} parent=0 // pred_fallthru
    _
  // Predicated region
  $region30: #{acoustic_encoder_forward.27} parent=0 // pred_check
    _
  $region31: #{acoustic_encoder_forward.27} parent=0 // pred_check_branch
    %212 = sbr.rel (0) target = $region33
  $region32: #{acoustic_encoder_forward.27} parent=0 // pred_region
    _
  $region33: #{acoustic_encoder_forward.27} parent=0 // pred_fallthru
    _

</llo_original>
